<compile_context>
chip_gen: v6e
topology: v6e:2x2x1
jax: 0.10.0
libtpu: 0.0.40
codegen_flags: <defaults>
</compile_context>

<pallas_src>
import math

import jax
import jax.numpy as jnp
from jax.experimental import pallas as pl
from jax.experimental.pallas import tpu as pltpu

_C1 = math.sqrt(2.0 / math.pi)
_C2 = _C1 * 0.044715


def _gelu_f32(h):
    # 0.5*h*(1 + tanh(C*(h + 0.044715*h^3)))  ==  h*(0.5 + 0.5*tanh(h*(C1 + C2*h^2)))
    # (same math, fewer VALU ops; tanh goes to the EUP slot).
    h2 = h * h
    return h * (0.5 + 0.5 * jnp.tanh(h * (_C1 + _C2 * h2)))


def _resident_kernel(x_ref, w1_ref, b1_ref, w2_ref, b2_ref, o_ref):
    # Weights fully resident in VMEM; single fused pass per row tile.
    h = jnp.dot(x_ref[...], w1_ref[...], preferred_element_type=jnp.float32)
    h = _gelu_f32(h + b1_ref[...].astype(jnp.float32))
    acc = jnp.dot(h.astype(w2_ref.dtype), w2_ref[...],
                  preferred_element_type=jnp.float32)
    o_ref[...] = (acc + b2_ref[...].astype(jnp.float32)).astype(o_ref.dtype)


def _make_ktile_kernel(tk, n_state, acc_in_out):
    """Hidden-tiled kernel. b_fc stays fully resident; its tk chunk is sliced in-kernel."""

    def _b1_chunk(b1_ref, k):
        if tk == n_state:
            return b1_ref[...]
        start = k * tk
        if tk % 128 == 0:
            start = pl.multiple_of(start, 128)
        return b1_ref[:, pl.ds(start, tk)]

    if acc_in_out:
        # f32 output: accumulate straight into the output block (its block index is
        # constant across k, so it stays resident) -- no scratch accumulator needed.
        def kernel(x_ref, w1_ref, b1_ref, w2_ref, b2_ref, o_ref):
            k = pl.program_id(1)
            h = jnp.dot(x_ref[...], w1_ref[...], preferred_element_type=jnp.float32)
            h = _gelu_f32(h + _b1_chunk(b1_ref, k).astype(jnp.float32))
            p = jnp.dot(h.astype(w2_ref.dtype), w2_ref[...],
                        preferred_element_type=jnp.float32)

            @pl.when(k == 0)
            def _():
                o_ref[...] = p

            @pl.when(k > 0)
            def _():
                o_ref[...] += p

            @pl.when(k == pl.num_programs(1) - 1)
            def _():
                o_ref[...] += b2_ref[...].astype(jnp.float32)

        return kernel

    def kernel(x_ref, w1_ref, b1_ref, w2_ref, b2_ref, o_ref, acc_ref):
        k = pl.program_id(1)

        @pl.when(k == 0)
        def _():
            acc_ref[...] = jnp.zeros_like(acc_ref)

        h = jnp.dot(x_ref[...], w1_ref[...], preferred_element_type=jnp.float32)
        h = _gelu_f32(h + _b1_chunk(b1_ref, k).astype(jnp.float32))
        acc_ref[...] += jnp.dot(h.astype(w2_ref.dtype), w2_ref[...],
                                preferred_element_type=jnp.float32)

        @pl.when(k == pl.num_programs(1) - 1)
        def _():
            o_ref[...] = (acc_ref[...]
                          + b2_ref[...].astype(jnp.float32)).astype(o_ref.dtype)

    return kernel


def _round_up(v, q):
    return ((v + q - 1) // q) * q


def _pick_hidden_tile(n_state, desired):
    """Largest multiple of 128 dividing n_state and <= desired; else the full axis."""
    t = (min(desired, n_state) // 128) * 128
    while t >= 128:
        if n_state % t == 0:
            return t
        t -= 128
    return n_state


def _vmem_cap_bytes():
    """Generation-aware VMEM ceiling (leave headroom below physical capacity)."""
    try:
        phys = int(pltpu.get_tpu_info().vmem_capacity_bytes)
    except Exception:
        phys = 64 * 2**20                       # conservative fallback (v7x-sized)
    if phys <= 64 * 2**20:                      # v7x: 64 MiB per TC -> stay well under
        return 48 * 2**20
    return min(112 * 2**20, int(phys * 0.85))   # v5e / v6e: 128 MiB physical


def mlp_pallas(x, w_fc, b_fc, w_proj, b_proj, *, tm=512, tk=512,
               weight_resident=None, accumulate_in_out=None):
    """GPT-2 MLP: gelu(x @ W_fc + b_fc) @ W_proj + b_proj.  x: (B, S, n_embd)."""
    B, S, n_embd = x.shape
    n_state = w_fc.shape[1]
    M = B * S
    dtype = x.dtype
    itemsize = jnp.dtype(dtype).itemsize

    # --- row tile: round to the dtype's sublane packing quantum ----------------
    quantum = max(8, 32 // itemsize)            # f32: 8, bf16: 16, int8/fp8: 32
    tm = _round_up(max(1, min(tm, M)), quantum)
    if M >= 2 * quantum:                        # keep >= 2 row tiles (v7x: 2 TCs/chip)
        tm = min(tm, _round_up(pl.cdiv(M, 2), quantum))

    cap = _vmem_cap_bytes()
    acc_in_out = (dtype == jnp.float32) if accumulate_in_out is None \
        else bool(accumulate_in_out)
    acc_in_out = acc_in_out and dtype == jnp.float32

    def resident_bytes(tm_):
        w = (2 * n_embd * n_state + n_state + n_embd) * itemsize   # resident params
        io = 2 * 2 * tm_ * n_embd * itemsize                       # x/out double buffers
        h = tm_ * n_state * (4 + itemsize)                         # f32 gelu tile + cast
        return w + io + h

    def ktile_bytes(tm_, tk_):
        w = 2 * 2 * n_embd * tk_ * itemsize                        # W slabs, double-buffered
        b = (n_state + 2 * n_embd) * itemsize
        io = 2 * 2 * tm_ * n_embd * itemsize
        acc = 0 if acc_in_out else tm_ * n_embd * 4
        h = tm_ * tk_ * (4 + itemsize)                             # f32 gelu chunk + cast
        return w + b + io + acc + h

    if weight_resident is None:
        use_resident = resident_bytes(tm) <= int(0.8 * cap)
    else:
        use_resident = bool(weight_resident)

    if not use_resident:
        tk = _pick_hidden_tile(n_state, tk)
        while ktile_bytes(tm, tk) > int(0.85 * cap) and tm > quantum:
            tm = _round_up(max(quantum, tm // 2), quantum)

    # --- pad rows so M is a multiple of tm (padded rows are sliced off below) ---
    Mp = pl.cdiv(M, tm) * tm
    x2 = x.reshape(M, n_embd)
    if Mp != M:
        x2 = jnp.pad(x2, ((0, Mp - M), (0, 0)))

    b_fc2 = b_fc.reshape(1, n_state)
    b_proj2 = b_proj.reshape(1, n_embd)
    n_row_tiles = Mp // tm

    est = resident_bytes(tm) if use_resident else ktile_bytes(tm, tk)
    vmem_limit = int(min(cap, max(int(est * 1.3), 32 * 2**20)))

    w_reads = 1 if use_resident else n_row_tiles          # actual weight re-streaming
    cost = pl.CostEstimate(
        flops=4 * M * n_embd * n_state,                   # two matmuls
        transcendentals=M * n_state,                      # tanh in gelu
        bytes_accessed=(2 * M * n_embd + 2 * w_reads * n_embd * n_state
                        + n_state + n_embd) * itemsize,
    )

    if use_resident:
        kernel = _resident_kernel
        grid_spec = pltpu.PrefetchScalarGridSpec(
            num_scalar_prefetch=0,
            grid=(n_row_tiles,),
            in_specs=[
                pl.BlockSpec((tm, n_embd), lambda i: (i, 0)),        # x row tile
                pl.BlockSpec((n_embd, n_state), lambda i: (0, 0)),   # W_fc (resident)
                pl.BlockSpec((1, n_state), lambda i: (0, 0)),        # b_fc (resident)
                pl.BlockSpec((n_state, n_embd), lambda i: (0, 0)),   # W_proj (resident)
                pl.BlockSpec((1, n_embd), lambda i: (0, 0)),         # b_proj (resident)
            ],
            out_specs=pl.BlockSpec((tm, n_embd), lambda i: (i, 0)),
            scratch_shapes=[],
        )
        dim_sem = ("parallel",)
    else:
        kernel = _make_ktile_kernel(tk, n_state, acc_in_out)
        scratch = [] if acc_in_out else [pltpu.VMEM((tm, n_embd), jnp.float32)]
        grid_spec = pltpu.PrefetchScalarGridSpec(
            num_scalar_prefetch=0,
            grid=(n_row_tiles, n_state // tk),
            in_specs=[
                pl.BlockSpec((tm, n_embd), lambda i, k: (i, 0)),     # x row tile
                pl.BlockSpec((n_embd, tk), lambda i, k: (0, k)),     # W_fc hidden slab
                pl.BlockSpec((1, n_state), lambda i, k: (0, 0)),     # b_fc (full, resident)
                pl.BlockSpec((tk, n_embd), lambda i, k: (k, 0)),     # W_proj hidden slab
                pl.BlockSpec((1, n_embd), lambda i, k: (0, 0)),      # b_proj (resident)
            ],
            out_specs=pl.BlockSpec((tm, n_embd), lambda i, k: (i, 0)),
            scratch_shapes=scratch,
        )
        dim_sem = ("parallel", "arbitrary")

    out = pl.pallas_call(
        kernel,
        out_shape=jax.ShapeDtypeStruct((Mp, n_embd), dtype),
        grid_spec=grid_spec,
        compiler_params=pltpu.CompilerParams(
            dimension_semantics=dim_sem,
            vmem_limit_bytes=vmem_limit,
        ),
        cost_estimate=cost,
    )(x2, w_fc, b_fc2, w_proj, b_proj2)

    return out[:M].reshape(B, S, n_embd)


def mlp_reference(x, w_fc, b_fc, w_proj, b_proj):
    """Pure-JAX reference replicating the torch module exactly."""
    h = x @ w_fc + b_fc
    h = 0.5 * h * (1.0 + jnp.tanh(math.sqrt(2.0 / math.pi)
                                  * (h + 0.044715 * h ** 3)))
    return h @ w_proj + b_proj


if __name__ == "__main__":
    # Lane-dense shapes: n_embd a multiple of 128 so output stores are unmasked,
    # enough rows that the row axis takes multiple steps.
    B, S = 2, 512
    n_embd, n_state = 128, 512   # n_state = 4 * n_embd (GPT-2 convention)

    key = jax.random.PRNGKey(0)
    kx, k1, k2, k3, k4 = jax.random.split(key, 5)

    x = jax.random.normal(kx, (B, S, n_embd), dtype=jnp.float32)
    # Conv1D init in GPT-2: weight ~ N(0, 0.02). Deterministic here.
    w_fc = 0.02 * jax.random.normal(k1, (n_embd, n_state), dtype=jnp.float32)
    b_fc = 0.02 * jax.random.normal(k2, (n_state,), dtype=jnp.float32)
    w_proj = 0.02 * jax.random.normal(k3, (n_state, n_embd), dtype=jnp.float32)
    b_proj = 0.02 * jax.random.normal(k4, (n_embd,), dtype=jnp.float32)

    ref = mlp_reference(x, w_fc, b_fc, w_proj, b_proj)

    # (a) auto schedule: weights fit VMEM -> weight-resident fast path, tm=512.
    out_a = mlp_pallas(x, w_fc, b_fc, w_proj, b_proj)
    # (b) forced hidden-tiled schedule, f32 accumulation directly in the output block.
    out_b = mlp_pallas(x, w_fc, b_fc, w_proj, b_proj, tm=128, tk=128,
                       weight_resident=False)
    # (c) forced hidden-tiled schedule with the f32 VMEM scratch accumulator.
    out_c = mlp_pallas(x, w_fc, b_fc, w_proj, b_proj, tm=128, tk=128,
                       weight_resident=False, accumulate_in_out=False)
    out_a, out_b, out_c = jax.block_until_ready((out_a, out_b, out_c))

    for out in (out_a, out_b, out_c):
        assert out.shape == (B, S, n_embd)
        assert jnp.allclose(out, ref, atol=1e-5, rtol=1e-5), "mismatch vs reference"

    print("KERNEL_OK")
</pallas_src>

<mosaic_0001>
module attributes {stable_mosaic.version = 11 : i64} {
  func.func @_resident_kernel(%arg0: i32, %arg1: memref<512x128xf32, #tpu.memory_space<vmem>>, %arg2: memref<128x512xf32, #tpu.memory_space<vmem>>, %arg3: memref<1x512xf32, #tpu.memory_space<vmem>>, %arg4: memref<512x128xf32, #tpu.memory_space<vmem>>, %arg5: memref<1x128xf32, #tpu.memory_space<vmem>>, %arg6: memref<512x128xf32, #tpu.memory_space<vmem>>) attributes {dimension_semantics = [#tpu.dimension_semantics<parallel>], iteration_bounds = array<i64: 2>, scalar_prefetch = 0 : i64, scratch_operands = 0 : i64, tpu.core_type = #tpu.core_type<tc>, window_params = [{transform_indices = @transform_0, window_bounds = array<i64: 512, 128>}, {pipeline_mode = #tpu.pipeline_mode<synchronous>, transform_indices = @transform_1, window_bounds = array<i64: 128, 512>}, {pipeline_mode = #tpu.pipeline_mode<synchronous>, transform_indices = @transform_2, window_bounds = array<i64: 1, 512>}, {pipeline_mode = #tpu.pipeline_mode<synchronous>, transform_indices = @transform_3, window_bounds = array<i64: 512, 128>}, {pipeline_mode = #tpu.pipeline_mode<synchronous>, transform_indices = @transform_4, window_bounds = array<i64: 1, 128>}, {transform_indices = @transform_5, window_bounds = array<i64: 512, 128>}]} {
    %c0 = arith.constant 0 : index
    %c0_0 = arith.constant 0 : index
    %0 = vector.load %arg1[%c0, %c0_0] : memref<512x128xf32, #tpu.memory_space<vmem>>, vector<512x128xf32>
    %c0_1 = arith.constant 0 : index
    %c0_2 = arith.constant 0 : index
    %1 = vector.load %arg2[%c0_1, %c0_2] : memref<128x512xf32, #tpu.memory_space<vmem>>, vector<128x512xf32>
    %cst = arith.constant dense<0.000000e+00> : vector<512x512xf32>
    %2 = tpu.matmul %0, %1, %cst {dimension_numbers = #tpu.dot_dimension_numbers<[1], [0], [0], [1], [0, 0, 1, 1], [], []>} : vector<512x128xf32>, vector<128x512xf32>, vector<512x512xf32> -> vector<512x512xf32>
    %c0_3 = arith.constant 0 : index
    %c0_4 = arith.constant 0 : index
    %3 = vector.load %arg3[%c0_3, %c0_4] : memref<1x512xf32, #tpu.memory_space<vmem>>, vector<1x512xf32>
    %4 = vector.broadcast %3 : vector<1x512xf32> to vector<512x512xf32>
    %5 = arith.addf %2, %4 : vector<512x512xf32>
    %6 = arith.mulf %5, %5 : vector<512x512xf32>
    %cst_5 = arith.constant 0.0356774069 : f32
    %7 = vector.broadcast %cst_5 : f32 to vector<512x512xf32>
    %8 = arith.mulf %7, %6 : vector<512x512xf32>
    %cst_6 = arith.constant 0.797884583 : f32
    %9 = vector.broadcast %cst_6 : f32 to vector<512x512xf32>
    %10 = arith.addf %9, %8 : vector<512x512xf32>
    %11 = arith.mulf %5, %10 : vector<512x512xf32>
    %12 = math.tanh %11 : vector<512x512xf32>
    %cst_7 = arith.constant 5.000000e-01 : f32
    %13 = vector.broadcast %cst_7 : f32 to vector<512x512xf32>
    %14 = arith.mulf %13, %12 : vector<512x512xf32>
    %cst_8 = arith.constant 5.000000e-01 : f32
    %15 = vector.broadcast %cst_8 : f32 to vector<512x512xf32>
    %16 = arith.addf %15, %14 : vector<512x512xf32>
    %17 = arith.mulf %5, %16 : vector<512x512xf32>
    %c0_9 = arith.constant 0 : index
    %c0_10 = arith.constant 0 : index
    %18 = vector.load %arg4[%c0_9, %c0_10] : memref<512x128xf32, #tpu.memory_space<vmem>>, vector<512x128xf32>
    %cst_11 = arith.constant dense<0.000000e+00> : vector<512x128xf32>
    %19 = tpu.matmul %17, %18, %cst_11 {dimension_numbers = #tpu.dot_dimension_numbers<[1], [0], [0], [1], [0, 0, 1, 1], [], []>} : vector<512x512xf32>, vector<512x128xf32>, vector<512x128xf32> -> vector<512x128xf32>
    %c0_12 = arith.constant 0 : index
    %c0_13 = arith.constant 0 : index
    %20 = vector.load %arg5[%c0_12, %c0_13] : memref<1x128xf32, #tpu.memory_space<vmem>>, vector<1x128xf32>
    %21 = vector.broadcast %20 : vector<1x128xf32> to vector<512x128xf32>
    %22 = arith.addf %19, %21 : vector<512x128xf32>
    %c0_14 = arith.constant 0 : index
    %c0_15 = arith.constant 0 : index
    %23 = vector.load %arg6[%c0_14, %c0_15] : memref<512x128xf32, #tpu.memory_space<vmem>>, vector<512x128xf32>
    tpu.vector_store %arg6[%c0_14, %c0_15], %22 {strides = array<i32>} : memref<512x128xf32, #tpu.memory_space<vmem>>, vector<512x128xf32>,
    return
  }
  func.func @transform_0(%arg0: i32) -> (i32, i32) {
    %c0_i32 = arith.constant 0 : i32
    %c0_i32_0 = arith.constant 0 : i32
    return %arg0, %c0_i32 : i32, i32
  }
  func.func @transform_1(%arg0: i32) -> (i32, i32) {
    %c0_i32 = arith.constant 0 : i32
    %c0_i32_0 = arith.constant 0 : i32
    %c0_i32_1 = arith.constant 0 : i32
    return %c0_i32, %c0_i32_0 : i32, i32
  }
  func.func @transform_2(%arg0: i32) -> (i32, i32) {
    %c0_i32 = arith.constant 0 : i32
    %c0_i32_0 = arith.constant 0 : i32
    %c0_i32_1 = arith.constant 0 : i32
    return %c0_i32, %c0_i32_0 : i32, i32
  }
  func.func @transform_3(%arg0: i32) -> (i32, i32) {
    %c0_i32 = arith.constant 0 : i32
    %c0_i32_0 = arith.constant 0 : i32
    %c0_i32_1 = arith.constant 0 : i32
    return %c0_i32, %c0_i32_0 : i32, i32
  }
  func.func @transform_4(%arg0: i32) -> (i32, i32) {
    %c0_i32 = arith.constant 0 : i32
    %c0_i32_0 = arith.constant 0 : i32
    %c0_i32_1 = arith.constant 0 : i32
    return %c0_i32, %c0_i32_0 : i32, i32
  }
  func.func @transform_5(%arg0: i32) -> (i32, i32) {
    %c0_i32 = arith.constant 0 : i32
    %c0_i32_0 = arith.constant 0 : i32
    return %arg0, %c0_i32 : i32, i32
  }
}

</mosaic_0001>

<llo_original>
// kernel: tpu_custom_call.1
$region0: #{tpu_custom_call.1}
  #allocation0 [shape = 'u32[]', space=smem, size = 0x4, offset = 0x4, fixed_abs, tag = 'smem constant byte address 0x4 - core index']
  #allocation1 [shape = 'u32[144,128]{1,0:T(1,128)}', space=vmem, size = 0x12000, scoped, tag = 'internal scratch']
  %s0 = inlined_call_operand.hbm [shape: f32[1024,128], index: 0, kind: input, shape index: {}]
  %s1 = inlined_call_operand.hbm [shape: f32[128,512], index: 1, kind: input, shape index: {}]
  %s2 = inlined_call_operand.hbm [shape: f32[1,512], index: 2, kind: input, shape index: {}]
  %s3 = inlined_call_operand.hbm [shape: f32[512,128], index: 3, kind: input, shape index: {}]
  %s4 = inlined_call_operand.vmem [shape: f32[1,128], index: 4, kind: input, shape index: {}]
  %s5 = inlined_call_operand.hbm [shape: f32[1024,128], index: 5, kind: output, shape index: {}]
  %s6 = sld [smem:[#allocation0]]
  $region69: #{tpu_custom_call.1} parent=0
    _
  %s8 = ssub.s32 1, %s6
  %s9 = scalar_select 0, %s8, %s6
  $region1: #{tpu_custom_call.1} parent=0
    #allocation2 [shape = 'u8[524288]{0}', space=vmem, size = 0x80000, scoped, tag = 'input window, operand 0']
    #allocation3 [shape = 's32[2]{0}', space=sflag, size = 0x8, scoped, tag = 'scoped memory for tpu_custom_call.1']
    #allocation4 [shape = 's32[2]{0}', space=sflag, size = 0x8, scoped, tag = 'scoped memory for tpu_custom_call.1']
    #allocation5 [shape = 'u8[262144]{0}', space=vmem, size = 0x40000, scoped, tag = 'input window, operand 1, single buffered']
    #allocation6 [shape = 's32[1]{0}', space=sflag, size = 0x4, scoped, tag = 'scoped memory for tpu_custom_call.1']
    #allocation7 [shape = 'u8[2048]{0}', space=vmem, size = 0x800, scoped, tag = 'input window, operand 2, single buffered']
    #allocation8 [shape = 'u8[262144]{0}', space=vmem, size = 0x40000, scoped, tag = 'input window, operand 3, single buffered']
    #allocation9 [shape = 's32[1]{0}', space=sflag, size = 0x4, scoped, tag = 'scoped memory for tpu_custom_call.1']
    #allocation10 [shape = 'u8[524288]{0}', space=vmem, size = 0x80000, scoped, tag = 'output window, operand 0']
    %10 = vsyncpa [#allocation3], 0
    %s11 = scalar_lea.sflag [#allocation3], 1
    %12 = vsyncpa %s11, 0
    %13 = vsyncpa [#allocation6], 0
    %14 = vsyncpa [#allocation9], 0
    %15 = vsyncpa [#allocation4], 0
    %s16 = scalar_lea.sflag [#allocation4], 1
    %17 = vsyncpa %s16, 0
    loop: start=0, step=1, limit=4
    $region2: #{tpu_custom_call.1} parent=1 // loop_pre_header
      _
    $region3: #{tpu_custom_call.1} parent=1 // loop_header
      %s19 = sphi 0, %s23
      %p20 = scmp.ge.s32.totalorder %s19, 4
      %s29 = sphi 0, %s31
      %s32 = sphi 0, %s29
      %s33 = sphi 0, %s32
      %s49 = sphi 0, %s33
      %s53 = sphi 0, %s53
      %s55 = sphi 0, %s53
      %s56 = sphi 0, %s55
      %s70 = sphi 0, %s56
      %s74 = sphi 0, %s74
      %s76 = sphi 0, %s74
      %s77 = sphi 0, %s76
      %s91 = sphi 0, %s77
      %s95 = sphi 0, %s95
      %s97 = sphi 0, %s95
      %s98 = sphi 0, %s97
      %s112 = sphi 0, %s98
      %s116 = sphi 0, %s116
      %s118 = sphi 0, %s116
      %s119 = sphi 0, %s118
      %s133 = sphi 0, %s119
      %s139 = sphi 0, %s141
      %s142 = sphi 0, %s139
      %s143 = sphi 0, %s142
      %s159 = sphi 0, %s143
    $region4: #{tpu_custom_call.1} parent=1 // loop_header_branch
      %22 = sbr.rel (%p20) target = $region8
    $region5: #{tpu_custom_call.1} parent=1 // loop_body
      %s24 = ssub.s32 %s19, 1
      %s25 = ssub.s32 %s19, 2
      %s26 = sadd.s32 %s19, 1
      %s27 = ssub.s32 %s19, %s26
      %p28 = scmp.eq.s32.totalorder %s27, 0
      %s30 = sadd.s32 %s29, 1
      %s31 = scalar_select %p28, %s29, %s30
      %p34 = pneg %p28
      %p35 = scmp.eq.s32.totalorder %s19, 1
      %p36 = por %p34, %p35
      %p37 = scmp.ne.s32.totalorder %s29, %s32
      %p38 = scmp.eq.s32.totalorder %s19, 0
      %p39 = por %p37, %p38
      %p40 = scmp.ne.s32.totalorder %s29, %s32
      %p41 = scmp.eq.s32.totalorder %s24, 1
      %p42 = por %p40, %p41
      %p43 = scmp.ne.s32.totalorder %s32, %s33
      %p44 = scmp.eq.s32.totalorder %s24, 0
      %p45 = por %p43, %p44
      %p46 = scmp.ne.s32.totalorder %s32, %s33
      %p47 = scmp.eq.s32.totalorder %s25, 1
      %p48 = por %p46, %p47
      %p50 = scmp.ne.s32.totalorder %s33, %s49
      %p51 = scmp.eq.s32.totalorder %s25, 0
      %p52 = por %p50, %p51
      %s54 = sadd.s32 %s53, 1
      %p57 = scmp.eq.s32.totalorder %s19, 1
      %p58 = scmp.ne.s32.totalorder %s53, %s55
      %p59 = scmp.eq.s32.totalorder %s19, 0
      %p60 = por %p58, %p59
      %p61 = scmp.ne.s32.totalorder %s53, %s55
      %p62 = scmp.eq.s32.totalorder %s24, 1
      %p63 = por %p61, %p62
      %p64 = scmp.ne.s32.totalorder %s55, %s56
      %p65 = scmp.eq.s32.totalorder %s24, 0
      %p66 = por %p64, %p65
      %p67 = scmp.ne.s32.totalorder %s55, %s56
      %p68 = scmp.eq.s32.totalorder %s25, 1
      %p69 = por %p67, %p68
      %p71 = scmp.ne.s32.totalorder %s56, %s70
      %p72 = scmp.eq.s32.totalorder %s25, 0
      %p73 = por %p71, %p72
      %s75 = sadd.s32 %s74, 1
      %p78 = scmp.eq.s32.totalorder %s19, 1
      %p79 = scmp.ne.s32.totalorder %s74, %s76
      %p80 = scmp.eq.s32.totalorder %s19, 0
      %p81 = por %p79, %p80
      %p82 = scmp.ne.s32.totalorder %s74, %s76
      %p83 = scmp.eq.s32.totalorder %s24, 1
      %p84 = por %p82, %p83
      %p85 = scmp.ne.s32.totalorder %s76, %s77
      %p86 = scmp.eq.s32.totalorder %s24, 0
      %p87 = por %p85, %p86
      %p88 = scmp.ne.s32.totalorder %s76, %s77
      %p89 = scmp.eq.s32.totalorder %s25, 1
      %p90 = por %p88, %p89
      %p92 = scmp.ne.s32.totalorder %s77, %s91
      %p93 = scmp.eq.s32.totalorder %s25, 0
      %p94 = por %p92, %p93
      %s96 = sadd.s32 %s95, 1
      %p99 = scmp.eq.s32.totalorder %s19, 1
      %p100 = scmp.ne.s32.totalorder %s95, %s97
      %p101 = scmp.eq.s32.totalorder %s19, 0
      %p102 = por %p100, %p101
      %p103 = scmp.ne.s32.totalorder %s95, %s97
      %p104 = scmp.eq.s32.totalorder %s24, 1
      %p105 = por %p103, %p104
      %p106 = scmp.ne.s32.totalorder %s97, %s98
      %p107 = scmp.eq.s32.totalorder %s24, 0
      %p108 = por %p106, %p107
      %p109 = scmp.ne.s32.totalorder %s97, %s98
      %p110 = scmp.eq.s32.totalorder %s25, 1
      %p111 = por %p109, %p110
      %p113 = scmp.ne.s32.totalorder %s98, %s112
      %p114 = scmp.eq.s32.totalorder %s25, 0
      %p115 = por %p113, %p114
      %s117 = sadd.s32 %s116, 1
      %p120 = scmp.eq.s32.totalorder %s19, 1
      %p121 = scmp.ne.s32.totalorder %s116, %s118
      %p122 = scmp.eq.s32.totalorder %s19, 0
      %p123 = por %p121, %p122
      %p124 = scmp.ne.s32.totalorder %s116, %s118
      %p125 = scmp.eq.s32.totalorder %s24, 1
      %p126 = por %p124, %p125
      %p127 = scmp.ne.s32.totalorder %s118, %s119
      %p128 = scmp.eq.s32.totalorder %s24, 0
      %p129 = por %p127, %p128
      %p130 = scmp.ne.s32.totalorder %s118, %s119
      %p131 = scmp.eq.s32.totalorder %s25, 1
      %p132 = por %p130, %p131
      %p134 = scmp.ne.s32.totalorder %s119, %s133
      %p135 = scmp.eq.s32.totalorder %s25, 0
      %p136 = por %p134, %p135
      %s137 = ssub.s32 %s19, %s26
      %p138 = scmp.eq.s32.totalorder %s137, 0
      %s140 = sadd.s32 %s139, 1
      %s141 = scalar_select %p138, %s139, %s140
      %p144 = pneg %p138
      %p145 = scmp.eq.s32.totalorder %s19, 1
      %p146 = por %p144, %p145
      %p147 = scmp.ne.s32.totalorder %s139, %s142
      %p148 = scmp.eq.s32.totalorder %s19, 0
      %p149 = por %p147, %p148
      %p150 = scmp.ne.s32.totalorder %s139, %s142
      %p151 = scmp.eq.s32.totalorder %s24, 1
      %p152 = por %p150, %p151
      %p153 = scmp.ne.s32.totalorder %s142, %s143
      %p154 = scmp.eq.s32.totalorder %s24, 0
      %p155 = por %p153, %p154
      %p156 = scmp.ne.s32.totalorder %s142, %s143
      %p157 = scmp.eq.s32.totalorder %s25, 1
      %p158 = por %p156, %p157
      %p160 = scmp.ne.s32.totalorder %s143, %s159
      %p161 = scmp.eq.s32.totalorder %s25, 0
      %p162 = por %p160, %p161
      %p163 = scmp.le.s32.totalorder 1, %s19
      %p164 = scmp.lt.s32.totalorder %s19, 3
      %p165 = pnand %p163, %p164
      %p166 = pneg %p165
      // Predicated region
      $region9: #{tpu_custom_call.1} parent=5 // pred_check
        _
      $region10: #{tpu_custom_call.1} parent=5 // pred_check_branch
        %168 = sbr.rel (%p165) target = $region12
      $region11: #{tpu_custom_call.1} parent=5 // pred_region
        %s169 = ssub.s32 %s19, 1
        // Predicated region
        $region13: #{tpu_custom_call.1} parent=11 // pred_check
          %p170 = pneg %p66
        $region14: #{tpu_custom_call.1} parent=11 // pred_check_branch
          %172 = sbr.rel (%p170) target = $region16
        $region15: #{tpu_custom_call.1} parent=11 // pred_region
          %s174 = ssub.s32 8192, 8192
          %175 = vsyncadd [#allocation6], %s174
          %s176 = sshll.u32 [#allocation5], 4
          %s177 = int_to_ptr.vmem [resolvable:$true] %s176
          %182 = dma.hbm_to_vmem [thread:$0]  %s1, 8192, %s177, [#allocation6], 512, 512, 32
        $region16: #{tpu_custom_call.1} parent=11 // pred_fallthru
          _
        // Predicated region
        $region17: #{tpu_custom_call.1} parent=11 // pred_check
          %p183 = pneg %p87
        $region18: #{tpu_custom_call.1} parent=11 // pred_check_branch
          %185 = sbr.rel (%p183) target = $region20
        $region19: #{tpu_custom_call.1} parent=11 // pred_region
          %s187 = ssub.s32 64, 64
          %188 = vsyncadd [#allocation6], %s187
          %s190 = sshll.u32 [#allocation7], 4
          %s191 = int_to_ptr.vmem [resolvable:$true] %s190
          %193 = dma.hbm_to_vmem [thread:$0]  %s2, 64, %s191, [#allocation6]
        $region20: #{tpu_custom_call.1} parent=11 // pred_fallthru
          _
        // Predicated region
        $region21: #{tpu_custom_call.1} parent=11 // pred_check
          %p194 = pneg %p108
        $region22: #{tpu_custom_call.1} parent=11 // pred_check_branch
          %196 = sbr.rel (%p194) target = $region24
        $region23: #{tpu_custom_call.1} parent=11 // pred_region
          %s198 = ssub.s32 8192, 8192
          %199 = vsyncadd [#allocation9], %s198
          %s200 = sshll.u32 [#allocation8], 4
          %s201 = int_to_ptr.vmem [resolvable:$true] %s200
          %206 = dma.hbm_to_vmem [thread:$0]  %s3, 8192, %s201, [#allocation9], 128, 128, 8
        $region24: #{tpu_custom_call.1} parent=11 // pred_fallthru
          _
        // Predicated region
        $region25: #{tpu_custom_call.1} parent=11 // pred_check
          %p207 = pneg %p129
        $region26: #{tpu_custom_call.1} parent=11 // pred_check_branch
          %209 = sbr.rel (%p207) target = $region28
        $region27: #{tpu_custom_call.1} parent=11 // pred_region
          _
        $region28: #{tpu_custom_call.1} parent=11 // pred_fallthru
          _
      $region12: #{tpu_custom_call.1} parent=5 // pred_fallthru
        _
      %p210 = scmp.lt.s32.totalorder %s19, 2
      // Predicated region
      $region29: #{tpu_custom_call.1} parent=5 // pred_check
        %p211 = pneg %p210
      $region30: #{tpu_custom_call.1} parent=5 // pred_check_branch
        %213 = sbr.rel (%p211) target = $region32
      $region31: #{tpu_custom_call.1} parent=5 // pred_region
        // Predicated region
        $region33: #{tpu_custom_call.1} parent=31 // pred_check
          %p214 = pneg %p39
        $region34: #{tpu_custom_call.1} parent=31 // pred_check_branch
          %216 = sbr.rel (%p214) target = $region36
        $region35: #{tpu_custom_call.1} parent=31 // pred_region
          %s217 = sand.u32 %s29, 1
          %s218 = scalar_lea.sflag [#allocation3], %s217
          %s219 = sand.u32 %s29, 1
          %s220 = smul.addr %s219, 512
          %s221 = scalar_lea.vmem [#allocation2], %s220
          %s222 = smul.u32 64, %s19
          %s224 = ssub.s32 8192, 8192
          %225 = vsyncadd %s218, %s224
          %s226 = smul.addr %s222, 128
          %s227 = scalar_lea.hbm %s0, %s226
          %s228 = sshll.u32 %s221, 4
          %s229 = int_to_ptr.vmem [resolvable:$true] %s228
          %234 = dma.hbm_to_vmem [thread:$0]  %s227, 8192, %s229, %s218, 128, 128, 8
        $region36: #{tpu_custom_call.1} parent=31 // pred_fallthru
          _
      $region32: #{tpu_custom_call.1} parent=5 // pred_fallthru
        _
      %p235 = scmp.le.s32.totalorder 1, %s19
      %p236 = scmp.lt.s32.totalorder %s19, 3
      %p237 = pnand %p235, %p236
      %p238 = pneg %p237
      // Predicated region
      $region37: #{tpu_custom_call.1} parent=5 // pred_check
        _
      $region38: #{tpu_custom_call.1} parent=5 // pred_check_branch
        %240 = sbr.rel (%p237) target = $region40
      $region39: #{tpu_custom_call.1} parent=5 // pred_region
        %s241 = ssub.s32 %s19, 1
        %s242 = sand.u32 %s32, 1
        %s243 = scalar_lea.sflag [#allocation3], %s242
        %s244 = sand.u32 %s32, 1
        %s245 = smul.addr %s244, 512
        %s246 = scalar_lea.vmem [#allocation2], %s245
        // Predicated region
        $region41: #{tpu_custom_call.1} parent=39 // pred_check
          %p247 = pneg %p45
        $region42: #{tpu_custom_call.1} parent=39 // pred_check_branch
          %249 = sbr.rel (%p247) target = $region44
        $region43: #{tpu_custom_call.1} parent=39 // pred_region
          %250 = dma.done %s243, 8192
        $region44: #{tpu_custom_call.1} parent=39 // pred_fallthru
          _
        // Predicated region
        $region45: #{tpu_custom_call.1} parent=39 // pred_check
          %p251 = pneg %p66
        $region46: #{tpu_custom_call.1} parent=39 // pred_check_branch
          %253 = sbr.rel (%p251) target = $region48
        $region47: #{tpu_custom_call.1} parent=39 // pred_region
          %254 = dma.done [#allocation6], 8192
        $region48: #{tpu_custom_call.1} parent=39 // pred_fallthru
          _
        // Predicated region
        $region49: #{tpu_custom_call.1} parent=39 // pred_check
          %p255 = pneg %p87
        $region50: #{tpu_custom_call.1} parent=39 // pred_check_branch
          %257 = sbr.rel (%p255) target = $region52
        $region51: #{tpu_custom_call.1} parent=39 // pred_region
          %258 = dma.done [#allocation6], 64
        $region52: #{tpu_custom_call.1} parent=39 // pred_fallthru
          _
        // Predicated region
        $region53: #{tpu_custom_call.1} parent=39 // pred_check
          %p259 = pneg %p108
        $region54: #{tpu_custom_call.1} parent=39 // pred_check_branch
          %261 = sbr.rel (%p259) target = $region56
        $region55: #{tpu_custom_call.1} parent=39 // pred_region
          %262 = dma.done [#allocation9], 8192
        $region56: #{tpu_custom_call.1} parent=39 // pred_fallthru
          _
        %s263 = sand.u32 %s32, 1
        %s264 = scalar_lea.sflag [#allocation3], %s263
        %s265 = sand.u32 %s32, 1
        %s266 = smul.addr %s265, 512
        %s267 = scalar_lea.vmem [#allocation2], %s266
        %p268 = pneg %p45
        %p269 = pneg %p42
        %p270 = pneg %p66
        %p271 = pneg %p63
        %p272 = pneg %p87
        %p273 = pneg %p84
        %p274 = pneg %p108
        %p275 = pneg %p105
        %p276 = pneg %p129
        %p277 = pneg %p126
        %p278 = pneg %p155
        %p279 = pneg %p152
        %s280 = sand.u32 %s142, 1
        %s281 = scalar_lea.sflag [#allocation4], %s280
        %s282 = sand.u32 %s142, 1
        %s283 = smul.addr %s282, 512
        %s284 = scalar_lea.vmem [#allocation10], %s283
        %s285 = smul.u32 64, %s24
        %s286 = smul.u32 64, %s24
        %v287 = vld [vmem:[%s246] sm:$0xff]
        %v288 = vld [vmem:[%s246 + $0x8] sm:$0xff]
        %v289 = vld [vmem:[%s246 + $0x10] sm:$0xff]
        %v290 = vld [vmem:[%s246 + $0x18] sm:$0xff]
        %v291 = vld [vmem:[%s246 + $0x20] sm:$0xff]
        %v292 = vld [vmem:[%s246 + $0x28] sm:$0xff]
        %v293 = vld [vmem:[%s246 + $0x30] sm:$0xff]
        %v294 = vld [vmem:[%s246 + $0x38] sm:$0xff]
        %v295 = vld [vmem:[%s246 + $0x40] sm:$0xff]
        %v296 = vld [vmem:[%s246 + $0x48] sm:$0xff]
        %v297 = vld [vmem:[%s246 + $0x50] sm:$0xff]
        %v298 = vld [vmem:[%s246 + $0x58] sm:$0xff]
        %v299 = vld [vmem:[%s246 + $0x60] sm:$0xff]
        %v300 = vld [vmem:[%s246 + $0x68] sm:$0xff]
        %v301 = vld [vmem:[%s246 + $0x70] sm:$0xff]
        %v302 = vld [vmem:[%s246 + $0x78] sm:$0xff]
        %v303 = vld [vmem:[%s246 + $0x80] sm:$0xff]
        %v304 = vld [vmem:[%s246 + $0x88] sm:$0xff]
        %v305 = vld [vmem:[%s246 + $0x90] sm:$0xff]
        %v306 = vld [vmem:[%s246 + $0x98] sm:$0xff]
        %v307 = vld [vmem:[%s246 + $0xa0] sm:$0xff]
        %v308 = vld [vmem:[%s246 + $0xa8] sm:$0xff]
        %v309 = vld [vmem:[%s246 + $0xb0] sm:$0xff]
        %v310 = vld [vmem:[%s246 + $0xb8] sm:$0xff]
        %v311 = vld [vmem:[%s246 + $0xc0] sm:$0xff]
        %v312 = vld [vmem:[%s246 + $0xc8] sm:$0xff]
        %v313 = vld [vmem:[%s246 + $0xd0] sm:$0xff]
        %v314 = vld [vmem:[%s246 + $0xd8] sm:$0xff]
        %v315 = vld [vmem:[%s246 + $0xe0] sm:$0xff]
        %v316 = vld [vmem:[%s246 + $0xe8] sm:$0xff]
        %v317 = vld [vmem:[%s246 + $0xf0] sm:$0xff]
        %v318 = vld [vmem:[%s246 + $0xf8] sm:$0xff]
        %v319 = vld [vmem:[%s246 + $0x100] sm:$0xff]
        %v320 = vld [vmem:[%s246 + $0x108] sm:$0xff]
        %v321 = vld [vmem:[%s246 + $0x110] sm:$0xff]
        %v322 = vld [vmem:[%s246 + $0x118] sm:$0xff]
        %v323 = vld [vmem:[%s246 + $0x120] sm:$0xff]
        %v324 = vld [vmem:[%s246 + $0x128] sm:$0xff]
        %v325 = vld [vmem:[%s246 + $0x130] sm:$0xff]
        %v326 = vld [vmem:[%s246 + $0x138] sm:$0xff]
        %v327 = vld [vmem:[%s246 + $0x140] sm:$0xff]
        %v328 = vld [vmem:[%s246 + $0x148] sm:$0xff]
        %v329 = vld [vmem:[%s246 + $0x150] sm:$0xff]
        %v330 = vld [vmem:[%s246 + $0x158] sm:$0xff]
        %v331 = vld [vmem:[%s246 + $0x160] sm:$0xff]
        %v332 = vld [vmem:[%s246 + $0x168] sm:$0xff]
        %v333 = vld [vmem:[%s246 + $0x170] sm:$0xff]
        %v334 = vld [vmem:[%s246 + $0x178] sm:$0xff]
        %v335 = vld [vmem:[%s246 + $0x180] sm:$0xff]
        %v336 = vld [vmem:[%s246 + $0x188] sm:$0xff]
        %v337 = vld [vmem:[%s246 + $0x190] sm:$0xff]
        %v338 = vld [vmem:[%s246 + $0x198] sm:$0xff]
        %v339 = vld [vmem:[%s246 + $0x1a0] sm:$0xff]
        %v340 = vld [vmem:[%s246 + $0x1a8] sm:$0xff]
        %v341 = vld [vmem:[%s246 + $0x1b0] sm:$0xff]
        %v342 = vld [vmem:[%s246 + $0x1b8] sm:$0xff]
        %v343 = vld [vmem:[%s246 + $0x1c0] sm:$0xff]
        %v344 = vld [vmem:[%s246 + $0x1c8] sm:$0xff]
        %v345 = vld [vmem:[%s246 + $0x1d0] sm:$0xff]
        %v346 = vld [vmem:[%s246 + $0x1d8] sm:$0xff]
        %v347 = vld [vmem:[%s246 + $0x1e0] sm:$0xff]
        %v348 = vld [vmem:[%s246 + $0x1e8] sm:$0xff]
        %v349 = vld [vmem:[%s246 + $0x1f0] sm:$0xff]
        %v350 = vld [vmem:[%s246 + $0x1f8] sm:$0xff]
        %v351 = vld [vmem:[#allocation5] sm:$0xff]
        %v352 = vld [vmem:[#allocation5 + $0x8] sm:$0xff]
        %v353 = vld [vmem:[#allocation5 + $0x10] sm:$0xff]
        %v354 = vld [vmem:[#allocation5 + $0x18] sm:$0xff]
        %v355 = vld [vmem:[#allocation5 + $0x20] sm:$0xff]
        %v356 = vld [vmem:[#allocation5 + $0x28] sm:$0xff]
        %v357 = vld [vmem:[#allocation5 + $0x30] sm:$0xff]
        %v358 = vld [vmem:[#allocation5 + $0x38] sm:$0xff]
        %v359 = vld [vmem:[#allocation5 + $0x40] sm:$0xff]
        %v360 = vld [vmem:[#allocation5 + $0x48] sm:$0xff]
        %v361 = vld [vmem:[#allocation5 + $0x50] sm:$0xff]
        %v362 = vld [vmem:[#allocation5 + $0x58] sm:$0xff]
        %v363 = vld [vmem:[#allocation5 + $0x60] sm:$0xff]
        %v364 = vld [vmem:[#allocation5 + $0x68] sm:$0xff]
        %v365 = vld [vmem:[#allocation5 + $0x70] sm:$0xff]
        %v366 = vld [vmem:[#allocation5 + $0x78] sm:$0xff]
        %v367 = vld [vmem:[#allocation5 + $0x80] sm:$0xff]
        %v368 = vld [vmem:[#allocation5 + $0x88] sm:$0xff]
        %v369 = vld [vmem:[#allocation5 + $0x90] sm:$0xff]
        %v370 = vld [vmem:[#allocation5 + $0x98] sm:$0xff]
        %v371 = vld [vmem:[#allocation5 + $0xa0] sm:$0xff]
        %v372 = vld [vmem:[#allocation5 + $0xa8] sm:$0xff]
        %v373 = vld [vmem:[#allocation5 + $0xb0] sm:$0xff]
        %v374 = vld [vmem:[#allocation5 + $0xb8] sm:$0xff]
        %v375 = vld [vmem:[#allocation5 + $0xc0] sm:$0xff]
        %v376 = vld [vmem:[#allocation5 + $0xc8] sm:$0xff]
        %v377 = vld [vmem:[#allocation5 + $0xd0] sm:$0xff]
        %v378 = vld [vmem:[#allocation5 + $0xd8] sm:$0xff]
        %v379 = vld [vmem:[#allocation5 + $0xe0] sm:$0xff]
        %v380 = vld [vmem:[#allocation5 + $0xe8] sm:$0xff]
        %v381 = vld [vmem:[#allocation5 + $0xf0] sm:$0xff]
        %v382 = vld [vmem:[#allocation5 + $0xf8] sm:$0xff]
        %v383 = vld [vmem:[#allocation5 + $0x100] sm:$0xff]
        %v384 = vld [vmem:[#allocation5 + $0x108] sm:$0xff]
        %v385 = vld [vmem:[#allocation5 + $0x110] sm:$0xff]
        %v386 = vld [vmem:[#allocation5 + $0x118] sm:$0xff]
        %v387 = vld [vmem:[#allocation5 + $0x120] sm:$0xff]
        %v388 = vld [vmem:[#allocation5 + $0x128] sm:$0xff]
        %v389 = vld [vmem:[#allocation5 + $0x130] sm:$0xff]
        %v390 = vld [vmem:[#allocation5 + $0x138] sm:$0xff]
        %v391 = vld [vmem:[#allocation5 + $0x140] sm:$0xff]
        %v392 = vld [vmem:[#allocation5 + $0x148] sm:$0xff]
        %v393 = vld [vmem:[#allocation5 + $0x150] sm:$0xff]
        %v394 = vld [vmem:[#allocation5 + $0x158] sm:$0xff]
        %v395 = vld [vmem:[#allocation5 + $0x160] sm:$0xff]
        %v396 = vld [vmem:[#allocation5 + $0x168] sm:$0xff]
        %v397 = vld [vmem:[#allocation5 + $0x170] sm:$0xff]
        %v398 = vld [vmem:[#allocation5 + $0x178] sm:$0xff]
        %v399 = vld [vmem:[#allocation5 + $0x180] sm:$0xff]
        %v400 = vld [vmem:[#allocation5 + $0x188] sm:$0xff]
        %v401 = vld [vmem:[#allocation5 + $0x190] sm:$0xff]
        %v402 = vld [vmem:[#allocation5 + $0x198] sm:$0xff]
        %v403 = vld [vmem:[#allocation5 + $0x1a0] sm:$0xff]
        %v404 = vld [vmem:[#allocation5 + $0x1a8] sm:$0xff]
        %v405 = vld [vmem:[#allocation5 + $0x1b0] sm:$0xff]
        %v406 = vld [vmem:[#allocation5 + $0x1b8] sm:$0xff]
        %v407 = vld [vmem:[#allocation5 + $0x1c0] sm:$0xff]
        %v408 = vld [vmem:[#allocation5 + $0x1c8] sm:$0xff]
        %v409 = vld [vmem:[#allocation5 + $0x1d0] sm:$0xff]
        %v410 = vld [vmem:[#allocation5 + $0x1d8] sm:$0xff]
        %v411 = vld [vmem:[#allocation5 + $0x1e0] sm:$0xff]
        %v412 = vld [vmem:[#allocation5 + $0x1e8] sm:$0xff]
        %v413 = vld [vmem:[#allocation5 + $0x1f0] sm:$0xff]
        %v414 = vld [vmem:[#allocation5 + $0x1f8] sm:$0xff]
        %v415 = vld [vmem:[#allocation7] sm:$0xf]
        %v417 = vlaneseq
        %v418 = vshrl.u32 %v417, 7
        %v419 = vsub.s32 0, %v418
        %v420 = vrot.slane %v415, %v419
        %v421 = vlaneseq
        %v422 = vshrl.u32 %v421, 7
        %v423 = vsub.s32 1, %v422
        %v424 = vrot.slane %v415, %v423
        %v425 = vlaneseq
        %v426 = vshrl.u32 %v425, 7
        %v427 = vsub.s32 2, %v426
        %v428 = vrot.slane %v415, %v427
        %v429 = vlaneseq
        %v430 = vshrl.u32 %v429, 7
        %v431 = vsub.s32 3, %v430
        %v432 = vrot.slane %v415, %v431
        %437 = vmatprep.subr.mxu0 %v412
        %438 = vmatpush1.msra.mxu0 %v411
        %439 = vmatprep.subr.mxu0 %v408
        %440 = vmatpush1.msra.mxu0 %v407
        %441 = vmatprep.subr.mxu0 %v404
        %442 = vmatpush1.msra.mxu0 %v403
        %443 = vmatprep.subr.mxu0 %v400
        %444 = vmatpush1.msra.mxu0 %v399
        %445 = vmatprep.subr.mxu0 %v396
        %446 = vmatpush1.msra.mxu0 %v395
        %447 = vmatprep.subr.mxu0 %v392
        %448 = vmatpush1.msra.mxu0 %v391
        %449 = vmatprep.subr.mxu0 %v388
        %450 = vmatpush1.msra.mxu0 %v387
        %451 = vmatprep.subr.mxu0 %v384
        %452 = vmatpush1.msra.mxu0 %v383
        %453 = vmatprep.subr.mxu0 %v380
        %454 = vmatpush1.msra.mxu0 %v379
        %455 = vmatprep.subr.mxu0 %v376
        %456 = vmatpush1.msra.mxu0 %v375
        %457 = vmatprep.subr.mxu0 %v372
        %458 = vmatpush1.msra.mxu0 %v371
        %459 = vmatprep.subr.mxu0 %v368
        %460 = vmatpush1.msra.mxu0 %v367
        %461 = vmatprep.subr.mxu0 %v364
        %462 = vmatpush1.msra.mxu0 %v363
        %463 = vmatprep.subr.mxu0 %v360
        %464 = vmatpush1.msra.mxu0 %v359
        %465 = vmatprep.subr.mxu0 %v356
        %466 = vmatpush1.msra.mxu0 %v355
        %467 = vmatprep.subr.mxu0 %v352
        %468 = vmatpush1.msra.mxu0 %v351
        %469 = vmatprep.subr.mxu0 0.0
        %470 = vmatpush2.msra.mxu0 0.0
        %471 = vmatprep.subr.mxu0 0.0
        %472 = vmatpush2.msra.mxu0 0.0
        %473 = vmatprep.subr.mxu0 0.0
        %474 = vmatpush2.msra.mxu0 0.0
        %475 = vmatprep.subr.mxu0 0.0
        %476 = vmatpush2.msra.mxu0 0.0
        %477 = vmatprep.subr.mxu0 0.0
        %478 = vmatpush2.msra.mxu0 0.0
        %479 = vmatprep.subr.mxu0 0.0
        %480 = vmatpush2.msra.mxu0 0.0
        %481 = vmatprep.subr.mxu0 0.0
        %482 = vmatpush2.msra.mxu0 0.0
        %483 = vmatprep.subr.mxu0 0.0
        %484 = vmatpush2.msra.mxu0 0.0
        %485 = vmatprep.subr.mxu0 0.0
        %486 = vmatpush2.msra.mxu0 0.0
        %487 = vmatprep.subr.mxu0 0.0
        %488 = vmatpush2.msra.mxu0 0.0
        %489 = vmatprep.subr.mxu0 0.0
        %490 = vmatpush2.msra.mxu0 0.0
        %491 = vmatprep.subr.mxu0 0.0
        %492 = vmatpush2.msra.mxu0 0.0
        %493 = vmatprep.subr.mxu0 0.0
        %494 = vmatpush2.msra.mxu0 0.0
        %495 = vmatprep.subr.mxu0 0.0
        %496 = vmatpush2.msra.mxu0 0.0
        %497 = vmatprep.subr.mxu0 0.0
        %498 = vmatpush2.msra.mxu0 0.0
        %499 = vmatprep.subr.mxu0 0.0
        %500 = vmatpush2.msra.mxu0 0.0
        %501 = vmatprep.mubr.f32.mxu0 0.0
        %502 = vmatmul.mubr.f32.gmra.mxu0 %v287
        %v503 = vpop.f32.mrf.mxu0
        %v504 = vadd.f32 %v420, %v503
        %v505 = vpop.f32.mrf.mxu0
        %v506 = vadd.f32 %v424, %v505
        %507 = vmatprep.mubr.f32.mxu0 0.0
        %508 = vmatmul.mubr.f32.gmra.mxu0 %v288
        %v509 = vpop.f32.mrf.mxu0
        %v510 = vadd.f32 %v420, %v509
        %v511 = vpop.f32.mrf.mxu0
        %v512 = vadd.f32 %v424, %v511
        %513 = vmatprep.mubr.f32.mxu0 0.0
        %514 = vmatmul.mubr.f32.gmra.mxu0 %v289
        %v515 = vpop.f32.mrf.mxu0
        %v516 = vadd.f32 %v420, %v515
        %v517 = vpop.f32.mrf.mxu0
        %v518 = vadd.f32 %v424, %v517
        %519 = vmatprep.mubr.f32.mxu0 0.0
        %520 = vmatmul.mubr.f32.gmra.mxu0 %v290
        %v521 = vpop.f32.mrf.mxu0
        %v522 = vadd.f32 %v420, %v521
        %v523 = vpop.f32.mrf.mxu0
        %v524 = vadd.f32 %v424, %v523
        %525 = vmatprep.mubr.f32.mxu0 0.0
        %526 = vmatmul.mubr.f32.gmra.mxu0 %v291
        %v527 = vpop.f32.mrf.mxu0
        %v528 = vadd.f32 %v420, %v527
        %v529 = vpop.f32.mrf.mxu0
        %v530 = vadd.f32 %v424, %v529
        %531 = vmatprep.mubr.f32.mxu0 0.0
        %532 = vmatmul.mubr.f32.gmra.mxu0 %v292
        %v533 = vpop.f32.mrf.mxu0
        %v534 = vadd.f32 %v420, %v533
        %v535 = vpop.f32.mrf.mxu0
        %v536 = vadd.f32 %v424, %v535
        %537 = vmatprep.mubr.f32.mxu0 0.0
        %538 = vmatmul.mubr.f32.gmra.mxu0 %v293
        %v539 = vpop.f32.mrf.mxu0
        %v540 = vadd.f32 %v420, %v539
        %v541 = vpop.f32.mrf.mxu0
        %v542 = vadd.f32 %v424, %v541
        %543 = vmatprep.mubr.f32.mxu0 0.0
        %544 = vmatmul.mubr.f32.gmra.mxu0 %v294
        %v545 = vpop.f32.mrf.mxu0
        %v546 = vadd.f32 %v420, %v545
        %v547 = vpop.f32.mrf.mxu0
        %v548 = vadd.f32 %v424, %v547
        %549 = vmatprep.mubr.f32.mxu0 0.0
        %550 = vmatmul.mubr.f32.gmra.mxu0 %v295
        %v551 = vpop.f32.mrf.mxu0
        %v552 = vadd.f32 %v420, %v551
        %v553 = vpop.f32.mrf.mxu0
        %v554 = vadd.f32 %v424, %v553
        %555 = vmatprep.mubr.f32.mxu0 0.0
        %556 = vmatmul.mubr.f32.gmra.mxu0 %v296
        %v557 = vpop.f32.mrf.mxu0
        %v558 = vadd.f32 %v420, %v557
        %v559 = vpop.f32.mrf.mxu0
        %v560 = vadd.f32 %v424, %v559
        %561 = vmatprep.mubr.f32.mxu0 0.0
        %562 = vmatmul.mubr.f32.gmra.mxu0 %v297
        %v563 = vpop.f32.mrf.mxu0
        %v564 = vadd.f32 %v420, %v563
        %v565 = vpop.f32.mrf.mxu0
        %v566 = vadd.f32 %v424, %v565
        %567 = vmatprep.mubr.f32.mxu0 0.0
        %568 = vmatmul.mubr.f32.gmra.mxu0 %v298
        %v569 = vpop.f32.mrf.mxu0
        %v570 = vadd.f32 %v420, %v569
        %v571 = vpop.f32.mrf.mxu0
        %v572 = vadd.f32 %v424, %v571
        %573 = vmatprep.mubr.f32.mxu0 0.0
        %574 = vmatmul.mubr.f32.gmra.mxu0 %v299
        %v575 = vpop.f32.mrf.mxu0
        %v576 = vadd.f32 %v420, %v575
        %v577 = vpop.f32.mrf.mxu0
        %v578 = vadd.f32 %v424, %v577
        %579 = vmatprep.mubr.f32.mxu0 0.0
        %580 = vmatmul.mubr.f32.gmra.mxu0 %v300
        %v581 = vpop.f32.mrf.mxu0
        %v582 = vadd.f32 %v420, %v581
        %v583 = vpop.f32.mrf.mxu0
        %v584 = vadd.f32 %v424, %v583
        %585 = vmatprep.mubr.f32.mxu0 0.0
        %586 = vmatmul.mubr.f32.gmra.mxu0 %v301
        %v587 = vpop.f32.mrf.mxu0
        %v588 = vadd.f32 %v420, %v587
        %v589 = vpop.f32.mrf.mxu0
        %v590 = vadd.f32 %v424, %v589
        %591 = vmatprep.mubr.f32.mxu0 0.0
        %592 = vmatmul.mubr.f32.gmra.mxu0 %v302
        %v593 = vpop.f32.mrf.mxu0
        %v594 = vadd.f32 %v420, %v593
        %v595 = vpop.f32.mrf.mxu0
        %v596 = vadd.f32 %v424, %v595
        %597 = vmatprep.mubr.f32.mxu0 0.0
        %598 = vmatmul.mubr.f32.gmra.mxu0 %v303
        %v599 = vpop.f32.mrf.mxu0
        %v600 = vadd.f32 %v420, %v599
        %v601 = vpop.f32.mrf.mxu0
        %v602 = vadd.f32 %v424, %v601
        %603 = vmatprep.mubr.f32.mxu0 0.0
        %604 = vmatmul.mubr.f32.gmra.mxu0 %v304
        %v605 = vpop.f32.mrf.mxu0
        %v606 = vadd.f32 %v420, %v605
        %v607 = vpop.f32.mrf.mxu0
        %v608 = vadd.f32 %v424, %v607
        %609 = vmatprep.mubr.f32.mxu0 0.0
        %610 = vmatmul.mubr.f32.gmra.mxu0 %v305
        %v611 = vpop.f32.mrf.mxu0
        %v612 = vadd.f32 %v420, %v611
        %v613 = vpop.f32.mrf.mxu0
        %v614 = vadd.f32 %v424, %v613
        %615 = vmatprep.mubr.f32.mxu0 0.0
        %616 = vmatmul.mubr.f32.gmra.mxu0 %v306
        %v617 = vpop.f32.mrf.mxu0
        %v618 = vadd.f32 %v420, %v617
        %v619 = vpop.f32.mrf.mxu0
        %v620 = vadd.f32 %v424, %v619
        %621 = vmatprep.mubr.f32.mxu0 0.0
        %622 = vmatmul.mubr.f32.gmra.mxu0 %v307
        %v623 = vpop.f32.mrf.mxu0
        %v624 = vadd.f32 %v420, %v623
        %v625 = vpop.f32.mrf.mxu0
        %v626 = vadd.f32 %v424, %v625
        %627 = vmatprep.mubr.f32.mxu0 0.0
        %628 = vmatmul.mubr.f32.gmra.mxu0 %v308
        %v629 = vpop.f32.mrf.mxu0
        %v630 = vadd.f32 %v420, %v629
        %v631 = vpop.f32.mrf.mxu0
        %v632 = vadd.f32 %v424, %v631
        %633 = vmatprep.mubr.f32.mxu0 0.0
        %634 = vmatmul.mubr.f32.gmra.mxu0 %v309
        %v635 = vpop.f32.mrf.mxu0
        %v636 = vadd.f32 %v420, %v635
        %v637 = vpop.f32.mrf.mxu0
        %v638 = vadd.f32 %v424, %v637
        %639 = vmatprep.mubr.f32.mxu0 0.0
        %640 = vmatmul.mubr.f32.gmra.mxu0 %v310
        %v641 = vpop.f32.mrf.mxu0
        %v642 = vadd.f32 %v420, %v641
        %v643 = vpop.f32.mrf.mxu0
        %v644 = vadd.f32 %v424, %v643
        %645 = vmatprep.mubr.f32.mxu0 0.0
        %646 = vmatmul.mubr.f32.gmra.mxu0 %v311
        %v647 = vpop.f32.mrf.mxu0
        %v648 = vadd.f32 %v420, %v647
        %v649 = vpop.f32.mrf.mxu0
        %v650 = vadd.f32 %v424, %v649
        %651 = vmatprep.mubr.f32.mxu0 0.0
        %652 = vmatmul.mubr.f32.gmra.mxu0 %v312
        %v653 = vpop.f32.mrf.mxu0
        %v654 = vadd.f32 %v420, %v653
        %v655 = vpop.f32.mrf.mxu0
        %v656 = vadd.f32 %v424, %v655
        %657 = vmatprep.mubr.f32.mxu0 0.0
        %658 = vmatmul.mubr.f32.gmra.mxu0 %v313
        %v659 = vpop.f32.mrf.mxu0
        %v660 = vadd.f32 %v420, %v659
        %v661 = vpop.f32.mrf.mxu0
        %v662 = vadd.f32 %v424, %v661
        %663 = vmatprep.mubr.f32.mxu0 0.0
        %664 = vmatmul.mubr.f32.gmra.mxu0 %v314
        %v665 = vpop.f32.mrf.mxu0
        %v666 = vadd.f32 %v420, %v665
        %v667 = vpop.f32.mrf.mxu0
        %v668 = vadd.f32 %v424, %v667
        %669 = vmatprep.mubr.f32.mxu0 0.0
        %670 = vmatmul.mubr.f32.gmra.mxu0 %v315
        %v671 = vpop.f32.mrf.mxu0
        %v672 = vadd.f32 %v420, %v671
        %v673 = vpop.f32.mrf.mxu0
        %v674 = vadd.f32 %v424, %v673
        %675 = vmatprep.mubr.f32.mxu0 0.0
        %676 = vmatmul.mubr.f32.gmra.mxu0 %v316
        %v677 = vpop.f32.mrf.mxu0
        %v678 = vadd.f32 %v420, %v677
        %v679 = vpop.f32.mrf.mxu0
        %v680 = vadd.f32 %v424, %v679
        %681 = vmatprep.mubr.f32.mxu0 0.0
        %682 = vmatmul.mubr.f32.gmra.mxu0 %v317
        %v683 = vpop.f32.mrf.mxu0
        %v684 = vadd.f32 %v420, %v683
        %v685 = vpop.f32.mrf.mxu0
        %v686 = vadd.f32 %v424, %v685
        %687 = vmatprep.mubr.f32.mxu0 0.0
        %688 = vmatmul.mubr.f32.gmra.mxu0 %v318
        %v689 = vpop.f32.mrf.mxu0
        %v690 = vadd.f32 %v420, %v689
        %v691 = vpop.f32.mrf.mxu0
        %v692 = vadd.f32 %v424, %v691
        %693 = vmatprep.mubr.f32.mxu0 0.0
        %694 = vmatmul.mubr.f32.gmra.mxu0 %v319
        %v695 = vpop.f32.mrf.mxu0
        %v696 = vadd.f32 %v420, %v695
        %v697 = vpop.f32.mrf.mxu0
        %v698 = vadd.f32 %v424, %v697
        %699 = vmatprep.mubr.f32.mxu0 0.0
        %700 = vmatmul.mubr.f32.gmra.mxu0 %v320
        %v701 = vpop.f32.mrf.mxu0
        %v702 = vadd.f32 %v420, %v701
        %v703 = vpop.f32.mrf.mxu0
        %v704 = vadd.f32 %v424, %v703
        %705 = vmatprep.mubr.f32.mxu0 0.0
        %706 = vmatmul.mubr.f32.gmra.mxu0 %v321
        %v707 = vpop.f32.mrf.mxu0
        %v708 = vadd.f32 %v420, %v707
        %v709 = vpop.f32.mrf.mxu0
        %v710 = vadd.f32 %v424, %v709
        %711 = vmatprep.mubr.f32.mxu0 0.0
        %712 = vmatmul.mubr.f32.gmra.mxu0 %v322
        %v713 = vpop.f32.mrf.mxu0
        %v714 = vadd.f32 %v420, %v713
        %v715 = vpop.f32.mrf.mxu0
        %v716 = vadd.f32 %v424, %v715
        %717 = vmatprep.mubr.f32.mxu0 0.0
        %718 = vmatmul.mubr.f32.gmra.mxu0 %v323
        %v719 = vpop.f32.mrf.mxu0
        %v720 = vadd.f32 %v420, %v719
        %v721 = vpop.f32.mrf.mxu0
        %v722 = vadd.f32 %v424, %v721
        %723 = vmatprep.mubr.f32.mxu0 0.0
        %724 = vmatmul.mubr.f32.gmra.mxu0 %v324
        %v725 = vpop.f32.mrf.mxu0
        %v726 = vadd.f32 %v420, %v725
        %v727 = vpop.f32.mrf.mxu0
        %v728 = vadd.f32 %v424, %v727
        %729 = vmatprep.mubr.f32.mxu0 0.0
        %730 = vmatmul.mubr.f32.gmra.mxu0 %v325
        %v731 = vpop.f32.mrf.mxu0
        %v732 = vadd.f32 %v420, %v731
        %v733 = vpop.f32.mrf.mxu0
        %v734 = vadd.f32 %v424, %v733
        %735 = vmatprep.mubr.f32.mxu0 0.0
        %736 = vmatmul.mubr.f32.gmra.mxu0 %v326
        %v737 = vpop.f32.mrf.mxu0
        %v738 = vadd.f32 %v420, %v737
        %v739 = vpop.f32.mrf.mxu0
        %v740 = vadd.f32 %v424, %v739
        %741 = vmatprep.mubr.f32.mxu0 0.0
        %742 = vmatmul.mubr.f32.gmra.mxu0 %v327
        %v743 = vpop.f32.mrf.mxu0
        %v744 = vadd.f32 %v420, %v743
        %v745 = vpop.f32.mrf.mxu0
        %v746 = vadd.f32 %v424, %v745
        %747 = vmatprep.mubr.f32.mxu0 0.0
        %748 = vmatmul.mubr.f32.gmra.mxu0 %v328
        %v749 = vpop.f32.mrf.mxu0
        %v750 = vadd.f32 %v420, %v749
        %v751 = vpop.f32.mrf.mxu0
        %v752 = vadd.f32 %v424, %v751
        %753 = vmatprep.mubr.f32.mxu0 0.0
        %754 = vmatmul.mubr.f32.gmra.mxu0 %v329
        %v755 = vpop.f32.mrf.mxu0
        %v756 = vadd.f32 %v420, %v755
        %v757 = vpop.f32.mrf.mxu0
        %v758 = vadd.f32 %v424, %v757
        %759 = vmatprep.mubr.f32.mxu0 0.0
        %760 = vmatmul.mubr.f32.gmra.mxu0 %v330
        %v761 = vpop.f32.mrf.mxu0
        %v762 = vadd.f32 %v420, %v761
        %v763 = vpop.f32.mrf.mxu0
        %v764 = vadd.f32 %v424, %v763
        %765 = vmatprep.mubr.f32.mxu0 0.0
        %766 = vmatmul.mubr.f32.gmra.mxu0 %v331
        %v767 = vpop.f32.mrf.mxu0
        %v768 = vadd.f32 %v420, %v767
        %v769 = vpop.f32.mrf.mxu0
        %v770 = vadd.f32 %v424, %v769
        %771 = vmatprep.mubr.f32.mxu0 0.0
        %772 = vmatmul.mubr.f32.gmra.mxu0 %v332
        %v773 = vpop.f32.mrf.mxu0
        %v774 = vadd.f32 %v420, %v773
        %v775 = vpop.f32.mrf.mxu0
        %v776 = vadd.f32 %v424, %v775
        %777 = vmatprep.mubr.f32.mxu0 0.0
        %778 = vmatmul.mubr.f32.gmra.mxu0 %v333
        %v779 = vpop.f32.mrf.mxu0
        %v780 = vadd.f32 %v420, %v779
        %v781 = vpop.f32.mrf.mxu0
        %v782 = vadd.f32 %v424, %v781
        %783 = vmatprep.mubr.f32.mxu0 0.0
        %784 = vmatmul.mubr.f32.gmra.mxu0 %v334
        %v785 = vpop.f32.mrf.mxu0
        %v786 = vadd.f32 %v420, %v785
        %v787 = vpop.f32.mrf.mxu0
        %v788 = vadd.f32 %v424, %v787
        %789 = vmatprep.mubr.f32.mxu0 0.0
        %790 = vmatmul.mubr.f32.gmra.mxu0 %v335
        %v791 = vpop.f32.mrf.mxu0
        %v792 = vadd.f32 %v420, %v791
        %v793 = vpop.f32.mrf.mxu0
        %v794 = vadd.f32 %v424, %v793
        %795 = vmatprep.mubr.f32.mxu0 0.0
        %796 = vmatmul.mubr.f32.gmra.mxu0 %v336
        %v797 = vpop.f32.mrf.mxu0
        %v798 = vadd.f32 %v420, %v797
        %v799 = vpop.f32.mrf.mxu0
        %v800 = vadd.f32 %v424, %v799
        %801 = vmatprep.mubr.f32.mxu0 0.0
        %802 = vmatmul.mubr.f32.gmra.mxu0 %v337
        %v803 = vpop.f32.mrf.mxu0
        %v804 = vadd.f32 %v420, %v803
        %v805 = vpop.f32.mrf.mxu0
        %v806 = vadd.f32 %v424, %v805
        %807 = vmatprep.mubr.f32.mxu0 0.0
        %808 = vmatmul.mubr.f32.gmra.mxu0 %v338
        %v809 = vpop.f32.mrf.mxu0
        %v810 = vadd.f32 %v420, %v809
        %v811 = vpop.f32.mrf.mxu0
        %v812 = vadd.f32 %v424, %v811
        %813 = vmatprep.mubr.f32.mxu0 0.0
        %814 = vmatmul.mubr.f32.gmra.mxu0 %v339
        %v815 = vpop.f32.mrf.mxu0
        %v816 = vadd.f32 %v420, %v815
        %v817 = vpop.f32.mrf.mxu0
        %v818 = vadd.f32 %v424, %v817
        %819 = vmatprep.mubr.f32.mxu0 0.0
        %820 = vmatmul.mubr.f32.gmra.mxu0 %v340
        %v821 = vpop.f32.mrf.mxu0
        %v822 = vadd.f32 %v420, %v821
        %v823 = vpop.f32.mrf.mxu0
        %v824 = vadd.f32 %v424, %v823
        %825 = vmatprep.mubr.f32.mxu0 0.0
        %826 = vmatmul.mubr.f32.gmra.mxu0 %v341
        %v827 = vpop.f32.mrf.mxu0
        %v828 = vadd.f32 %v420, %v827
        %v829 = vpop.f32.mrf.mxu0
        %v830 = vadd.f32 %v424, %v829
        %831 = vmatprep.mubr.f32.mxu0 0.0
        %832 = vmatmul.mubr.f32.gmra.mxu0 %v342
        %v833 = vpop.f32.mrf.mxu0
        %v834 = vadd.f32 %v420, %v833
        %v835 = vpop.f32.mrf.mxu0
        %v836 = vadd.f32 %v424, %v835
        %837 = vmatprep.mubr.f32.mxu0 0.0
        %838 = vmatmul.mubr.f32.gmra.mxu0 %v343
        %v839 = vpop.f32.mrf.mxu0
        %v840 = vadd.f32 %v420, %v839
        %v841 = vpop.f32.mrf.mxu0
        %v842 = vadd.f32 %v424, %v841
        %843 = vmatprep.mubr.f32.mxu0 0.0
        %844 = vmatmul.mubr.f32.gmra.mxu0 %v344
        %v845 = vpop.f32.mrf.mxu0
        %v846 = vadd.f32 %v420, %v845
        %v847 = vpop.f32.mrf.mxu0
        %v848 = vadd.f32 %v424, %v847
        %849 = vmatprep.mubr.f32.mxu0 0.0
        %850 = vmatmul.mubr.f32.gmra.mxu0 %v345
        %v851 = vpop.f32.mrf.mxu0
        %v852 = vadd.f32 %v420, %v851
        %v853 = vpop.f32.mrf.mxu0
        %v854 = vadd.f32 %v424, %v853
        %855 = vmatprep.mubr.f32.mxu0 0.0
        %856 = vmatmul.mubr.f32.gmra.mxu0 %v346
        %v857 = vpop.f32.mrf.mxu0
        %v858 = vadd.f32 %v420, %v857
        %v859 = vpop.f32.mrf.mxu0
        %v860 = vadd.f32 %v424, %v859
        %861 = vmatprep.mubr.f32.mxu0 0.0
        %862 = vmatmul.mubr.f32.gmra.mxu0 %v347
        %v863 = vpop.f32.mrf.mxu0
        %v864 = vadd.f32 %v420, %v863
        %v865 = vpop.f32.mrf.mxu0
        %v866 = vadd.f32 %v424, %v865
        %867 = vmatprep.mubr.f32.mxu0 0.0
        %868 = vmatmul.mubr.f32.gmra.mxu0 %v348
        %v869 = vpop.f32.mrf.mxu0
        %v870 = vadd.f32 %v420, %v869
        %v871 = vpop.f32.mrf.mxu0
        %v872 = vadd.f32 %v424, %v871
        %873 = vmatprep.mubr.f32.mxu0 0.0
        %874 = vmatmul.mubr.f32.gmra.mxu0 %v349
        %v875 = vpop.f32.mrf.mxu0
        %v876 = vadd.f32 %v420, %v875
        %v877 = vpop.f32.mrf.mxu0
        %v878 = vadd.f32 %v424, %v877
        %879 = vmatprep.mubr.f32.mxu0 0.0
        %880 = vmatmul.mubr.f32.gmra.mxu0 %v350
        %v881 = vpop.f32.mrf.mxu0
        %v882 = vadd.f32 %v420, %v881
        %v883 = vpop.f32.mrf.mxu0
        %v884 = vadd.f32 %v424, %v883
        %885 = vdwg.mxu0
        %886 = vmatprep.subr.mxu0 %v414
        %887 = vmatpush1.msra.mxu0 %v413
        %888 = vmatprep.subr.mxu0 %v410
        %889 = vmatpush1.msra.mxu0 %v409
        %890 = vmatprep.subr.mxu0 %v406
        %891 = vmatpush1.msra.mxu0 %v405
        %892 = vmatprep.subr.mxu0 %v402
        %893 = vmatpush1.msra.mxu0 %v401
        %894 = vmatprep.subr.mxu0 %v398
        %895 = vmatpush1.msra.mxu0 %v397
        %896 = vmatprep.subr.mxu0 %v394
        %897 = vmatpush1.msra.mxu0 %v393
        %898 = vmatprep.subr.mxu0 %v390
        %899 = vmatpush1.msra.mxu0 %v389
        %900 = vmatprep.subr.mxu0 %v386
        %901 = vmatpush1.msra.mxu0 %v385
        %902 = vmatprep.subr.mxu0 %v382
        %903 = vmatpush1.msra.mxu0 %v381
        %904 = vmatprep.subr.mxu0 %v378
        %905 = vmatpush1.msra.mxu0 %v377
        %906 = vmatprep.subr.mxu0 %v374
        %907 = vmatpush1.msra.mxu0 %v373
        %908 = vmatprep.subr.mxu0 %v370
        %909 = vmatpush1.msra.mxu0 %v369
        %910 = vmatprep.subr.mxu0 %v366
        %911 = vmatpush1.msra.mxu0 %v365
        %912 = vmatprep.subr.mxu0 %v362
        %913 = vmatpush1.msra.mxu0 %v361
        %914 = vmatprep.subr.mxu0 %v358
        %915 = vmatpush1.msra.mxu0 %v357
        %916 = vmatprep.subr.mxu0 %v354
        %917 = vmatpush1.msra.mxu0 %v353
        %918 = vmatprep.subr.mxu0 0.0
        %919 = vmatpush2.msra.mxu0 0.0
        %920 = vmatprep.subr.mxu0 0.0
        %921 = vmatpush2.msra.mxu0 0.0
        %922 = vmatprep.subr.mxu0 0.0
        %923 = vmatpush2.msra.mxu0 0.0
        %924 = vmatprep.subr.mxu0 0.0
        %925 = vmatpush2.msra.mxu0 0.0
        %926 = vmatprep.subr.mxu0 0.0
        %927 = vmatpush2.msra.mxu0 0.0
        %928 = vmatprep.subr.mxu0 0.0
        %929 = vmatpush2.msra.mxu0 0.0
        %930 = vmatprep.subr.mxu0 0.0
        %931 = vmatpush2.msra.mxu0 0.0
        %932 = vmatprep.subr.mxu0 0.0
        %933 = vmatpush2.msra.mxu0 0.0
        %934 = vmatprep.subr.mxu0 0.0
        %935 = vmatpush2.msra.mxu0 0.0
        %936 = vmatprep.subr.mxu0 0.0
        %937 = vmatpush2.msra.mxu0 0.0
        %938 = vmatprep.subr.mxu0 0.0
        %939 = vmatpush2.msra.mxu0 0.0
        %940 = vmatprep.subr.mxu0 0.0
        %941 = vmatpush2.msra.mxu0 0.0
        %942 = vmatprep.subr.mxu0 0.0
        %943 = vmatpush2.msra.mxu0 0.0
        %944 = vmatprep.subr.mxu0 0.0
        %945 = vmatpush2.msra.mxu0 0.0
        %946 = vmatprep.subr.mxu0 0.0
        %947 = vmatpush2.msra.mxu0 0.0
        %948 = vmatprep.subr.mxu0 0.0
        %949 = vmatpush2.msra.mxu0 0.0
        %950 = vmatprep.mubr.f32.mxu0 0.0
        %951 = vmatmul.mubr.f32.gmra.mxu0 %v287
        %v952 = vpop.f32.mrf.mxu0
        %v953 = vadd.f32 %v428, %v952
        %v954 = vpop.f32.mrf.mxu0
        %v955 = vadd.f32 %v432, %v954
        %956 = vmatprep.mubr.f32.mxu0 0.0
        %957 = vmatmul.mubr.f32.gmra.mxu0 %v288
        %v958 = vpop.f32.mrf.mxu0
        %v959 = vadd.f32 %v428, %v958
        %v960 = vpop.f32.mrf.mxu0
        %v961 = vadd.f32 %v432, %v960
        %962 = vmatprep.mubr.f32.mxu0 0.0
        %963 = vmatmul.mubr.f32.gmra.mxu0 %v289
        %v964 = vpop.f32.mrf.mxu0
        %v965 = vadd.f32 %v428, %v964
        %v966 = vpop.f32.mrf.mxu0
        %v967 = vadd.f32 %v432, %v966
        %968 = vmatprep.mubr.f32.mxu0 0.0
        %969 = vmatmul.mubr.f32.gmra.mxu0 %v290
        %v970 = vpop.f32.mrf.mxu0
        %v971 = vadd.f32 %v428, %v970
        %v972 = vpop.f32.mrf.mxu0
        %v973 = vadd.f32 %v432, %v972
        %974 = vmatprep.mubr.f32.mxu0 0.0
        %975 = vmatmul.mubr.f32.gmra.mxu0 %v291
        %v976 = vpop.f32.mrf.mxu0
        %v977 = vadd.f32 %v428, %v976
        %v978 = vpop.f32.mrf.mxu0
        %v979 = vadd.f32 %v432, %v978
        %980 = vmatprep.mubr.f32.mxu0 0.0
        %981 = vmatmul.mubr.f32.gmra.mxu0 %v292
        %v982 = vpop.f32.mrf.mxu0
        %v983 = vadd.f32 %v428, %v982
        %v984 = vpop.f32.mrf.mxu0
        %v985 = vadd.f32 %v432, %v984
        %986 = vmatprep.mubr.f32.mxu0 0.0
        %987 = vmatmul.mubr.f32.gmra.mxu0 %v293
        %v988 = vpop.f32.mrf.mxu0
        %v989 = vadd.f32 %v428, %v988
        %v990 = vpop.f32.mrf.mxu0
        %v991 = vadd.f32 %v432, %v990
        %992 = vmatprep.mubr.f32.mxu0 0.0
        %993 = vmatmul.mubr.f32.gmra.mxu0 %v294
        %v994 = vpop.f32.mrf.mxu0
        %v995 = vadd.f32 %v428, %v994
        %v996 = vpop.f32.mrf.mxu0
        %v997 = vadd.f32 %v432, %v996
        %998 = vmatprep.mubr.f32.mxu0 0.0
        %999 = vmatmul.mubr.f32.gmra.mxu0 %v295
        %v1000 = vpop.f32.mrf.mxu0
        %v1001 = vadd.f32 %v428, %v1000
        %v1002 = vpop.f32.mrf.mxu0
        %v1003 = vadd.f32 %v432, %v1002
        %1004 = vmatprep.mubr.f32.mxu0 0.0
        %1005 = vmatmul.mubr.f32.gmra.mxu0 %v296
        %v1006 = vpop.f32.mrf.mxu0
        %v1007 = vadd.f32 %v428, %v1006
        %v1008 = vpop.f32.mrf.mxu0
        %v1009 = vadd.f32 %v432, %v1008
        %1010 = vmatprep.mubr.f32.mxu0 0.0
        %1011 = vmatmul.mubr.f32.gmra.mxu0 %v297
        %v1012 = vpop.f32.mrf.mxu0
        %v1013 = vadd.f32 %v428, %v1012
        %v1014 = vpop.f32.mrf.mxu0
        %v1015 = vadd.f32 %v432, %v1014
        %1016 = vmatprep.mubr.f32.mxu0 0.0
        %1017 = vmatmul.mubr.f32.gmra.mxu0 %v298
        %v1018 = vpop.f32.mrf.mxu0
        %v1019 = vadd.f32 %v428, %v1018
        %v1020 = vpop.f32.mrf.mxu0
        %v1021 = vadd.f32 %v432, %v1020
        %1022 = vmatprep.mubr.f32.mxu0 0.0
        %1023 = vmatmul.mubr.f32.gmra.mxu0 %v299
        %v1024 = vpop.f32.mrf.mxu0
        %v1025 = vadd.f32 %v428, %v1024
        %v1026 = vpop.f32.mrf.mxu0
        %v1027 = vadd.f32 %v432, %v1026
        %1028 = vmatprep.mubr.f32.mxu0 0.0
        %1029 = vmatmul.mubr.f32.gmra.mxu0 %v300
        %v1030 = vpop.f32.mrf.mxu0
        %v1031 = vadd.f32 %v428, %v1030
        %v1032 = vpop.f32.mrf.mxu0
        %v1033 = vadd.f32 %v432, %v1032
        %1034 = vmatprep.mubr.f32.mxu0 0.0
        %1035 = vmatmul.mubr.f32.gmra.mxu0 %v301
        %v1036 = vpop.f32.mrf.mxu0
        %v1037 = vadd.f32 %v428, %v1036
        %v1038 = vpop.f32.mrf.mxu0
        %v1039 = vadd.f32 %v432, %v1038
        %1040 = vmatprep.mubr.f32.mxu0 0.0
        %1041 = vmatmul.mubr.f32.gmra.mxu0 %v302
        %v1042 = vpop.f32.mrf.mxu0
        %v1043 = vadd.f32 %v428, %v1042
        %v1044 = vpop.f32.mrf.mxu0
        %v1045 = vadd.f32 %v432, %v1044
        %1046 = vmatprep.mubr.f32.mxu0 0.0
        %1047 = vmatmul.mubr.f32.gmra.mxu0 %v303
        %v1048 = vpop.f32.mrf.mxu0
        %v1049 = vadd.f32 %v428, %v1048
        %v1050 = vpop.f32.mrf.mxu0
        %v1051 = vadd.f32 %v432, %v1050
        %1052 = vmatprep.mubr.f32.mxu0 0.0
        %1053 = vmatmul.mubr.f32.gmra.mxu0 %v304
        %v1054 = vpop.f32.mrf.mxu0
        %v1055 = vadd.f32 %v428, %v1054
        %v1056 = vpop.f32.mrf.mxu0
        %v1057 = vadd.f32 %v432, %v1056
        %1058 = vmatprep.mubr.f32.mxu0 0.0
        %1059 = vmatmul.mubr.f32.gmra.mxu0 %v305
        %v1060 = vpop.f32.mrf.mxu0
        %v1061 = vadd.f32 %v428, %v1060
        %v1062 = vpop.f32.mrf.mxu0
        %v1063 = vadd.f32 %v432, %v1062
        %1064 = vmatprep.mubr.f32.mxu0 0.0
        %1065 = vmatmul.mubr.f32.gmra.mxu0 %v306
        %v1066 = vpop.f32.mrf.mxu0
        %v1067 = vadd.f32 %v428, %v1066
        %v1068 = vpop.f32.mrf.mxu0
        %v1069 = vadd.f32 %v432, %v1068
        %1070 = vmatprep.mubr.f32.mxu0 0.0
        %1071 = vmatmul.mubr.f32.gmra.mxu0 %v307
        %v1072 = vpop.f32.mrf.mxu0
        %v1073 = vadd.f32 %v428, %v1072
        %v1074 = vpop.f32.mrf.mxu0
        %v1075 = vadd.f32 %v432, %v1074
        %1076 = vmatprep.mubr.f32.mxu0 0.0
        %1077 = vmatmul.mubr.f32.gmra.mxu0 %v308
        %v1078 = vpop.f32.mrf.mxu0
        %v1079 = vadd.f32 %v428, %v1078
        %v1080 = vpop.f32.mrf.mxu0
        %v1081 = vadd.f32 %v432, %v1080
        %1082 = vmatprep.mubr.f32.mxu0 0.0
        %1083 = vmatmul.mubr.f32.gmra.mxu0 %v309
        %v1084 = vpop.f32.mrf.mxu0
        %v1085 = vadd.f32 %v428, %v1084
        %v1086 = vpop.f32.mrf.mxu0
        %v1087 = vadd.f32 %v432, %v1086
        %1088 = vmatprep.mubr.f32.mxu0 0.0
        %1089 = vmatmul.mubr.f32.gmra.mxu0 %v310
        %v1090 = vpop.f32.mrf.mxu0
        %v1091 = vadd.f32 %v428, %v1090
        %v1092 = vpop.f32.mrf.mxu0
        %v1093 = vadd.f32 %v432, %v1092
        %1094 = vmatprep.mubr.f32.mxu0 0.0
        %1095 = vmatmul.mubr.f32.gmra.mxu0 %v311
        %v1096 = vpop.f32.mrf.mxu0
        %v1097 = vadd.f32 %v428, %v1096
        %v1098 = vpop.f32.mrf.mxu0
        %v1099 = vadd.f32 %v432, %v1098
        %1100 = vmatprep.mubr.f32.mxu0 0.0
        %1101 = vmatmul.mubr.f32.gmra.mxu0 %v312
        %v1102 = vpop.f32.mrf.mxu0
        %v1103 = vadd.f32 %v428, %v1102
        %v1104 = vpop.f32.mrf.mxu0
        %v1105 = vadd.f32 %v432, %v1104
        %1106 = vmatprep.mubr.f32.mxu0 0.0
        %1107 = vmatmul.mubr.f32.gmra.mxu0 %v313
        %v1108 = vpop.f32.mrf.mxu0
        %v1109 = vadd.f32 %v428, %v1108
        %v1110 = vpop.f32.mrf.mxu0
        %v1111 = vadd.f32 %v432, %v1110
        %1112 = vmatprep.mubr.f32.mxu0 0.0
        %1113 = vmatmul.mubr.f32.gmra.mxu0 %v314
        %v1114 = vpop.f32.mrf.mxu0
        %v1115 = vadd.f32 %v428, %v1114
        %v1116 = vpop.f32.mrf.mxu0
        %v1117 = vadd.f32 %v432, %v1116
        %1118 = vmatprep.mubr.f32.mxu0 0.0
        %1119 = vmatmul.mubr.f32.gmra.mxu0 %v315
        %v1120 = vpop.f32.mrf.mxu0
        %v1121 = vadd.f32 %v428, %v1120
        %v1122 = vpop.f32.mrf.mxu0
        %v1123 = vadd.f32 %v432, %v1122
        %1124 = vmatprep.mubr.f32.mxu0 0.0
        %1125 = vmatmul.mubr.f32.gmra.mxu0 %v316
        %v1126 = vpop.f32.mrf.mxu0
        %v1127 = vadd.f32 %v428, %v1126
        %v1128 = vpop.f32.mrf.mxu0
        %v1129 = vadd.f32 %v432, %v1128
        %1130 = vmatprep.mubr.f32.mxu0 0.0
        %1131 = vmatmul.mubr.f32.gmra.mxu0 %v317
        %v1132 = vpop.f32.mrf.mxu0
        %v1133 = vadd.f32 %v428, %v1132
        %v1134 = vpop.f32.mrf.mxu0
        %v1135 = vadd.f32 %v432, %v1134
        %1136 = vmatprep.mubr.f32.mxu0 0.0
        %1137 = vmatmul.mubr.f32.gmra.mxu0 %v318
        %v1138 = vpop.f32.mrf.mxu0
        %v1139 = vadd.f32 %v428, %v1138
        %v1140 = vpop.f32.mrf.mxu0
        %v1141 = vadd.f32 %v432, %v1140
        %1142 = vmatprep.mubr.f32.mxu0 0.0
        %1143 = vmatmul.mubr.f32.gmra.mxu0 %v319
        %v1144 = vpop.f32.mrf.mxu0
        %v1145 = vadd.f32 %v428, %v1144
        %v1146 = vpop.f32.mrf.mxu0
        %v1147 = vadd.f32 %v432, %v1146
        %1148 = vmatprep.mubr.f32.mxu0 0.0
        %1149 = vmatmul.mubr.f32.gmra.mxu0 %v320
        %v1150 = vpop.f32.mrf.mxu0
        %v1151 = vadd.f32 %v428, %v1150
        %v1152 = vpop.f32.mrf.mxu0
        %v1153 = vadd.f32 %v432, %v1152
        %1154 = vmatprep.mubr.f32.mxu0 0.0
        %1155 = vmatmul.mubr.f32.gmra.mxu0 %v321
        %v1156 = vpop.f32.mrf.mxu0
        %v1157 = vadd.f32 %v428, %v1156
        %v1158 = vpop.f32.mrf.mxu0
        %v1159 = vadd.f32 %v432, %v1158
        %1160 = vmatprep.mubr.f32.mxu0 0.0
        %1161 = vmatmul.mubr.f32.gmra.mxu0 %v322
        %v1162 = vpop.f32.mrf.mxu0
        %v1163 = vadd.f32 %v428, %v1162
        %v1164 = vpop.f32.mrf.mxu0
        %v1165 = vadd.f32 %v432, %v1164
        %1166 = vmatprep.mubr.f32.mxu0 0.0
        %1167 = vmatmul.mubr.f32.gmra.mxu0 %v323
        %v1168 = vpop.f32.mrf.mxu0
        %v1169 = vadd.f32 %v428, %v1168
        %v1170 = vpop.f32.mrf.mxu0
        %v1171 = vadd.f32 %v432, %v1170
        %1172 = vmatprep.mubr.f32.mxu0 0.0
        %1173 = vmatmul.mubr.f32.gmra.mxu0 %v324
        %v1174 = vpop.f32.mrf.mxu0
        %v1175 = vadd.f32 %v428, %v1174
        %v1176 = vpop.f32.mrf.mxu0
        %v1177 = vadd.f32 %v432, %v1176
        %1178 = vmatprep.mubr.f32.mxu0 0.0
        %1179 = vmatmul.mubr.f32.gmra.mxu0 %v325
        %v1180 = vpop.f32.mrf.mxu0
        %v1181 = vadd.f32 %v428, %v1180
        %v1182 = vpop.f32.mrf.mxu0
        %v1183 = vadd.f32 %v432, %v1182
        %1184 = vmatprep.mubr.f32.mxu0 0.0
        %1185 = vmatmul.mubr.f32.gmra.mxu0 %v326
        %v1186 = vpop.f32.mrf.mxu0
        %v1187 = vadd.f32 %v428, %v1186
        %v1188 = vpop.f32.mrf.mxu0
        %v1189 = vadd.f32 %v432, %v1188
        %1190 = vmatprep.mubr.f32.mxu0 0.0
        %1191 = vmatmul.mubr.f32.gmra.mxu0 %v327
        %v1192 = vpop.f32.mrf.mxu0
        %v1193 = vadd.f32 %v428, %v1192
        %v1194 = vpop.f32.mrf.mxu0
        %v1195 = vadd.f32 %v432, %v1194
        %1196 = vmatprep.mubr.f32.mxu0 0.0
        %1197 = vmatmul.mubr.f32.gmra.mxu0 %v328
        %v1198 = vpop.f32.mrf.mxu0
        %v1199 = vadd.f32 %v428, %v1198
        %v1200 = vpop.f32.mrf.mxu0
        %v1201 = vadd.f32 %v432, %v1200
        %1202 = vmatprep.mubr.f32.mxu0 0.0
        %1203 = vmatmul.mubr.f32.gmra.mxu0 %v329
        %v1204 = vpop.f32.mrf.mxu0
        %v1205 = vadd.f32 %v428, %v1204
        %v1206 = vpop.f32.mrf.mxu0
        %v1207 = vadd.f32 %v432, %v1206
        %1208 = vmatprep.mubr.f32.mxu0 0.0
        %1209 = vmatmul.mubr.f32.gmra.mxu0 %v330
        %v1210 = vpop.f32.mrf.mxu0
        %v1211 = vadd.f32 %v428, %v1210
        %v1212 = vpop.f32.mrf.mxu0
        %v1213 = vadd.f32 %v432, %v1212
        %1214 = vmatprep.mubr.f32.mxu0 0.0
        %1215 = vmatmul.mubr.f32.gmra.mxu0 %v331
        %v1216 = vpop.f32.mrf.mxu0
        %v1217 = vadd.f32 %v428, %v1216
        %v1218 = vpop.f32.mrf.mxu0
        %v1219 = vadd.f32 %v432, %v1218
        %1220 = vmatprep.mubr.f32.mxu0 0.0
        %1221 = vmatmul.mubr.f32.gmra.mxu0 %v332
        %v1222 = vpop.f32.mrf.mxu0
        %v1223 = vadd.f32 %v428, %v1222
        %v1224 = vpop.f32.mrf.mxu0
        %v1225 = vadd.f32 %v432, %v1224
        %1226 = vmatprep.mubr.f32.mxu0 0.0
        %1227 = vmatmul.mubr.f32.gmra.mxu0 %v333
        %v1228 = vpop.f32.mrf.mxu0
        %v1229 = vadd.f32 %v428, %v1228
        %v1230 = vpop.f32.mrf.mxu0
        %v1231 = vadd.f32 %v432, %v1230
        %1232 = vmatprep.mubr.f32.mxu0 0.0
        %1233 = vmatmul.mubr.f32.gmra.mxu0 %v334
        %v1234 = vpop.f32.mrf.mxu0
        %v1235 = vadd.f32 %v428, %v1234
        %v1236 = vpop.f32.mrf.mxu0
        %v1237 = vadd.f32 %v432, %v1236
        %1238 = vmatprep.mubr.f32.mxu0 0.0
        %1239 = vmatmul.mubr.f32.gmra.mxu0 %v335
        %v1240 = vpop.f32.mrf.mxu0
        %v1241 = vadd.f32 %v428, %v1240
        %v1242 = vpop.f32.mrf.mxu0
        %v1243 = vadd.f32 %v432, %v1242
        %1244 = vmatprep.mubr.f32.mxu0 0.0
        %1245 = vmatmul.mubr.f32.gmra.mxu0 %v336
        %v1246 = vpop.f32.mrf.mxu0
        %v1247 = vadd.f32 %v428, %v1246
        %v1248 = vpop.f32.mrf.mxu0
        %v1249 = vadd.f32 %v432, %v1248
        %1250 = vmatprep.mubr.f32.mxu0 0.0
        %1251 = vmatmul.mubr.f32.gmra.mxu0 %v337
        %v1252 = vpop.f32.mrf.mxu0
        %v1253 = vadd.f32 %v428, %v1252
        %v1254 = vpop.f32.mrf.mxu0
        %v1255 = vadd.f32 %v432, %v1254
        %1256 = vmatprep.mubr.f32.mxu0 0.0
        %1257 = vmatmul.mubr.f32.gmra.mxu0 %v338
        %v1258 = vpop.f32.mrf.mxu0
        %v1259 = vadd.f32 %v428, %v1258
        %v1260 = vpop.f32.mrf.mxu0
        %v1261 = vadd.f32 %v432, %v1260
        %1262 = vmatprep.mubr.f32.mxu0 0.0
        %1263 = vmatmul.mubr.f32.gmra.mxu0 %v339
        %v1264 = vpop.f32.mrf.mxu0
        %v1265 = vadd.f32 %v428, %v1264
        %v1266 = vpop.f32.mrf.mxu0
        %v1267 = vadd.f32 %v432, %v1266
        %1268 = vmatprep.mubr.f32.mxu0 0.0
        %1269 = vmatmul.mubr.f32.gmra.mxu0 %v340
        %v1270 = vpop.f32.mrf.mxu0
        %v1271 = vadd.f32 %v428, %v1270
        %v1272 = vpop.f32.mrf.mxu0
        %v1273 = vadd.f32 %v432, %v1272
        %1274 = vmatprep.mubr.f32.mxu0 0.0
        %1275 = vmatmul.mubr.f32.gmra.mxu0 %v341
        %v1276 = vpop.f32.mrf.mxu0
        %v1277 = vadd.f32 %v428, %v1276
        %v1278 = vpop.f32.mrf.mxu0
        %v1279 = vadd.f32 %v432, %v1278
        %1280 = vmatprep.mubr.f32.mxu0 0.0
        %1281 = vmatmul.mubr.f32.gmra.mxu0 %v342
        %v1282 = vpop.f32.mrf.mxu0
        %v1283 = vadd.f32 %v428, %v1282
        %v1284 = vpop.f32.mrf.mxu0
        %v1285 = vadd.f32 %v432, %v1284
        %1286 = vmatprep.mubr.f32.mxu0 0.0
        %1287 = vmatmul.mubr.f32.gmra.mxu0 %v343
        %v1288 = vpop.f32.mrf.mxu0
        %v1289 = vadd.f32 %v428, %v1288
        %v1290 = vpop.f32.mrf.mxu0
        %v1291 = vadd.f32 %v432, %v1290
        %1292 = vmatprep.mubr.f32.mxu0 0.0
        %1293 = vmatmul.mubr.f32.gmra.mxu0 %v344
        %v1294 = vpop.f32.mrf.mxu0
        %v1295 = vadd.f32 %v428, %v1294
        %v1296 = vpop.f32.mrf.mxu0
        %v1297 = vadd.f32 %v432, %v1296
        %1298 = vmatprep.mubr.f32.mxu0 0.0
        %1299 = vmatmul.mubr.f32.gmra.mxu0 %v345
        %v1300 = vpop.f32.mrf.mxu0
        %v1301 = vadd.f32 %v428, %v1300
        %v1302 = vpop.f32.mrf.mxu0
        %v1303 = vadd.f32 %v432, %v1302
        %1304 = vmatprep.mubr.f32.mxu0 0.0
        %1305 = vmatmul.mubr.f32.gmra.mxu0 %v346
        %v1306 = vpop.f32.mrf.mxu0
        %v1307 = vadd.f32 %v428, %v1306
        %v1308 = vpop.f32.mrf.mxu0
        %v1309 = vadd.f32 %v432, %v1308
        %1310 = vmatprep.mubr.f32.mxu0 0.0
        %1311 = vmatmul.mubr.f32.gmra.mxu0 %v347
        %v1312 = vpop.f32.mrf.mxu0
        %v1313 = vadd.f32 %v428, %v1312
        %v1314 = vpop.f32.mrf.mxu0
        %v1315 = vadd.f32 %v432, %v1314
        %1316 = vmatprep.mubr.f32.mxu0 0.0
        %1317 = vmatmul.mubr.f32.gmra.mxu0 %v348
        %v1318 = vpop.f32.mrf.mxu0
        %v1319 = vadd.f32 %v428, %v1318
        %v1320 = vpop.f32.mrf.mxu0
        %v1321 = vadd.f32 %v432, %v1320
        %1322 = vmatprep.mubr.f32.mxu0 0.0
        %1323 = vmatmul.mubr.f32.gmra.mxu0 %v349
        %v1324 = vpop.f32.mrf.mxu0
        %v1325 = vadd.f32 %v428, %v1324
        %v1326 = vpop.f32.mrf.mxu0
        %v1327 = vadd.f32 %v432, %v1326
        %1328 = vmatprep.mubr.f32.mxu0 0.0
        %1329 = vmatmul.mubr.f32.gmra.mxu0 %v350
        %v1330 = vpop.f32.mrf.mxu0
        %v1331 = vadd.f32 %v428, %v1330
        %v1332 = vpop.f32.mrf.mxu0
        %v1333 = vadd.f32 %v432, %v1332
        %1334 = vdwg.mxu0
        %v1335 = vmul.f32 %v504, %v504
        %v1336 = vmul.f32 %v506, %v506
        %v1337 = vmul.f32 %v953, %v953
        %v1338 = vmul.f32 %v955, %v955
        %v1339 = vmul.f32 %v510, %v510
        %v1340 = vmul.f32 %v512, %v512
        %v1341 = vmul.f32 %v959, %v959
        %v1342 = vmul.f32 %v961, %v961
        %v1343 = vmul.f32 %v516, %v516
        %v1344 = vmul.f32 %v518, %v518
        %v1345 = vmul.f32 %v965, %v965
        %v1346 = vmul.f32 %v967, %v967
        %v1347 = vmul.f32 %v522, %v522
        %v1348 = vmul.f32 %v524, %v524
        %v1349 = vmul.f32 %v971, %v971
        %v1350 = vmul.f32 %v973, %v973
        %v1351 = vmul.f32 %v528, %v528
        %v1352 = vmul.f32 %v530, %v530
        %v1353 = vmul.f32 %v977, %v977
        %v1354 = vmul.f32 %v979, %v979
        %v1355 = vmul.f32 %v534, %v534
        %v1356 = vmul.f32 %v536, %v536
        %v1357 = vmul.f32 %v983, %v983
        %v1358 = vmul.f32 %v985, %v985
        %v1359 = vmul.f32 %v540, %v540
        %v1360 = vmul.f32 %v542, %v542
        %v1361 = vmul.f32 %v989, %v989
        %v1362 = vmul.f32 %v991, %v991
        %v1363 = vmul.f32 %v546, %v546
        %v1364 = vmul.f32 %v548, %v548
        %v1365 = vmul.f32 %v995, %v995
        %v1366 = vmul.f32 %v997, %v997
        %v1367 = vmul.f32 %v552, %v552
        %v1368 = vmul.f32 %v554, %v554
        %v1369 = vmul.f32 %v1001, %v1001
        %v1370 = vmul.f32 %v1003, %v1003
        %v1371 = vmul.f32 %v558, %v558
        %v1372 = vmul.f32 %v560, %v560
        %v1373 = vmul.f32 %v1007, %v1007
        %v1374 = vmul.f32 %v1009, %v1009
        %v1375 = vmul.f32 %v564, %v564
        %v1376 = vmul.f32 %v566, %v566
        %v1377 = vmul.f32 %v1013, %v1013
        %v1378 = vmul.f32 %v1015, %v1015
        %v1379 = vmul.f32 %v570, %v570
        %v1380 = vmul.f32 %v572, %v572
        %v1381 = vmul.f32 %v1019, %v1019
        %v1382 = vmul.f32 %v1021, %v1021
        %v1383 = vmul.f32 %v576, %v576
        %v1384 = vmul.f32 %v578, %v578
        %v1385 = vmul.f32 %v1025, %v1025
        %v1386 = vmul.f32 %v1027, %v1027
        %v1387 = vmul.f32 %v582, %v582
        %v1388 = vmul.f32 %v584, %v584
        %v1389 = vmul.f32 %v1031, %v1031
        %v1390 = vmul.f32 %v1033, %v1033
        %v1391 = vmul.f32 %v588, %v588
        %v1392 = vmul.f32 %v590, %v590
        %v1393 = vmul.f32 %v1037, %v1037
        %v1394 = vmul.f32 %v1039, %v1039
        %v1395 = vmul.f32 %v594, %v594
        %v1396 = vmul.f32 %v596, %v596
        %v1397 = vmul.f32 %v1043, %v1043
        %v1398 = vmul.f32 %v1045, %v1045
        %v1399 = vmul.f32 %v600, %v600
        %v1400 = vmul.f32 %v602, %v602
        %v1401 = vmul.f32 %v1049, %v1049
        %v1402 = vmul.f32 %v1051, %v1051
        %v1403 = vmul.f32 %v606, %v606
        %v1404 = vmul.f32 %v608, %v608
        %v1405 = vmul.f32 %v1055, %v1055
        %v1406 = vmul.f32 %v1057, %v1057
        %v1407 = vmul.f32 %v612, %v612
        %v1408 = vmul.f32 %v614, %v614
        %v1409 = vmul.f32 %v1061, %v1061
        %v1410 = vmul.f32 %v1063, %v1063
        %v1411 = vmul.f32 %v618, %v618
        %v1412 = vmul.f32 %v620, %v620
        %v1413 = vmul.f32 %v1067, %v1067
        %v1414 = vmul.f32 %v1069, %v1069
        %v1415 = vmul.f32 %v624, %v624
        %v1416 = vmul.f32 %v626, %v626
        %v1417 = vmul.f32 %v1073, %v1073
        %v1418 = vmul.f32 %v1075, %v1075
        %v1419 = vmul.f32 %v630, %v630
        %v1420 = vmul.f32 %v632, %v632
        %v1421 = vmul.f32 %v1079, %v1079
        %v1422 = vmul.f32 %v1081, %v1081
        %v1423 = vmul.f32 %v636, %v636
        %v1424 = vmul.f32 %v638, %v638
        %v1425 = vmul.f32 %v1085, %v1085
        %v1426 = vmul.f32 %v1087, %v1087
        %v1427 = vmul.f32 %v642, %v642
        %v1428 = vmul.f32 %v644, %v644
        %v1429 = vmul.f32 %v1091, %v1091
        %v1430 = vmul.f32 %v1093, %v1093
        %v1431 = vmul.f32 %v648, %v648
        %v1432 = vmul.f32 %v650, %v650
        %v1433 = vmul.f32 %v1097, %v1097
        %v1434 = vmul.f32 %v1099, %v1099
        %v1435 = vmul.f32 %v654, %v654
        %v1436 = vmul.f32 %v656, %v656
        %v1437 = vmul.f32 %v1103, %v1103
        %v1438 = vmul.f32 %v1105, %v1105
        %v1439 = vmul.f32 %v660, %v660
        %v1440 = vmul.f32 %v662, %v662
        %v1441 = vmul.f32 %v1109, %v1109
        %v1442 = vmul.f32 %v1111, %v1111
        %v1443 = vmul.f32 %v666, %v666
        %v1444 = vmul.f32 %v668, %v668
        %v1445 = vmul.f32 %v1115, %v1115
        %v1446 = vmul.f32 %v1117, %v1117
        %v1447 = vmul.f32 %v672, %v672
        %v1448 = vmul.f32 %v674, %v674
        %v1449 = vmul.f32 %v1121, %v1121
        %v1450 = vmul.f32 %v1123, %v1123
        %v1451 = vmul.f32 %v678, %v678
        %v1452 = vmul.f32 %v680, %v680
        %v1453 = vmul.f32 %v1127, %v1127
        %v1454 = vmul.f32 %v1129, %v1129
        %v1455 = vmul.f32 %v684, %v684
        %v1456 = vmul.f32 %v686, %v686
        %v1457 = vmul.f32 %v1133, %v1133
        %v1458 = vmul.f32 %v1135, %v1135
        %v1459 = vmul.f32 %v690, %v690
        %v1460 = vmul.f32 %v692, %v692
        %v1461 = vmul.f32 %v1139, %v1139
        %v1462 = vmul.f32 %v1141, %v1141
        %v1463 = vmul.f32 %v696, %v696
        %v1464 = vmul.f32 %v698, %v698
        %v1465 = vmul.f32 %v1145, %v1145
        %v1466 = vmul.f32 %v1147, %v1147
        %v1467 = vmul.f32 %v702, %v702
        %v1468 = vmul.f32 %v704, %v704
        %v1469 = vmul.f32 %v1151, %v1151
        %v1470 = vmul.f32 %v1153, %v1153
        %v1471 = vmul.f32 %v708, %v708
        %v1472 = vmul.f32 %v710, %v710
        %v1473 = vmul.f32 %v1157, %v1157
        %v1474 = vmul.f32 %v1159, %v1159
        %v1475 = vmul.f32 %v714, %v714
        %v1476 = vmul.f32 %v716, %v716
        %v1477 = vmul.f32 %v1163, %v1163
        %v1478 = vmul.f32 %v1165, %v1165
        %v1479 = vmul.f32 %v720, %v720
        %v1480 = vmul.f32 %v722, %v722
        %v1481 = vmul.f32 %v1169, %v1169
        %v1482 = vmul.f32 %v1171, %v1171
        %v1483 = vmul.f32 %v726, %v726
        %v1484 = vmul.f32 %v728, %v728
        %v1485 = vmul.f32 %v1175, %v1175
        %v1486 = vmul.f32 %v1177, %v1177
        %v1487 = vmul.f32 %v732, %v732
        %v1488 = vmul.f32 %v734, %v734
        %v1489 = vmul.f32 %v1181, %v1181
        %v1490 = vmul.f32 %v1183, %v1183
        %v1491 = vmul.f32 %v738, %v738
        %v1492 = vmul.f32 %v740, %v740
        %v1493 = vmul.f32 %v1187, %v1187
        %v1494 = vmul.f32 %v1189, %v1189
        %v1495 = vmul.f32 %v744, %v744
        %v1496 = vmul.f32 %v746, %v746
        %v1497 = vmul.f32 %v1193, %v1193
        %v1498 = vmul.f32 %v1195, %v1195
        %v1499 = vmul.f32 %v750, %v750
        %v1500 = vmul.f32 %v752, %v752
        %v1501 = vmul.f32 %v1199, %v1199
        %v1502 = vmul.f32 %v1201, %v1201
        %v1503 = vmul.f32 %v756, %v756
        %v1504 = vmul.f32 %v758, %v758
        %v1505 = vmul.f32 %v1205, %v1205
        %v1506 = vmul.f32 %v1207, %v1207
        %v1507 = vmul.f32 %v762, %v762
        %v1508 = vmul.f32 %v764, %v764
        %v1509 = vmul.f32 %v1211, %v1211
        %v1510 = vmul.f32 %v1213, %v1213
        %v1511 = vmul.f32 %v768, %v768
        %v1512 = vmul.f32 %v770, %v770
        %v1513 = vmul.f32 %v1217, %v1217
        %v1514 = vmul.f32 %v1219, %v1219
        %v1515 = vmul.f32 %v774, %v774
        %v1516 = vmul.f32 %v776, %v776
        %v1517 = vmul.f32 %v1223, %v1223
        %v1518 = vmul.f32 %v1225, %v1225
        %v1519 = vmul.f32 %v780, %v780
        %v1520 = vmul.f32 %v782, %v782
        %v1521 = vmul.f32 %v1229, %v1229
        %v1522 = vmul.f32 %v1231, %v1231
        %v1523 = vmul.f32 %v786, %v786
        %v1524 = vmul.f32 %v788, %v788
        %v1525 = vmul.f32 %v1235, %v1235
        %v1526 = vmul.f32 %v1237, %v1237
        %v1527 = vmul.f32 %v792, %v792
        %v1528 = vmul.f32 %v794, %v794
        %v1529 = vmul.f32 %v1241, %v1241
        %v1530 = vmul.f32 %v1243, %v1243
        %v1531 = vmul.f32 %v798, %v798
        %v1532 = vmul.f32 %v800, %v800
        %v1533 = vmul.f32 %v1247, %v1247
        %v1534 = vmul.f32 %v1249, %v1249
        %v1535 = vmul.f32 %v804, %v804
        %v1536 = vmul.f32 %v806, %v806
        %v1537 = vmul.f32 %v1253, %v1253
        %v1538 = vmul.f32 %v1255, %v1255
        %v1539 = vmul.f32 %v810, %v810
        %v1540 = vmul.f32 %v812, %v812
        %v1541 = vmul.f32 %v1259, %v1259
        %v1542 = vmul.f32 %v1261, %v1261
        %v1543 = vmul.f32 %v816, %v816
        %v1544 = vmul.f32 %v818, %v818
        %v1545 = vmul.f32 %v1265, %v1265
        %v1546 = vmul.f32 %v1267, %v1267
        %v1547 = vmul.f32 %v822, %v822
        %v1548 = vmul.f32 %v824, %v824
        %v1549 = vmul.f32 %v1271, %v1271
        %v1550 = vmul.f32 %v1273, %v1273
        %v1551 = vmul.f32 %v828, %v828
        %v1552 = vmul.f32 %v830, %v830
        %v1553 = vmul.f32 %v1277, %v1277
        %v1554 = vmul.f32 %v1279, %v1279
        %v1555 = vmul.f32 %v834, %v834
        %v1556 = vmul.f32 %v836, %v836
        %v1557 = vmul.f32 %v1283, %v1283
        %v1558 = vmul.f32 %v1285, %v1285
        %v1559 = vmul.f32 %v840, %v840
        %v1560 = vmul.f32 %v842, %v842
        %v1561 = vmul.f32 %v1289, %v1289
        %v1562 = vmul.f32 %v1291, %v1291
        %v1563 = vmul.f32 %v846, %v846
        %v1564 = vmul.f32 %v848, %v848
        %v1565 = vmul.f32 %v1295, %v1295
        %v1566 = vmul.f32 %v1297, %v1297
        %v1567 = vmul.f32 %v852, %v852
        %v1568 = vmul.f32 %v854, %v854
        %v1569 = vmul.f32 %v1301, %v1301
        %v1570 = vmul.f32 %v1303, %v1303
        %v1571 = vmul.f32 %v858, %v858
        %v1572 = vmul.f32 %v860, %v860
        %v1573 = vmul.f32 %v1307, %v1307
        %v1574 = vmul.f32 %v1309, %v1309
        %v1575 = vmul.f32 %v864, %v864
        %v1576 = vmul.f32 %v866, %v866
        %v1577 = vmul.f32 %v1313, %v1313
        %v1578 = vmul.f32 %v1315, %v1315
        %v1579 = vmul.f32 %v870, %v870
        %v1580 = vmul.f32 %v872, %v872
        %v1581 = vmul.f32 %v1319, %v1319
        %v1582 = vmul.f32 %v1321, %v1321
        %v1583 = vmul.f32 %v876, %v876
        %v1584 = vmul.f32 %v878, %v878
        %v1585 = vmul.f32 %v1325, %v1325
        %v1586 = vmul.f32 %v1327, %v1327
        %v1587 = vmul.f32 %v882, %v882
        %v1588 = vmul.f32 %v884, %v884
        %v1589 = vmul.f32 %v1331, %v1331
        %v1590 = vmul.f32 %v1333, %v1333
        %v1591 = vmul.f32 %v1335, 0.035677407
        %v1592 = vmul.f32 %v1336, 0.035677407
        %v1593 = vmul.f32 %v1337, 0.035677407
        %v1594 = vmul.f32 %v1338, 0.035677407
        %v1595 = vmul.f32 %v1339, 0.035677407
        %v1596 = vmul.f32 %v1340, 0.035677407
        %v1597 = vmul.f32 %v1341, 0.035677407
        %v1598 = vmul.f32 %v1342, 0.035677407
        %v1599 = vmul.f32 %v1343, 0.035677407
        %v1600 = vmul.f32 %v1344, 0.035677407
        %v1601 = vmul.f32 %v1345, 0.035677407
        %v1602 = vmul.f32 %v1346, 0.035677407
        %v1603 = vmul.f32 %v1347, 0.035677407
        %v1604 = vmul.f32 %v1348, 0.035677407
        %v1605 = vmul.f32 %v1349, 0.035677407
        %v1606 = vmul.f32 %v1350, 0.035677407
        %v1607 = vmul.f32 %v1351, 0.035677407
        %v1608 = vmul.f32 %v1352, 0.035677407
        %v1609 = vmul.f32 %v1353, 0.035677407
        %v1610 = vmul.f32 %v1354, 0.035677407
        %v1611 = vmul.f32 %v1355, 0.035677407
        %v1612 = vmul.f32 %v1356, 0.035677407
        %v1613 = vmul.f32 %v1357, 0.035677407
        %v1614 = vmul.f32 %v1358, 0.035677407
        %v1615 = vmul.f32 %v1359, 0.035677407
        %v1616 = vmul.f32 %v1360, 0.035677407
        %v1617 = vmul.f32 %v1361, 0.035677407
        %v1618 = vmul.f32 %v1362, 0.035677407
        %v1619 = vmul.f32 %v1363, 0.035677407
        %v1620 = vmul.f32 %v1364, 0.035677407
        %v1621 = vmul.f32 %v1365, 0.035677407
        %v1622 = vmul.f32 %v1366, 0.035677407
        %v1623 = vmul.f32 %v1367, 0.035677407
        %v1624 = vmul.f32 %v1368, 0.035677407
        %v1625 = vmul.f32 %v1369, 0.035677407
        %v1626 = vmul.f32 %v1370, 0.035677407
        %v1627 = vmul.f32 %v1371, 0.035677407
        %v1628 = vmul.f32 %v1372, 0.035677407
        %v1629 = vmul.f32 %v1373, 0.035677407
        %v1630 = vmul.f32 %v1374, 0.035677407
        %v1631 = vmul.f32 %v1375, 0.035677407
        %v1632 = vmul.f32 %v1376, 0.035677407
        %v1633 = vmul.f32 %v1377, 0.035677407
        %v1634 = vmul.f32 %v1378, 0.035677407
        %v1635 = vmul.f32 %v1379, 0.035677407
        %v1636 = vmul.f32 %v1380, 0.035677407
        %v1637 = vmul.f32 %v1381, 0.035677407
        %v1638 = vmul.f32 %v1382, 0.035677407
        %v1639 = vmul.f32 %v1383, 0.035677407
        %v1640 = vmul.f32 %v1384, 0.035677407
        %v1641 = vmul.f32 %v1385, 0.035677407
        %v1642 = vmul.f32 %v1386, 0.035677407
        %v1643 = vmul.f32 %v1387, 0.035677407
        %v1644 = vmul.f32 %v1388, 0.035677407
        %v1645 = vmul.f32 %v1389, 0.035677407
        %v1646 = vmul.f32 %v1390, 0.035677407
        %v1647 = vmul.f32 %v1391, 0.035677407
        %v1648 = vmul.f32 %v1392, 0.035677407
        %v1649 = vmul.f32 %v1393, 0.035677407
        %v1650 = vmul.f32 %v1394, 0.035677407
        %v1651 = vmul.f32 %v1395, 0.035677407
        %v1652 = vmul.f32 %v1396, 0.035677407
        %v1653 = vmul.f32 %v1397, 0.035677407
        %v1654 = vmul.f32 %v1398, 0.035677407
        %v1655 = vmul.f32 %v1399, 0.035677407
        %v1656 = vmul.f32 %v1400, 0.035677407
        %v1657 = vmul.f32 %v1401, 0.035677407
        %v1658 = vmul.f32 %v1402, 0.035677407
        %v1659 = vmul.f32 %v1403, 0.035677407
        %v1660 = vmul.f32 %v1404, 0.035677407
        %v1661 = vmul.f32 %v1405, 0.035677407
        %v1662 = vmul.f32 %v1406, 0.035677407
        %v1663 = vmul.f32 %v1407, 0.035677407
        %v1664 = vmul.f32 %v1408, 0.035677407
        %v1665 = vmul.f32 %v1409, 0.035677407
        %v1666 = vmul.f32 %v1410, 0.035677407
        %v1667 = vmul.f32 %v1411, 0.035677407
        %v1668 = vmul.f32 %v1412, 0.035677407
        %v1669 = vmul.f32 %v1413, 0.035677407
        %v1670 = vmul.f32 %v1414, 0.035677407
        %v1671 = vmul.f32 %v1415, 0.035677407
        %v1672 = vmul.f32 %v1416, 0.035677407
        %v1673 = vmul.f32 %v1417, 0.035677407
        %v1674 = vmul.f32 %v1418, 0.035677407
        %v1675 = vmul.f32 %v1419, 0.035677407
        %v1676 = vmul.f32 %v1420, 0.035677407
        %v1677 = vmul.f32 %v1421, 0.035677407
        %v1678 = vmul.f32 %v1422, 0.035677407
        %v1679 = vmul.f32 %v1423, 0.035677407
        %v1680 = vmul.f32 %v1424, 0.035677407
        %v1681 = vmul.f32 %v1425, 0.035677407
        %v1682 = vmul.f32 %v1426, 0.035677407
        %v1683 = vmul.f32 %v1427, 0.035677407
        %v1684 = vmul.f32 %v1428, 0.035677407
        %v1685 = vmul.f32 %v1429, 0.035677407
        %v1686 = vmul.f32 %v1430, 0.035677407
        %v1687 = vmul.f32 %v1431, 0.035677407
        %v1688 = vmul.f32 %v1432, 0.035677407
        %v1689 = vmul.f32 %v1433, 0.035677407
        %v1690 = vmul.f32 %v1434, 0.035677407
        %v1691 = vmul.f32 %v1435, 0.035677407
        %v1692 = vmul.f32 %v1436, 0.035677407
        %v1693 = vmul.f32 %v1437, 0.035677407
        %v1694 = vmul.f32 %v1438, 0.035677407
        %v1695 = vmul.f32 %v1439, 0.035677407
        %v1696 = vmul.f32 %v1440, 0.035677407
        %v1697 = vmul.f32 %v1441, 0.035677407
        %v1698 = vmul.f32 %v1442, 0.035677407
        %v1699 = vmul.f32 %v1443, 0.035677407
        %v1700 = vmul.f32 %v1444, 0.035677407
        %v1701 = vmul.f32 %v1445, 0.035677407
        %v1702 = vmul.f32 %v1446, 0.035677407
        %v1703 = vmul.f32 %v1447, 0.035677407
        %v1704 = vmul.f32 %v1448, 0.035677407
        %v1705 = vmul.f32 %v1449, 0.035677407
        %v1706 = vmul.f32 %v1450, 0.035677407
        %v1707 = vmul.f32 %v1451, 0.035677407
        %v1708 = vmul.f32 %v1452, 0.035677407
        %v1709 = vmul.f32 %v1453, 0.035677407
        %v1710 = vmul.f32 %v1454, 0.035677407
        %v1711 = vmul.f32 %v1455, 0.035677407
        %v1712 = vmul.f32 %v1456, 0.035677407
        %v1713 = vmul.f32 %v1457, 0.035677407
        %v1714 = vmul.f32 %v1458, 0.035677407
        %v1715 = vmul.f32 %v1459, 0.035677407
        %v1716 = vmul.f32 %v1460, 0.035677407
        %v1717 = vmul.f32 %v1461, 0.035677407
        %v1718 = vmul.f32 %v1462, 0.035677407
        %v1719 = vmul.f32 %v1463, 0.035677407
        %v1720 = vmul.f32 %v1464, 0.035677407
        %v1721 = vmul.f32 %v1465, 0.035677407
        %v1722 = vmul.f32 %v1466, 0.035677407
        %v1723 = vmul.f32 %v1467, 0.035677407
        %v1724 = vmul.f32 %v1468, 0.035677407
        %v1725 = vmul.f32 %v1469, 0.035677407
        %v1726 = vmul.f32 %v1470, 0.035677407
        %v1727 = vmul.f32 %v1471, 0.035677407
        %v1728 = vmul.f32 %v1472, 0.035677407
        %v1729 = vmul.f32 %v1473, 0.035677407
        %v1730 = vmul.f32 %v1474, 0.035677407
        %v1731 = vmul.f32 %v1475, 0.035677407
        %v1732 = vmul.f32 %v1476, 0.035677407
        %v1733 = vmul.f32 %v1477, 0.035677407
        %v1734 = vmul.f32 %v1478, 0.035677407
        %v1735 = vmul.f32 %v1479, 0.035677407
        %v1736 = vmul.f32 %v1480, 0.035677407
        %v1737 = vmul.f32 %v1481, 0.035677407
        %v1738 = vmul.f32 %v1482, 0.035677407
        %v1739 = vmul.f32 %v1483, 0.035677407
        %v1740 = vmul.f32 %v1484, 0.035677407
        %v1741 = vmul.f32 %v1485, 0.035677407
        %v1742 = vmul.f32 %v1486, 0.035677407
        %v1743 = vmul.f32 %v1487, 0.035677407
        %v1744 = vmul.f32 %v1488, 0.035677407
        %v1745 = vmul.f32 %v1489, 0.035677407
        %v1746 = vmul.f32 %v1490, 0.035677407
        %v1747 = vmul.f32 %v1491, 0.035677407
        %v1748 = vmul.f32 %v1492, 0.035677407
        %v1749 = vmul.f32 %v1493, 0.035677407
        %v1750 = vmul.f32 %v1494, 0.035677407
        %v1751 = vmul.f32 %v1495, 0.035677407
        %v1752 = vmul.f32 %v1496, 0.035677407
        %v1753 = vmul.f32 %v1497, 0.035677407
        %v1754 = vmul.f32 %v1498, 0.035677407
        %v1755 = vmul.f32 %v1499, 0.035677407
        %v1756 = vmul.f32 %v1500, 0.035677407
        %v1757 = vmul.f32 %v1501, 0.035677407
        %v1758 = vmul.f32 %v1502, 0.035677407
        %v1759 = vmul.f32 %v1503, 0.035677407
        %v1760 = vmul.f32 %v1504, 0.035677407
        %v1761 = vmul.f32 %v1505, 0.035677407
        %v1762 = vmul.f32 %v1506, 0.035677407
        %v1763 = vmul.f32 %v1507, 0.035677407
        %v1764 = vmul.f32 %v1508, 0.035677407
        %v1765 = vmul.f32 %v1509, 0.035677407
        %v1766 = vmul.f32 %v1510, 0.035677407
        %v1767 = vmul.f32 %v1511, 0.035677407
        %v1768 = vmul.f32 %v1512, 0.035677407
        %v1769 = vmul.f32 %v1513, 0.035677407
        %v1770 = vmul.f32 %v1514, 0.035677407
        %v1771 = vmul.f32 %v1515, 0.035677407
        %v1772 = vmul.f32 %v1516, 0.035677407
        %v1773 = vmul.f32 %v1517, 0.035677407
        %v1774 = vmul.f32 %v1518, 0.035677407
        %v1775 = vmul.f32 %v1519, 0.035677407
        %v1776 = vmul.f32 %v1520, 0.035677407
        %v1777 = vmul.f32 %v1521, 0.035677407
        %v1778 = vmul.f32 %v1522, 0.035677407
        %v1779 = vmul.f32 %v1523, 0.035677407
        %v1780 = vmul.f32 %v1524, 0.035677407
        %v1781 = vmul.f32 %v1525, 0.035677407
        %v1782 = vmul.f32 %v1526, 0.035677407
        %v1783 = vmul.f32 %v1527, 0.035677407
        %v1784 = vmul.f32 %v1528, 0.035677407
        %v1785 = vmul.f32 %v1529, 0.035677407
        %v1786 = vmul.f32 %v1530, 0.035677407
        %v1787 = vmul.f32 %v1531, 0.035677407
        %v1788 = vmul.f32 %v1532, 0.035677407
        %v1789 = vmul.f32 %v1533, 0.035677407
        %v1790 = vmul.f32 %v1534, 0.035677407
        %v1791 = vmul.f32 %v1535, 0.035677407
        %v1792 = vmul.f32 %v1536, 0.035677407
        %v1793 = vmul.f32 %v1537, 0.035677407
        %v1794 = vmul.f32 %v1538, 0.035677407
        %v1795 = vmul.f32 %v1539, 0.035677407
        %v1796 = vmul.f32 %v1540, 0.035677407
        %v1797 = vmul.f32 %v1541, 0.035677407
        %v1798 = vmul.f32 %v1542, 0.035677407
        %v1799 = vmul.f32 %v1543, 0.035677407
        %v1800 = vmul.f32 %v1544, 0.035677407
        %v1801 = vmul.f32 %v1545, 0.035677407
        %v1802 = vmul.f32 %v1546, 0.035677407
        %v1803 = vmul.f32 %v1547, 0.035677407
        %v1804 = vmul.f32 %v1548, 0.035677407
        %v1805 = vmul.f32 %v1549, 0.035677407
        %v1806 = vmul.f32 %v1550, 0.035677407
        %v1807 = vmul.f32 %v1551, 0.035677407
        %v1808 = vmul.f32 %v1552, 0.035677407
        %v1809 = vmul.f32 %v1553, 0.035677407
        %v1810 = vmul.f32 %v1554, 0.035677407
        %v1811 = vmul.f32 %v1555, 0.035677407
        %v1812 = vmul.f32 %v1556, 0.035677407
        %v1813 = vmul.f32 %v1557, 0.035677407
        %v1814 = vmul.f32 %v1558, 0.035677407
        %v1815 = vmul.f32 %v1559, 0.035677407
        %v1816 = vmul.f32 %v1560, 0.035677407
        %v1817 = vmul.f32 %v1561, 0.035677407
        %v1818 = vmul.f32 %v1562, 0.035677407
        %v1819 = vmul.f32 %v1563, 0.035677407
        %v1820 = vmul.f32 %v1564, 0.035677407
        %v1821 = vmul.f32 %v1565, 0.035677407
        %v1822 = vmul.f32 %v1566, 0.035677407
        %v1823 = vmul.f32 %v1567, 0.035677407
        %v1824 = vmul.f32 %v1568, 0.035677407
        %v1825 = vmul.f32 %v1569, 0.035677407
        %v1826 = vmul.f32 %v1570, 0.035677407
        %v1827 = vmul.f32 %v1571, 0.035677407
        %v1828 = vmul.f32 %v1572, 0.035677407
        %v1829 = vmul.f32 %v1573, 0.035677407
        %v1830 = vmul.f32 %v1574, 0.035677407
        %v1831 = vmul.f32 %v1575, 0.035677407
        %v1832 = vmul.f32 %v1576, 0.035677407
        %v1833 = vmul.f32 %v1577, 0.035677407
        %v1834 = vmul.f32 %v1578, 0.035677407
        %v1835 = vmul.f32 %v1579, 0.035677407
        %v1836 = vmul.f32 %v1580, 0.035677407
        %v1837 = vmul.f32 %v1581, 0.035677407
        %v1838 = vmul.f32 %v1582, 0.035677407
        %v1839 = vmul.f32 %v1583, 0.035677407
        %v1840 = vmul.f32 %v1584, 0.035677407
        %v1841 = vmul.f32 %v1585, 0.035677407
        %v1842 = vmul.f32 %v1586, 0.035677407
        %v1843 = vmul.f32 %v1587, 0.035677407
        %v1844 = vmul.f32 %v1588, 0.035677407
        %v1845 = vmul.f32 %v1589, 0.035677407
        %v1846 = vmul.f32 %v1590, 0.035677407
        %v1847 = vadd.f32 %v1591, 0.7978846
        %v1848 = vadd.f32 %v1592, 0.7978846
        %v1849 = vadd.f32 %v1593, 0.7978846
        %v1850 = vadd.f32 %v1594, 0.7978846
        %v1851 = vadd.f32 %v1595, 0.7978846
        %v1852 = vadd.f32 %v1596, 0.7978846
        %v1853 = vadd.f32 %v1597, 0.7978846
        %v1854 = vadd.f32 %v1598, 0.7978846
        %v1855 = vadd.f32 %v1599, 0.7978846
        %v1856 = vadd.f32 %v1600, 0.7978846
        %v1857 = vadd.f32 %v1601, 0.7978846
        %v1858 = vadd.f32 %v1602, 0.7978846
        %v1859 = vadd.f32 %v1603, 0.7978846
        %v1860 = vadd.f32 %v1604, 0.7978846
        %v1861 = vadd.f32 %v1605, 0.7978846
        %v1862 = vadd.f32 %v1606, 0.7978846
        %v1863 = vadd.f32 %v1607, 0.7978846
        %v1864 = vadd.f32 %v1608, 0.7978846
        %v1865 = vadd.f32 %v1609, 0.7978846
        %v1866 = vadd.f32 %v1610, 0.7978846
        %v1867 = vadd.f32 %v1611, 0.7978846
        %v1868 = vadd.f32 %v1612, 0.7978846
        %v1869 = vadd.f32 %v1613, 0.7978846
        %v1870 = vadd.f32 %v1614, 0.7978846
        %v1871 = vadd.f32 %v1615, 0.7978846
        %v1872 = vadd.f32 %v1616, 0.7978846
        %v1873 = vadd.f32 %v1617, 0.7978846
        %v1874 = vadd.f32 %v1618, 0.7978846
        %v1875 = vadd.f32 %v1619, 0.7978846
        %v1876 = vadd.f32 %v1620, 0.7978846
        %v1877 = vadd.f32 %v1621, 0.7978846
        %v1878 = vadd.f32 %v1622, 0.7978846
        %v1879 = vadd.f32 %v1623, 0.7978846
        %v1880 = vadd.f32 %v1624, 0.7978846
        %v1881 = vadd.f32 %v1625, 0.7978846
        %v1882 = vadd.f32 %v1626, 0.7978846
        %v1883 = vadd.f32 %v1627, 0.7978846
        %v1884 = vadd.f32 %v1628, 0.7978846
        %v1885 = vadd.f32 %v1629, 0.7978846
        %v1886 = vadd.f32 %v1630, 0.7978846
        %v1887 = vadd.f32 %v1631, 0.7978846
        %v1888 = vadd.f32 %v1632, 0.7978846
        %v1889 = vadd.f32 %v1633, 0.7978846
        %v1890 = vadd.f32 %v1634, 0.7978846
        %v1891 = vadd.f32 %v1635, 0.7978846
        %v1892 = vadd.f32 %v1636, 0.7978846
        %v1893 = vadd.f32 %v1637, 0.7978846
        %v1894 = vadd.f32 %v1638, 0.7978846
        %v1895 = vadd.f32 %v1639, 0.7978846
        %v1896 = vadd.f32 %v1640, 0.7978846
        %v1897 = vadd.f32 %v1641, 0.7978846
        %v1898 = vadd.f32 %v1642, 0.7978846
        %v1899 = vadd.f32 %v1643, 0.7978846
        %v1900 = vadd.f32 %v1644, 0.7978846
        %v1901 = vadd.f32 %v1645, 0.7978846
        %v1902 = vadd.f32 %v1646, 0.7978846
        %v1903 = vadd.f32 %v1647, 0.7978846
        %v1904 = vadd.f32 %v1648, 0.7978846
        %v1905 = vadd.f32 %v1649, 0.7978846
        %v1906 = vadd.f32 %v1650, 0.7978846
        %v1907 = vadd.f32 %v1651, 0.7978846
        %v1908 = vadd.f32 %v1652, 0.7978846
        %v1909 = vadd.f32 %v1653, 0.7978846
        %v1910 = vadd.f32 %v1654, 0.7978846
        %v1911 = vadd.f32 %v1655, 0.7978846
        %v1912 = vadd.f32 %v1656, 0.7978846
        %v1913 = vadd.f32 %v1657, 0.7978846
        %v1914 = vadd.f32 %v1658, 0.7978846
        %v1915 = vadd.f32 %v1659, 0.7978846
        %v1916 = vadd.f32 %v1660, 0.7978846
        %v1917 = vadd.f32 %v1661, 0.7978846
        %v1918 = vadd.f32 %v1662, 0.7978846
        %v1919 = vadd.f32 %v1663, 0.7978846
        %v1920 = vadd.f32 %v1664, 0.7978846
        %v1921 = vadd.f32 %v1665, 0.7978846
        %v1922 = vadd.f32 %v1666, 0.7978846
        %v1923 = vadd.f32 %v1667, 0.7978846
        %v1924 = vadd.f32 %v1668, 0.7978846
        %v1925 = vadd.f32 %v1669, 0.7978846
        %v1926 = vadd.f32 %v1670, 0.7978846
        %v1927 = vadd.f32 %v1671, 0.7978846
        %v1928 = vadd.f32 %v1672, 0.7978846
        %v1929 = vadd.f32 %v1673, 0.7978846
        %v1930 = vadd.f32 %v1674, 0.7978846
        %v1931 = vadd.f32 %v1675, 0.7978846
        %v1932 = vadd.f32 %v1676, 0.7978846
        %v1933 = vadd.f32 %v1677, 0.7978846
        %v1934 = vadd.f32 %v1678, 0.7978846
        %v1935 = vadd.f32 %v1679, 0.7978846
        %v1936 = vadd.f32 %v1680, 0.7978846
        %v1937 = vadd.f32 %v1681, 0.7978846
        %v1938 = vadd.f32 %v1682, 0.7978846
        %v1939 = vadd.f32 %v1683, 0.7978846
        %v1940 = vadd.f32 %v1684, 0.7978846
        %v1941 = vadd.f32 %v1685, 0.7978846
        %v1942 = vadd.f32 %v1686, 0.7978846
        %v1943 = vadd.f32 %v1687, 0.7978846
        %v1944 = vadd.f32 %v1688, 0.7978846
        %v1945 = vadd.f32 %v1689, 0.7978846
        %v1946 = vadd.f32 %v1690, 0.7978846
        %v1947 = vadd.f32 %v1691, 0.7978846
        %v1948 = vadd.f32 %v1692, 0.7978846
        %v1949 = vadd.f32 %v1693, 0.7978846
        %v1950 = vadd.f32 %v1694, 0.7978846
        %v1951 = vadd.f32 %v1695, 0.7978846
        %v1952 = vadd.f32 %v1696, 0.7978846
        %v1953 = vadd.f32 %v1697, 0.7978846
        %v1954 = vadd.f32 %v1698, 0.7978846
        %v1955 = vadd.f32 %v1699, 0.7978846
        %v1956 = vadd.f32 %v1700, 0.7978846
        %v1957 = vadd.f32 %v1701, 0.7978846
        %v1958 = vadd.f32 %v1702, 0.7978846
        %v1959 = vadd.f32 %v1703, 0.7978846
        %v1960 = vadd.f32 %v1704, 0.7978846
        %v1961 = vadd.f32 %v1705, 0.7978846
        %v1962 = vadd.f32 %v1706, 0.7978846
        %v1963 = vadd.f32 %v1707, 0.7978846
        %v1964 = vadd.f32 %v1708, 0.7978846
        %v1965 = vadd.f32 %v1709, 0.7978846
        %v1966 = vadd.f32 %v1710, 0.7978846
        %v1967 = vadd.f32 %v1711, 0.7978846
        %v1968 = vadd.f32 %v1712, 0.7978846
        %v1969 = vadd.f32 %v1713, 0.7978846
        %v1970 = vadd.f32 %v1714, 0.7978846
        %v1971 = vadd.f32 %v1715, 0.7978846
        %v1972 = vadd.f32 %v1716, 0.7978846
        %v1973 = vadd.f32 %v1717, 0.7978846
        %v1974 = vadd.f32 %v1718, 0.7978846
        %v1975 = vadd.f32 %v1719, 0.7978846
        %v1976 = vadd.f32 %v1720, 0.7978846
        %v1977 = vadd.f32 %v1721, 0.7978846
        %v1978 = vadd.f32 %v1722, 0.7978846
        %v1979 = vadd.f32 %v1723, 0.7978846
        %v1980 = vadd.f32 %v1724, 0.7978846
        %v1981 = vadd.f32 %v1725, 0.7978846
        %v1982 = vadd.f32 %v1726, 0.7978846
        %v1983 = vadd.f32 %v1727, 0.7978846
        %v1984 = vadd.f32 %v1728, 0.7978846
        %v1985 = vadd.f32 %v1729, 0.7978846
        %v1986 = vadd.f32 %v1730, 0.7978846
        %v1987 = vadd.f32 %v1731, 0.7978846
        %v1988 = vadd.f32 %v1732, 0.7978846
        %v1989 = vadd.f32 %v1733, 0.7978846
        %v1990 = vadd.f32 %v1734, 0.7978846
        %v1991 = vadd.f32 %v1735, 0.7978846
        %v1992 = vadd.f32 %v1736, 0.7978846
        %v1993 = vadd.f32 %v1737, 0.7978846
        %v1994 = vadd.f32 %v1738, 0.7978846
        %v1995 = vadd.f32 %v1739, 0.7978846
        %v1996 = vadd.f32 %v1740, 0.7978846
        %v1997 = vadd.f32 %v1741, 0.7978846
        %v1998 = vadd.f32 %v1742, 0.7978846
        %v1999 = vadd.f32 %v1743, 0.7978846
        %v2000 = vadd.f32 %v1744, 0.7978846
        %v2001 = vadd.f32 %v1745, 0.7978846
        %v2002 = vadd.f32 %v1746, 0.7978846
        %v2003 = vadd.f32 %v1747, 0.7978846
        %v2004 = vadd.f32 %v1748, 0.7978846
        %v2005 = vadd.f32 %v1749, 0.7978846
        %v2006 = vadd.f32 %v1750, 0.7978846
        %v2007 = vadd.f32 %v1751, 0.7978846
        %v2008 = vadd.f32 %v1752, 0.7978846
        %v2009 = vadd.f32 %v1753, 0.7978846
        %v2010 = vadd.f32 %v1754, 0.7978846
        %v2011 = vadd.f32 %v1755, 0.7978846
        %v2012 = vadd.f32 %v1756, 0.7978846
        %v2013 = vadd.f32 %v1757, 0.7978846
        %v2014 = vadd.f32 %v1758, 0.7978846
        %v2015 = vadd.f32 %v1759, 0.7978846
        %v2016 = vadd.f32 %v1760, 0.7978846
        %v2017 = vadd.f32 %v1761, 0.7978846
        %v2018 = vadd.f32 %v1762, 0.7978846
        %v2019 = vadd.f32 %v1763, 0.7978846
        %v2020 = vadd.f32 %v1764, 0.7978846
        %v2021 = vadd.f32 %v1765, 0.7978846
        %v2022 = vadd.f32 %v1766, 0.7978846
        %v2023 = vadd.f32 %v1767, 0.7978846
        %v2024 = vadd.f32 %v1768, 0.7978846
        %v2025 = vadd.f32 %v1769, 0.7978846
        %v2026 = vadd.f32 %v1770, 0.7978846
        %v2027 = vadd.f32 %v1771, 0.7978846
        %v2028 = vadd.f32 %v1772, 0.7978846
        %v2029 = vadd.f32 %v1773, 0.7978846
        %v2030 = vadd.f32 %v1774, 0.7978846
        %v2031 = vadd.f32 %v1775, 0.7978846
        %v2032 = vadd.f32 %v1776, 0.7978846
        %v2033 = vadd.f32 %v1777, 0.7978846
        %v2034 = vadd.f32 %v1778, 0.7978846
        %v2035 = vadd.f32 %v1779, 0.7978846
        %v2036 = vadd.f32 %v1780, 0.7978846
        %v2037 = vadd.f32 %v1781, 0.7978846
        %v2038 = vadd.f32 %v1782, 0.7978846
        %v2039 = vadd.f32 %v1783, 0.7978846
        %v2040 = vadd.f32 %v1784, 0.7978846
        %v2041 = vadd.f32 %v1785, 0.7978846
        %v2042 = vadd.f32 %v1786, 0.7978846
        %v2043 = vadd.f32 %v1787, 0.7978846
        %v2044 = vadd.f32 %v1788, 0.7978846
        %v2045 = vadd.f32 %v1789, 0.7978846
        %v2046 = vadd.f32 %v1790, 0.7978846
        %v2047 = vadd.f32 %v1791, 0.7978846
        %v2048 = vadd.f32 %v1792, 0.7978846
        %v2049 = vadd.f32 %v1793, 0.7978846
        %v2050 = vadd.f32 %v1794, 0.7978846
        %v2051 = vadd.f32 %v1795, 0.7978846
        %v2052 = vadd.f32 %v1796, 0.7978846
        %v2053 = vadd.f32 %v1797, 0.7978846
        %v2054 = vadd.f32 %v1798, 0.7978846
        %v2055 = vadd.f32 %v1799, 0.7978846
        %v2056 = vadd.f32 %v1800, 0.7978846
        %v2057 = vadd.f32 %v1801, 0.7978846
        %v2058 = vadd.f32 %v1802, 0.7978846
        %v2059 = vadd.f32 %v1803, 0.7978846
        %v2060 = vadd.f32 %v1804, 0.7978846
        %v2061 = vadd.f32 %v1805, 0.7978846
        %v2062 = vadd.f32 %v1806, 0.7978846
        %v2063 = vadd.f32 %v1807, 0.7978846
        %v2064 = vadd.f32 %v1808, 0.7978846
        %v2065 = vadd.f32 %v1809, 0.7978846
        %v2066 = vadd.f32 %v1810, 0.7978846
        %v2067 = vadd.f32 %v1811, 0.7978846
        %v2068 = vadd.f32 %v1812, 0.7978846
        %v2069 = vadd.f32 %v1813, 0.7978846
        %v2070 = vadd.f32 %v1814, 0.7978846
        %v2071 = vadd.f32 %v1815, 0.7978846
        %v2072 = vadd.f32 %v1816, 0.7978846
        %v2073 = vadd.f32 %v1817, 0.7978846
        %v2074 = vadd.f32 %v1818, 0.7978846
        %v2075 = vadd.f32 %v1819, 0.7978846
        %v2076 = vadd.f32 %v1820, 0.7978846
        %v2077 = vadd.f32 %v1821, 0.7978846
        %v2078 = vadd.f32 %v1822, 0.7978846
        %v2079 = vadd.f32 %v1823, 0.7978846
        %v2080 = vadd.f32 %v1824, 0.7978846
        %v2081 = vadd.f32 %v1825, 0.7978846
        %v2082 = vadd.f32 %v1826, 0.7978846
        %v2083 = vadd.f32 %v1827, 0.7978846
        %v2084 = vadd.f32 %v1828, 0.7978846
        %v2085 = vadd.f32 %v1829, 0.7978846
        %v2086 = vadd.f32 %v1830, 0.7978846
        %v2087 = vadd.f32 %v1831, 0.7978846
        %v2088 = vadd.f32 %v1832, 0.7978846
        %v2089 = vadd.f32 %v1833, 0.7978846
        %v2090 = vadd.f32 %v1834, 0.7978846
        %v2091 = vadd.f32 %v1835, 0.7978846
        %v2092 = vadd.f32 %v1836, 0.7978846
        %v2093 = vadd.f32 %v1837, 0.7978846
        %v2094 = vadd.f32 %v1838, 0.7978846
        %v2095 = vadd.f32 %v1839, 0.7978846
        %v2096 = vadd.f32 %v1840, 0.7978846
        %v2097 = vadd.f32 %v1841, 0.7978846
        %v2098 = vadd.f32 %v1842, 0.7978846
        %v2099 = vadd.f32 %v1843, 0.7978846
        %v2100 = vadd.f32 %v1844, 0.7978846
        %v2101 = vadd.f32 %v1845, 0.7978846
        %v2102 = vadd.f32 %v1846, 0.7978846
        %v2103 = vmul.f32 %v504, %v1847
        %v2104 = vmul.f32 %v506, %v1848
        %v2105 = vmul.f32 %v953, %v1849
        %v2106 = vmul.f32 %v955, %v1850
        %v2107 = vmul.f32 %v510, %v1851
        %v2108 = vmul.f32 %v512, %v1852
        %v2109 = vmul.f32 %v959, %v1853
        %v2110 = vmul.f32 %v961, %v1854
        %v2111 = vmul.f32 %v516, %v1855
        %v2112 = vmul.f32 %v518, %v1856
        %v2113 = vmul.f32 %v965, %v1857
        %v2114 = vmul.f32 %v967, %v1858
        %v2115 = vmul.f32 %v522, %v1859
        %v2116 = vmul.f32 %v524, %v1860
        %v2117 = vmul.f32 %v971, %v1861
        %v2118 = vmul.f32 %v973, %v1862
        %v2119 = vmul.f32 %v528, %v1863
        %v2120 = vmul.f32 %v530, %v1864
        %v2121 = vmul.f32 %v977, %v1865
        %v2122 = vmul.f32 %v979, %v1866
        %v2123 = vmul.f32 %v534, %v1867
        %v2124 = vmul.f32 %v536, %v1868
        %v2125 = vmul.f32 %v983, %v1869
        %v2126 = vmul.f32 %v985, %v1870
        %v2127 = vmul.f32 %v540, %v1871
        %v2128 = vmul.f32 %v542, %v1872
        %v2129 = vmul.f32 %v989, %v1873
        %v2130 = vmul.f32 %v991, %v1874
        %v2131 = vmul.f32 %v546, %v1875
        %v2132 = vmul.f32 %v548, %v1876
        %v2133 = vmul.f32 %v995, %v1877
        %v2134 = vmul.f32 %v997, %v1878
        %v2135 = vmul.f32 %v552, %v1879
        %v2136 = vmul.f32 %v554, %v1880
        %v2137 = vmul.f32 %v1001, %v1881
        %v2138 = vmul.f32 %v1003, %v1882
        %v2139 = vmul.f32 %v558, %v1883
        %v2140 = vmul.f32 %v560, %v1884
        %v2141 = vmul.f32 %v1007, %v1885
        %v2142 = vmul.f32 %v1009, %v1886
        %v2143 = vmul.f32 %v564, %v1887
        %v2144 = vmul.f32 %v566, %v1888
        %v2145 = vmul.f32 %v1013, %v1889
        %v2146 = vmul.f32 %v1015, %v1890
        %v2147 = vmul.f32 %v570, %v1891
        %v2148 = vmul.f32 %v572, %v1892
        %v2149 = vmul.f32 %v1019, %v1893
        %v2150 = vmul.f32 %v1021, %v1894
        %v2151 = vmul.f32 %v576, %v1895
        %v2152 = vmul.f32 %v578, %v1896
        %v2153 = vmul.f32 %v1025, %v1897
        %v2154 = vmul.f32 %v1027, %v1898
        %v2155 = vmul.f32 %v582, %v1899
        %v2156 = vmul.f32 %v584, %v1900
        %v2157 = vmul.f32 %v1031, %v1901
        %v2158 = vmul.f32 %v1033, %v1902
        %v2159 = vmul.f32 %v588, %v1903
        %v2160 = vmul.f32 %v590, %v1904
        %v2161 = vmul.f32 %v1037, %v1905
        %v2162 = vmul.f32 %v1039, %v1906
        %v2163 = vmul.f32 %v594, %v1907
        %v2164 = vmul.f32 %v596, %v1908
        %v2165 = vmul.f32 %v1043, %v1909
        %v2166 = vmul.f32 %v1045, %v1910
        %v2167 = vmul.f32 %v600, %v1911
        %v2168 = vmul.f32 %v602, %v1912
        %v2169 = vmul.f32 %v1049, %v1913
        %v2170 = vmul.f32 %v1051, %v1914
        %v2171 = vmul.f32 %v606, %v1915
        %v2172 = vmul.f32 %v608, %v1916
        %v2173 = vmul.f32 %v1055, %v1917
        %v2174 = vmul.f32 %v1057, %v1918
        %v2175 = vmul.f32 %v612, %v1919
        %v2176 = vmul.f32 %v614, %v1920
        %v2177 = vmul.f32 %v1061, %v1921
        %v2178 = vmul.f32 %v1063, %v1922
        %v2179 = vmul.f32 %v618, %v1923
        %v2180 = vmul.f32 %v620, %v1924
        %v2181 = vmul.f32 %v1067, %v1925
        %v2182 = vmul.f32 %v1069, %v1926
        %v2183 = vmul.f32 %v624, %v1927
        %v2184 = vmul.f32 %v626, %v1928
        %v2185 = vmul.f32 %v1073, %v1929
        %v2186 = vmul.f32 %v1075, %v1930
        %v2187 = vmul.f32 %v630, %v1931
        %v2188 = vmul.f32 %v632, %v1932
        %v2189 = vmul.f32 %v1079, %v1933
        %v2190 = vmul.f32 %v1081, %v1934
        %v2191 = vmul.f32 %v636, %v1935
        %v2192 = vmul.f32 %v638, %v1936
        %v2193 = vmul.f32 %v1085, %v1937
        %v2194 = vmul.f32 %v1087, %v1938
        %v2195 = vmul.f32 %v642, %v1939
        %v2196 = vmul.f32 %v644, %v1940
        %v2197 = vmul.f32 %v1091, %v1941
        %v2198 = vmul.f32 %v1093, %v1942
        %v2199 = vmul.f32 %v648, %v1943
        %v2200 = vmul.f32 %v650, %v1944
        %v2201 = vmul.f32 %v1097, %v1945
        %v2202 = vmul.f32 %v1099, %v1946
        %v2203 = vmul.f32 %v654, %v1947
        %v2204 = vmul.f32 %v656, %v1948
        %v2205 = vmul.f32 %v1103, %v1949
        %v2206 = vmul.f32 %v1105, %v1950
        %v2207 = vmul.f32 %v660, %v1951
        %v2208 = vmul.f32 %v662, %v1952
        %v2209 = vmul.f32 %v1109, %v1953
        %v2210 = vmul.f32 %v1111, %v1954
        %v2211 = vmul.f32 %v666, %v1955
        %v2212 = vmul.f32 %v668, %v1956
        %v2213 = vmul.f32 %v1115, %v1957
        %v2214 = vmul.f32 %v1117, %v1958
        %v2215 = vmul.f32 %v672, %v1959
        %v2216 = vmul.f32 %v674, %v1960
        %v2217 = vmul.f32 %v1121, %v1961
        %v2218 = vmul.f32 %v1123, %v1962
        %v2219 = vmul.f32 %v678, %v1963
        %v2220 = vmul.f32 %v680, %v1964
        %v2221 = vmul.f32 %v1127, %v1965
        %v2222 = vmul.f32 %v1129, %v1966
        %v2223 = vmul.f32 %v684, %v1967
        %v2224 = vmul.f32 %v686, %v1968
        %v2225 = vmul.f32 %v1133, %v1969
        %v2226 = vmul.f32 %v1135, %v1970
        %v2227 = vmul.f32 %v690, %v1971
        %v2228 = vmul.f32 %v692, %v1972
        %v2229 = vmul.f32 %v1139, %v1973
        %v2230 = vmul.f32 %v1141, %v1974
        %v2231 = vmul.f32 %v696, %v1975
        %v2232 = vmul.f32 %v698, %v1976
        %v2233 = vmul.f32 %v1145, %v1977
        %v2234 = vmul.f32 %v1147, %v1978
        %v2235 = vmul.f32 %v702, %v1979
        %v2236 = vmul.f32 %v704, %v1980
        %v2237 = vmul.f32 %v1151, %v1981
        %v2238 = vmul.f32 %v1153, %v1982
        %v2239 = vmul.f32 %v708, %v1983
        %v2240 = vmul.f32 %v710, %v1984
        %v2241 = vmul.f32 %v1157, %v1985
        %v2242 = vmul.f32 %v1159, %v1986
        %v2243 = vmul.f32 %v714, %v1987
        %v2244 = vmul.f32 %v716, %v1988
        %v2245 = vmul.f32 %v1163, %v1989
        %v2246 = vmul.f32 %v1165, %v1990
        %v2247 = vmul.f32 %v720, %v1991
        %v2248 = vmul.f32 %v722, %v1992
        %v2249 = vmul.f32 %v1169, %v1993
        %v2250 = vmul.f32 %v1171, %v1994
        %v2251 = vmul.f32 %v726, %v1995
        %v2252 = vmul.f32 %v728, %v1996
        %v2253 = vmul.f32 %v1175, %v1997
        %v2254 = vmul.f32 %v1177, %v1998
        %v2255 = vmul.f32 %v732, %v1999
        %v2256 = vmul.f32 %v734, %v2000
        %v2257 = vmul.f32 %v1181, %v2001
        %v2258 = vmul.f32 %v1183, %v2002
        %v2259 = vmul.f32 %v738, %v2003
        %v2260 = vmul.f32 %v740, %v2004
        %v2261 = vmul.f32 %v1187, %v2005
        %v2262 = vmul.f32 %v1189, %v2006
        %v2263 = vmul.f32 %v744, %v2007
        %v2264 = vmul.f32 %v746, %v2008
        %v2265 = vmul.f32 %v1193, %v2009
        %v2266 = vmul.f32 %v1195, %v2010
        %v2267 = vmul.f32 %v750, %v2011
        %v2268 = vmul.f32 %v752, %v2012
        %v2269 = vmul.f32 %v1199, %v2013
        %v2270 = vmul.f32 %v1201, %v2014
        %v2271 = vmul.f32 %v756, %v2015
        %v2272 = vmul.f32 %v758, %v2016
        %v2273 = vmul.f32 %v1205, %v2017
        %v2274 = vmul.f32 %v1207, %v2018
        %v2275 = vmul.f32 %v762, %v2019
        %v2276 = vmul.f32 %v764, %v2020
        %v2277 = vmul.f32 %v1211, %v2021
        %v2278 = vmul.f32 %v1213, %v2022
        %v2279 = vmul.f32 %v768, %v2023
        %v2280 = vmul.f32 %v770, %v2024
        %v2281 = vmul.f32 %v1217, %v2025
        %v2282 = vmul.f32 %v1219, %v2026
        %v2283 = vmul.f32 %v774, %v2027
        %v2284 = vmul.f32 %v776, %v2028
        %v2285 = vmul.f32 %v1223, %v2029
        %v2286 = vmul.f32 %v1225, %v2030
        %v2287 = vmul.f32 %v780, %v2031
        %v2288 = vmul.f32 %v782, %v2032
        %v2289 = vmul.f32 %v1229, %v2033
        %v2290 = vmul.f32 %v1231, %v2034
        %v2291 = vmul.f32 %v786, %v2035
        %v2292 = vmul.f32 %v788, %v2036
        %v2293 = vmul.f32 %v1235, %v2037
        %v2294 = vmul.f32 %v1237, %v2038
        %v2295 = vmul.f32 %v792, %v2039
        %v2296 = vmul.f32 %v794, %v2040
        %v2297 = vmul.f32 %v1241, %v2041
        %v2298 = vmul.f32 %v1243, %v2042
        %v2299 = vmul.f32 %v798, %v2043
        %v2300 = vmul.f32 %v800, %v2044
        %v2301 = vmul.f32 %v1247, %v2045
        %v2302 = vmul.f32 %v1249, %v2046
        %v2303 = vmul.f32 %v804, %v2047
        %v2304 = vmul.f32 %v806, %v2048
        %v2305 = vmul.f32 %v1253, %v2049
        %v2306 = vmul.f32 %v1255, %v2050
        %v2307 = vmul.f32 %v810, %v2051
        %v2308 = vmul.f32 %v812, %v2052
        %v2309 = vmul.f32 %v1259, %v2053
        %v2310 = vmul.f32 %v1261, %v2054
        %v2311 = vmul.f32 %v816, %v2055
        %v2312 = vmul.f32 %v818, %v2056
        %v2313 = vmul.f32 %v1265, %v2057
        %v2314 = vmul.f32 %v1267, %v2058
        %v2315 = vmul.f32 %v822, %v2059
        %v2316 = vmul.f32 %v824, %v2060
        %v2317 = vmul.f32 %v1271, %v2061
        %v2318 = vmul.f32 %v1273, %v2062
        %v2319 = vmul.f32 %v828, %v2063
        %v2320 = vmul.f32 %v830, %v2064
        %v2321 = vmul.f32 %v1277, %v2065
        %v2322 = vmul.f32 %v1279, %v2066
        %v2323 = vmul.f32 %v834, %v2067
        %v2324 = vmul.f32 %v836, %v2068
        %v2325 = vmul.f32 %v1283, %v2069
        %v2326 = vmul.f32 %v1285, %v2070
        %v2327 = vmul.f32 %v840, %v2071
        %v2328 = vmul.f32 %v842, %v2072
        %v2329 = vmul.f32 %v1289, %v2073
        %v2330 = vmul.f32 %v1291, %v2074
        %v2331 = vmul.f32 %v846, %v2075
        %v2332 = vmul.f32 %v848, %v2076
        %v2333 = vmul.f32 %v1295, %v2077
        %v2334 = vmul.f32 %v1297, %v2078
        %v2335 = vmul.f32 %v852, %v2079
        %v2336 = vmul.f32 %v854, %v2080
        %v2337 = vmul.f32 %v1301, %v2081
        %v2338 = vmul.f32 %v1303, %v2082
        %v2339 = vmul.f32 %v858, %v2083
        %v2340 = vmul.f32 %v860, %v2084
        %v2341 = vmul.f32 %v1307, %v2085
        %v2342 = vmul.f32 %v1309, %v2086
        %v2343 = vmul.f32 %v864, %v2087
        %v2344 = vmul.f32 %v866, %v2088
        %v2345 = vmul.f32 %v1313, %v2089
        %v2346 = vmul.f32 %v1315, %v2090
        %v2347 = vmul.f32 %v870, %v2091
        %v2348 = vmul.f32 %v872, %v2092
        %v2349 = vmul.f32 %v1319, %v2093
        %v2350 = vmul.f32 %v1321, %v2094
        %v2351 = vmul.f32 %v876, %v2095
        %v2352 = vmul.f32 %v878, %v2096
        %v2353 = vmul.f32 %v1325, %v2097
        %v2354 = vmul.f32 %v1327, %v2098
        %v2355 = vmul.f32 %v882, %v2099
        %v2356 = vmul.f32 %v884, %v2100
        %v2357 = vmul.f32 %v1331, %v2101
        %v2358 = vmul.f32 %v1333, %v2102
        %v2359 = vtanh.pop %v2103
        %v2360 = vtanh.pop %v2104
        %v2361 = vtanh.pop %v2105
        %v2362 = vtanh.pop %v2106
        %v2363 = vtanh.pop %v2107
        %v2364 = vtanh.pop %v2108
        %v2365 = vtanh.pop %v2109
        %v2366 = vtanh.pop %v2110
        %v2367 = vtanh.pop %v2111
        %v2368 = vtanh.pop %v2112
        %v2369 = vtanh.pop %v2113
        %v2370 = vtanh.pop %v2114
        %v2371 = vtanh.pop %v2115
        %v2372 = vtanh.pop %v2116
        %v2373 = vtanh.pop %v2117
        %v2374 = vtanh.pop %v2118
        %v2375 = vtanh.pop %v2119
        %v2376 = vtanh.pop %v2120
        %v2377 = vtanh.pop %v2121
        %v2378 = vtanh.pop %v2122
        %v2379 = vtanh.pop %v2123
        %v2380 = vtanh.pop %v2124
        %v2381 = vtanh.pop %v2125
        %v2382 = vtanh.pop %v2126
        %v2383 = vtanh.pop %v2127
        %v2384 = vtanh.pop %v2128
        %v2385 = vtanh.pop %v2129
        %v2386 = vtanh.pop %v2130
        %v2387 = vtanh.pop %v2131
        %v2388 = vtanh.pop %v2132
        %v2389 = vtanh.pop %v2133
        %v2390 = vtanh.pop %v2134
        %v2391 = vtanh.pop %v2135
        %v2392 = vtanh.pop %v2136
        %v2393 = vtanh.pop %v2137
        %v2394 = vtanh.pop %v2138
        %v2395 = vtanh.pop %v2139
        %v2396 = vtanh.pop %v2140
        %v2397 = vtanh.pop %v2141
        %v2398 = vtanh.pop %v2142
        %v2399 = vtanh.pop %v2143
        %v2400 = vtanh.pop %v2144
        %v2401 = vtanh.pop %v2145
        %v2402 = vtanh.pop %v2146
        %v2403 = vtanh.pop %v2147
        %v2404 = vtanh.pop %v2148
        %v2405 = vtanh.pop %v2149
        %v2406 = vtanh.pop %v2150
        %v2407 = vtanh.pop %v2151
        %v2408 = vtanh.pop %v2152
        %v2409 = vtanh.pop %v2153
        %v2410 = vtanh.pop %v2154
        %v2411 = vtanh.pop %v2155
        %v2412 = vtanh.pop %v2156
        %v2413 = vtanh.pop %v2157
        %v2414 = vtanh.pop %v2158
        %v2415 = vtanh.pop %v2159
        %v2416 = vtanh.pop %v2160
        %v2417 = vtanh.pop %v2161
        %v2418 = vtanh.pop %v2162
        %v2419 = vtanh.pop %v2163
        %v2420 = vtanh.pop %v2164
        %v2421 = vtanh.pop %v2165
        %v2422 = vtanh.pop %v2166
        %v2423 = vtanh.pop %v2167
        %v2424 = vtanh.pop %v2168
        %v2425 = vtanh.pop %v2169
        %v2426 = vtanh.pop %v2170
        %v2427 = vtanh.pop %v2171
        %v2428 = vtanh.pop %v2172
        %v2429 = vtanh.pop %v2173
        %v2430 = vtanh.pop %v2174
        %v2431 = vtanh.pop %v2175
        %v2432 = vtanh.pop %v2176
        %v2433 = vtanh.pop %v2177
        %v2434 = vtanh.pop %v2178
        %v2435 = vtanh.pop %v2179
        %v2436 = vtanh.pop %v2180
        %v2437 = vtanh.pop %v2181
        %v2438 = vtanh.pop %v2182
        %v2439 = vtanh.pop %v2183
        %v2440 = vtanh.pop %v2184
        %v2441 = vtanh.pop %v2185
        %v2442 = vtanh.pop %v2186
        %v2443 = vtanh.pop %v2187
        %v2444 = vtanh.pop %v2188
        %v2445 = vtanh.pop %v2189
        %v2446 = vtanh.pop %v2190
        %v2447 = vtanh.pop %v2191
        %v2448 = vtanh.pop %v2192
        %v2449 = vtanh.pop %v2193
        %v2450 = vtanh.pop %v2194
        %v2451 = vtanh.pop %v2195
        %v2452 = vtanh.pop %v2196
        %v2453 = vtanh.pop %v2197
        %v2454 = vtanh.pop %v2198
        %v2455 = vtanh.pop %v2199
        %v2456 = vtanh.pop %v2200
        %v2457 = vtanh.pop %v2201
        %v2458 = vtanh.pop %v2202
        %v2459 = vtanh.pop %v2203
        %v2460 = vtanh.pop %v2204
        %v2461 = vtanh.pop %v2205
        %v2462 = vtanh.pop %v2206
        %v2463 = vtanh.pop %v2207
        %v2464 = vtanh.pop %v2208
        %v2465 = vtanh.pop %v2209
        %v2466 = vtanh.pop %v2210
        %v2467 = vtanh.pop %v2211
        %v2468 = vtanh.pop %v2212
        %v2469 = vtanh.pop %v2213
        %v2470 = vtanh.pop %v2214
        %v2471 = vtanh.pop %v2215
        %v2472 = vtanh.pop %v2216
        %v2473 = vtanh.pop %v2217
        %v2474 = vtanh.pop %v2218
        %v2475 = vtanh.pop %v2219
        %v2476 = vtanh.pop %v2220
        %v2477 = vtanh.pop %v2221
        %v2478 = vtanh.pop %v2222
        %v2479 = vtanh.pop %v2223
        %v2480 = vtanh.pop %v2224
        %v2481 = vtanh.pop %v2225
        %v2482 = vtanh.pop %v2226
        %v2483 = vtanh.pop %v2227
        %v2484 = vtanh.pop %v2228
        %v2485 = vtanh.pop %v2229
        %v2486 = vtanh.pop %v2230
        %v2487 = vtanh.pop %v2231
        %v2488 = vtanh.pop %v2232
        %v2489 = vtanh.pop %v2233
        %v2490 = vtanh.pop %v2234
        %v2491 = vtanh.pop %v2235
        %v2492 = vtanh.pop %v2236
        %v2493 = vtanh.pop %v2237
        %v2494 = vtanh.pop %v2238
        %v2495 = vtanh.pop %v2239
        %v2496 = vtanh.pop %v2240
        %v2497 = vtanh.pop %v2241
        %v2498 = vtanh.pop %v2242
        %v2499 = vtanh.pop %v2243
        %v2500 = vtanh.pop %v2244
        %v2501 = vtanh.pop %v2245
        %v2502 = vtanh.pop %v2246
        %v2503 = vtanh.pop %v2247
        %v2504 = vtanh.pop %v2248
        %v2505 = vtanh.pop %v2249
        %v2506 = vtanh.pop %v2250
        %v2507 = vtanh.pop %v2251
        %v2508 = vtanh.pop %v2252
        %v2509 = vtanh.pop %v2253
        %v2510 = vtanh.pop %v2254
        %v2511 = vtanh.pop %v2255
        %v2512 = vtanh.pop %v2256
        %v2513 = vtanh.pop %v2257
        %v2514 = vtanh.pop %v2258
        %v2515 = vtanh.pop %v2259
        %v2516 = vtanh.pop %v2260
        %v2517 = vtanh.pop %v2261
        %v2518 = vtanh.pop %v2262
        %v2519 = vtanh.pop %v2263
        %v2520 = vtanh.pop %v2264
        %v2521 = vtanh.pop %v2265
        %v2522 = vtanh.pop %v2266
        %v2523 = vtanh.pop %v2267
        %v2524 = vtanh.pop %v2268
        %v2525 = vtanh.pop %v2269
        %v2526 = vtanh.pop %v2270
        %v2527 = vtanh.pop %v2271
        %v2528 = vtanh.pop %v2272
        %v2529 = vtanh.pop %v2273
        %v2530 = vtanh.pop %v2274
        %v2531 = vtanh.pop %v2275
        %v2532 = vtanh.pop %v2276
        %v2533 = vtanh.pop %v2277
        %v2534 = vtanh.pop %v2278
        %v2535 = vtanh.pop %v2279
        %v2536 = vtanh.pop %v2280
        %v2537 = vtanh.pop %v2281
        %v2538 = vtanh.pop %v2282
        %v2539 = vtanh.pop %v2283
        %v2540 = vtanh.pop %v2284
        %v2541 = vtanh.pop %v2285
        %v2542 = vtanh.pop %v2286
        %v2543 = vtanh.pop %v2287
        %v2544 = vtanh.pop %v2288
        %v2545 = vtanh.pop %v2289
        %v2546 = vtanh.pop %v2290
        %v2547 = vtanh.pop %v2291
        %v2548 = vtanh.pop %v2292
        %v2549 = vtanh.pop %v2293
        %v2550 = vtanh.pop %v2294
        %v2551 = vtanh.pop %v2295
        %v2552 = vtanh.pop %v2296
        %v2553 = vtanh.pop %v2297
        %v2554 = vtanh.pop %v2298
        %v2555 = vtanh.pop %v2299
        %v2556 = vtanh.pop %v2300
        %v2557 = vtanh.pop %v2301
        %v2558 = vtanh.pop %v2302
        %v2559 = vtanh.pop %v2303
        %v2560 = vtanh.pop %v2304
        %v2561 = vtanh.pop %v2305
        %v2562 = vtanh.pop %v2306
        %v2563 = vtanh.pop %v2307
        %v2564 = vtanh.pop %v2308
        %v2565 = vtanh.pop %v2309
        %v2566 = vtanh.pop %v2310
        %v2567 = vtanh.pop %v2311
        %v2568 = vtanh.pop %v2312
        %v2569 = vtanh.pop %v2313
        %v2570 = vtanh.pop %v2314
        %v2571 = vtanh.pop %v2315
        %v2572 = vtanh.pop %v2316
        %v2573 = vtanh.pop %v2317
        %v2574 = vtanh.pop %v2318
        %v2575 = vtanh.pop %v2319
        %v2576 = vtanh.pop %v2320
        %v2577 = vtanh.pop %v2321
        %v2578 = vtanh.pop %v2322
        %v2579 = vtanh.pop %v2323
        %v2580 = vtanh.pop %v2324
        %v2581 = vtanh.pop %v2325
        %v2582 = vtanh.pop %v2326
        %v2583 = vtanh.pop %v2327
        %v2584 = vtanh.pop %v2328
        %v2585 = vtanh.pop %v2329
        %v2586 = vtanh.pop %v2330
        %v2587 = vtanh.pop %v2331
        %v2588 = vtanh.pop %v2332
        %v2589 = vtanh.pop %v2333
        %v2590 = vtanh.pop %v2334
        %v2591 = vtanh.pop %v2335
        %v2592 = vtanh.pop %v2336
        %v2593 = vtanh.pop %v2337
        %v2594 = vtanh.pop %v2338
        %v2595 = vtanh.pop %v2339
        %v2596 = vtanh.pop %v2340
        %v2597 = vtanh.pop %v2341
        %v2598 = vtanh.pop %v2342
        %v2599 = vtanh.pop %v2343
        %v2600 = vtanh.pop %v2344
        %v2601 = vtanh.pop %v2345
        %v2602 = vtanh.pop %v2346
        %v2603 = vtanh.pop %v2347
        %v2604 = vtanh.pop %v2348
        %v2605 = vtanh.pop %v2349
        %v2606 = vtanh.pop %v2350
        %v2607 = vtanh.pop %v2351
        %v2608 = vtanh.pop %v2352
        %v2609 = vtanh.pop %v2353
        %v2610 = vtanh.pop %v2354
        %v2611 = vtanh.pop %v2355
        %v2612 = vtanh.pop %v2356
        %v2613 = vtanh.pop %v2357
        %v2614 = vtanh.pop %v2358
        %v2615 = vmul.f32 %v2359, 0.5
        %v2616 = vmul.f32 %v2360, 0.5
        %v2617 = vmul.f32 %v2361, 0.5
        %v2618 = vmul.f32 %v2362, 0.5
        %v2619 = vmul.f32 %v2363, 0.5
        %v2620 = vmul.f32 %v2364, 0.5
        %v2621 = vmul.f32 %v2365, 0.5
        %v2622 = vmul.f32 %v2366, 0.5
        %v2623 = vmul.f32 %v2367, 0.5
        %v2624 = vmul.f32 %v2368, 0.5
        %v2625 = vmul.f32 %v2369, 0.5
        %v2626 = vmul.f32 %v2370, 0.5
        %v2627 = vmul.f32 %v2371, 0.5
        %v2628 = vmul.f32 %v2372, 0.5
        %v2629 = vmul.f32 %v2373, 0.5
        %v2630 = vmul.f32 %v2374, 0.5
        %v2631 = vmul.f32 %v2375, 0.5
        %v2632 = vmul.f32 %v2376, 0.5
        %v2633 = vmul.f32 %v2377, 0.5
        %v2634 = vmul.f32 %v2378, 0.5
        %v2635 = vmul.f32 %v2379, 0.5
        %v2636 = vmul.f32 %v2380, 0.5
        %v2637 = vmul.f32 %v2381, 0.5
        %v2638 = vmul.f32 %v2382, 0.5
        %v2639 = vmul.f32 %v2383, 0.5
        %v2640 = vmul.f32 %v2384, 0.5
        %v2641 = vmul.f32 %v2385, 0.5
        %v2642 = vmul.f32 %v2386, 0.5
        %v2643 = vmul.f32 %v2387, 0.5
        %v2644 = vmul.f32 %v2388, 0.5
        %v2645 = vmul.f32 %v2389, 0.5
        %v2646 = vmul.f32 %v2390, 0.5
        %v2647 = vmul.f32 %v2391, 0.5
        %v2648 = vmul.f32 %v2392, 0.5
        %v2649 = vmul.f32 %v2393, 0.5
        %v2650 = vmul.f32 %v2394, 0.5
        %v2651 = vmul.f32 %v2395, 0.5
        %v2652 = vmul.f32 %v2396, 0.5
        %v2653 = vmul.f32 %v2397, 0.5
        %v2654 = vmul.f32 %v2398, 0.5
        %v2655 = vmul.f32 %v2399, 0.5
        %v2656 = vmul.f32 %v2400, 0.5
        %v2657 = vmul.f32 %v2401, 0.5
        %v2658 = vmul.f32 %v2402, 0.5
        %v2659 = vmul.f32 %v2403, 0.5
        %v2660 = vmul.f32 %v2404, 0.5
        %v2661 = vmul.f32 %v2405, 0.5
        %v2662 = vmul.f32 %v2406, 0.5
        %v2663 = vmul.f32 %v2407, 0.5
        %v2664 = vmul.f32 %v2408, 0.5
        %v2665 = vmul.f32 %v2409, 0.5
        %v2666 = vmul.f32 %v2410, 0.5
        %v2667 = vmul.f32 %v2411, 0.5
        %v2668 = vmul.f32 %v2412, 0.5
        %v2669 = vmul.f32 %v2413, 0.5
        %v2670 = vmul.f32 %v2414, 0.5
        %v2671 = vmul.f32 %v2415, 0.5
        %v2672 = vmul.f32 %v2416, 0.5
        %v2673 = vmul.f32 %v2417, 0.5
        %v2674 = vmul.f32 %v2418, 0.5
        %v2675 = vmul.f32 %v2419, 0.5
        %v2676 = vmul.f32 %v2420, 0.5
        %v2677 = vmul.f32 %v2421, 0.5
        %v2678 = vmul.f32 %v2422, 0.5
        %v2679 = vmul.f32 %v2423, 0.5
        %v2680 = vmul.f32 %v2424, 0.5
        %v2681 = vmul.f32 %v2425, 0.5
        %v2682 = vmul.f32 %v2426, 0.5
        %v2683 = vmul.f32 %v2427, 0.5
        %v2684 = vmul.f32 %v2428, 0.5
        %v2685 = vmul.f32 %v2429, 0.5
        %v2686 = vmul.f32 %v2430, 0.5
        %v2687 = vmul.f32 %v2431, 0.5
        %v2688 = vmul.f32 %v2432, 0.5
        %v2689 = vmul.f32 %v2433, 0.5
        %v2690 = vmul.f32 %v2434, 0.5
        %v2691 = vmul.f32 %v2435, 0.5
        %v2692 = vmul.f32 %v2436, 0.5
        %v2693 = vmul.f32 %v2437, 0.5
        %v2694 = vmul.f32 %v2438, 0.5
        %v2695 = vmul.f32 %v2439, 0.5
        %v2696 = vmul.f32 %v2440, 0.5
        %v2697 = vmul.f32 %v2441, 0.5
        %v2698 = vmul.f32 %v2442, 0.5
        %v2699 = vmul.f32 %v2443, 0.5
        %v2700 = vmul.f32 %v2444, 0.5
        %v2701 = vmul.f32 %v2445, 0.5
        %v2702 = vmul.f32 %v2446, 0.5
        %v2703 = vmul.f32 %v2447, 0.5
        %v2704 = vmul.f32 %v2448, 0.5
        %v2705 = vmul.f32 %v2449, 0.5
        %v2706 = vmul.f32 %v2450, 0.5
        %v2707 = vmul.f32 %v2451, 0.5
        %v2708 = vmul.f32 %v2452, 0.5
        %v2709 = vmul.f32 %v2453, 0.5
        %v2710 = vmul.f32 %v2454, 0.5
        %v2711 = vmul.f32 %v2455, 0.5
        %v2712 = vmul.f32 %v2456, 0.5
        %v2713 = vmul.f32 %v2457, 0.5
        %v2714 = vmul.f32 %v2458, 0.5
        %v2715 = vmul.f32 %v2459, 0.5
        %v2716 = vmul.f32 %v2460, 0.5
        %v2717 = vmul.f32 %v2461, 0.5
        %v2718 = vmul.f32 %v2462, 0.5
        %v2719 = vmul.f32 %v2463, 0.5
        %v2720 = vmul.f32 %v2464, 0.5
        %v2721 = vmul.f32 %v2465, 0.5
        %v2722 = vmul.f32 %v2466, 0.5
        %v2723 = vmul.f32 %v2467, 0.5
        %v2724 = vmul.f32 %v2468, 0.5
        %v2725 = vmul.f32 %v2469, 0.5
        %v2726 = vmul.f32 %v2470, 0.5
        %v2727 = vmul.f32 %v2471, 0.5
        %v2728 = vmul.f32 %v2472, 0.5
        %v2729 = vmul.f32 %v2473, 0.5
        %v2730 = vmul.f32 %v2474, 0.5
        %v2731 = vmul.f32 %v2475, 0.5
        %v2732 = vmul.f32 %v2476, 0.5
        %v2733 = vmul.f32 %v2477, 0.5
        %v2734 = vmul.f32 %v2478, 0.5
        %v2735 = vmul.f32 %v2479, 0.5
        %v2736 = vmul.f32 %v2480, 0.5
        %v2737 = vmul.f32 %v2481, 0.5
        %v2738 = vmul.f32 %v2482, 0.5
        %v2739 = vmul.f32 %v2483, 0.5
        %v2740 = vmul.f32 %v2484, 0.5
        %v2741 = vmul.f32 %v2485, 0.5
        %v2742 = vmul.f32 %v2486, 0.5
        %v2743 = vmul.f32 %v2487, 0.5
        %v2744 = vmul.f32 %v2488, 0.5
        %v2745 = vmul.f32 %v2489, 0.5
        %v2746 = vmul.f32 %v2490, 0.5
        %v2747 = vmul.f32 %v2491, 0.5
        %v2748 = vmul.f32 %v2492, 0.5
        %v2749 = vmul.f32 %v2493, 0.5
        %v2750 = vmul.f32 %v2494, 0.5
        %v2751 = vmul.f32 %v2495, 0.5
        %v2752 = vmul.f32 %v2496, 0.5
        %v2753 = vmul.f32 %v2497, 0.5
        %v2754 = vmul.f32 %v2498, 0.5
        %v2755 = vmul.f32 %v2499, 0.5
        %v2756 = vmul.f32 %v2500, 0.5
        %v2757 = vmul.f32 %v2501, 0.5
        %v2758 = vmul.f32 %v2502, 0.5
        %v2759 = vmul.f32 %v2503, 0.5
        %v2760 = vmul.f32 %v2504, 0.5
        %v2761 = vmul.f32 %v2505, 0.5
        %v2762 = vmul.f32 %v2506, 0.5
        %v2763 = vmul.f32 %v2507, 0.5
        %v2764 = vmul.f32 %v2508, 0.5
        %v2765 = vmul.f32 %v2509, 0.5
        %v2766 = vmul.f32 %v2510, 0.5
        %v2767 = vmul.f32 %v2511, 0.5
        %v2768 = vmul.f32 %v2512, 0.5
        %v2769 = vmul.f32 %v2513, 0.5
        %v2770 = vmul.f32 %v2514, 0.5
        %v2771 = vmul.f32 %v2515, 0.5
        %v2772 = vmul.f32 %v2516, 0.5
        %v2773 = vmul.f32 %v2517, 0.5
        %v2774 = vmul.f32 %v2518, 0.5
        %v2775 = vmul.f32 %v2519, 0.5
        %v2776 = vmul.f32 %v2520, 0.5
        %v2777 = vmul.f32 %v2521, 0.5
        %v2778 = vmul.f32 %v2522, 0.5
        %v2779 = vmul.f32 %v2523, 0.5
        %v2780 = vmul.f32 %v2524, 0.5
        %v2781 = vmul.f32 %v2525, 0.5
        %v2782 = vmul.f32 %v2526, 0.5
        %v2783 = vmul.f32 %v2527, 0.5
        %v2784 = vmul.f32 %v2528, 0.5
        %v2785 = vmul.f32 %v2529, 0.5
        %v2786 = vmul.f32 %v2530, 0.5
        %v2787 = vmul.f32 %v2531, 0.5
        %v2788 = vmul.f32 %v2532, 0.5
        %v2789 = vmul.f32 %v2533, 0.5
        %v2790 = vmul.f32 %v2534, 0.5
        %v2791 = vmul.f32 %v2535, 0.5
        %v2792 = vmul.f32 %v2536, 0.5
        %v2793 = vmul.f32 %v2537, 0.5
        %v2794 = vmul.f32 %v2538, 0.5
        %v2795 = vmul.f32 %v2539, 0.5
        %v2796 = vmul.f32 %v2540, 0.5
        %v2797 = vmul.f32 %v2541, 0.5
        %v2798 = vmul.f32 %v2542, 0.5
        %v2799 = vmul.f32 %v2543, 0.5
        %v2800 = vmul.f32 %v2544, 0.5
        %v2801 = vmul.f32 %v2545, 0.5
        %v2802 = vmul.f32 %v2546, 0.5
        %v2803 = vmul.f32 %v2547, 0.5
        %v2804 = vmul.f32 %v2548, 0.5
        %v2805 = vmul.f32 %v2549, 0.5
        %v2806 = vmul.f32 %v2550, 0.5
        %v2807 = vmul.f32 %v2551, 0.5
        %v2808 = vmul.f32 %v2552, 0.5
        %v2809 = vmul.f32 %v2553, 0.5
        %v2810 = vmul.f32 %v2554, 0.5
        %v2811 = vmul.f32 %v2555, 0.5
        %v2812 = vmul.f32 %v2556, 0.5
        %v2813 = vmul.f32 %v2557, 0.5
        %v2814 = vmul.f32 %v2558, 0.5
        %v2815 = vmul.f32 %v2559, 0.5
        %v2816 = vmul.f32 %v2560, 0.5
        %v2817 = vmul.f32 %v2561, 0.5
        %v2818 = vmul.f32 %v2562, 0.5
        %v2819 = vmul.f32 %v2563, 0.5
        %v2820 = vmul.f32 %v2564, 0.5
        %v2821 = vmul.f32 %v2565, 0.5
        %v2822 = vmul.f32 %v2566, 0.5
        %v2823 = vmul.f32 %v2567, 0.5
        %v2824 = vmul.f32 %v2568, 0.5
        %v2825 = vmul.f32 %v2569, 0.5
        %v2826 = vmul.f32 %v2570, 0.5
        %v2827 = vmul.f32 %v2571, 0.5
        %v2828 = vmul.f32 %v2572, 0.5
        %v2829 = vmul.f32 %v2573, 0.5
        %v2830 = vmul.f32 %v2574, 0.5
        %v2831 = vmul.f32 %v2575, 0.5
        %v2832 = vmul.f32 %v2576, 0.5
        %v2833 = vmul.f32 %v2577, 0.5
        %v2834 = vmul.f32 %v2578, 0.5
        %v2835 = vmul.f32 %v2579, 0.5
        %v2836 = vmul.f32 %v2580, 0.5
        %v2837 = vmul.f32 %v2581, 0.5
        %v2838 = vmul.f32 %v2582, 0.5
        %v2839 = vmul.f32 %v2583, 0.5
        %v2840 = vmul.f32 %v2584, 0.5
        %v2841 = vmul.f32 %v2585, 0.5
        %v2842 = vmul.f32 %v2586, 0.5
        %v2843 = vmul.f32 %v2587, 0.5
        %v2844 = vmul.f32 %v2588, 0.5
        %v2845 = vmul.f32 %v2589, 0.5
        %v2846 = vmul.f32 %v2590, 0.5
        %v2847 = vmul.f32 %v2591, 0.5
        %v2848 = vmul.f32 %v2592, 0.5
        %v2849 = vmul.f32 %v2593, 0.5
        %v2850 = vmul.f32 %v2594, 0.5
        %v2851 = vmul.f32 %v2595, 0.5
        %v2852 = vmul.f32 %v2596, 0.5
        %v2853 = vmul.f32 %v2597, 0.5
        %v2854 = vmul.f32 %v2598, 0.5
        %v2855 = vmul.f32 %v2599, 0.5
        %v2856 = vmul.f32 %v2600, 0.5
        %v2857 = vmul.f32 %v2601, 0.5
        %v2858 = vmul.f32 %v2602, 0.5
        %v2859 = vmul.f32 %v2603, 0.5
        %v2860 = vmul.f32 %v2604, 0.5
        %v2861 = vmul.f32 %v2605, 0.5
        %v2862 = vmul.f32 %v2606, 0.5
        %v2863 = vmul.f32 %v2607, 0.5
        %v2864 = vmul.f32 %v2608, 0.5
        %v2865 = vmul.f32 %v2609, 0.5
        %v2866 = vmul.f32 %v2610, 0.5
        %v2867 = vmul.f32 %v2611, 0.5
        %v2868 = vmul.f32 %v2612, 0.5
        %v2869 = vmul.f32 %v2613, 0.5
        %v2870 = vmul.f32 %v2614, 0.5
        %v2871 = vadd.f32 %v2615, 0.5
        %v2872 = vadd.f32 %v2616, 0.5
        %v2873 = vadd.f32 %v2617, 0.5
        %v2874 = vadd.f32 %v2618, 0.5
        %v2875 = vadd.f32 %v2619, 0.5
        %v2876 = vadd.f32 %v2620, 0.5
        %v2877 = vadd.f32 %v2621, 0.5
        %v2878 = vadd.f32 %v2622, 0.5
        %v2879 = vadd.f32 %v2623, 0.5
        %v2880 = vadd.f32 %v2624, 0.5
        %v2881 = vadd.f32 %v2625, 0.5
        %v2882 = vadd.f32 %v2626, 0.5
        %v2883 = vadd.f32 %v2627, 0.5
        %v2884 = vadd.f32 %v2628, 0.5
        %v2885 = vadd.f32 %v2629, 0.5
        %v2886 = vadd.f32 %v2630, 0.5
        %v2887 = vadd.f32 %v2631, 0.5
        %v2888 = vadd.f32 %v2632, 0.5
        %v2889 = vadd.f32 %v2633, 0.5
        %v2890 = vadd.f32 %v2634, 0.5
        %v2891 = vadd.f32 %v2635, 0.5
        %v2892 = vadd.f32 %v2636, 0.5
        %v2893 = vadd.f32 %v2637, 0.5
        %v2894 = vadd.f32 %v2638, 0.5
        %v2895 = vadd.f32 %v2639, 0.5
        %v2896 = vadd.f32 %v2640, 0.5
        %v2897 = vadd.f32 %v2641, 0.5
        %v2898 = vadd.f32 %v2642, 0.5
        %v2899 = vadd.f32 %v2643, 0.5
        %v2900 = vadd.f32 %v2644, 0.5
        %v2901 = vadd.f32 %v2645, 0.5
        %v2902 = vadd.f32 %v2646, 0.5
        %v2903 = vadd.f32 %v2647, 0.5
        %v2904 = vadd.f32 %v2648, 0.5
        %v2905 = vadd.f32 %v2649, 0.5
        %v2906 = vadd.f32 %v2650, 0.5
        %v2907 = vadd.f32 %v2651, 0.5
        %v2908 = vadd.f32 %v2652, 0.5
        %v2909 = vadd.f32 %v2653, 0.5
        %v2910 = vadd.f32 %v2654, 0.5
        %v2911 = vadd.f32 %v2655, 0.5
        %v2912 = vadd.f32 %v2656, 0.5
        %v2913 = vadd.f32 %v2657, 0.5
        %v2914 = vadd.f32 %v2658, 0.5
        %v2915 = vadd.f32 %v2659, 0.5
        %v2916 = vadd.f32 %v2660, 0.5
        %v2917 = vadd.f32 %v2661, 0.5
        %v2918 = vadd.f32 %v2662, 0.5
        %v2919 = vadd.f32 %v2663, 0.5
        %v2920 = vadd.f32 %v2664, 0.5
        %v2921 = vadd.f32 %v2665, 0.5
        %v2922 = vadd.f32 %v2666, 0.5
        %v2923 = vadd.f32 %v2667, 0.5
        %v2924 = vadd.f32 %v2668, 0.5
        %v2925 = vadd.f32 %v2669, 0.5
        %v2926 = vadd.f32 %v2670, 0.5
        %v2927 = vadd.f32 %v2671, 0.5
        %v2928 = vadd.f32 %v2672, 0.5
        %v2929 = vadd.f32 %v2673, 0.5
        %v2930 = vadd.f32 %v2674, 0.5
        %v2931 = vadd.f32 %v2675, 0.5
        %v2932 = vadd.f32 %v2676, 0.5
        %v2933 = vadd.f32 %v2677, 0.5
        %v2934 = vadd.f32 %v2678, 0.5
        %v2935 = vadd.f32 %v2679, 0.5
        %v2936 = vadd.f32 %v2680, 0.5
        %v2937 = vadd.f32 %v2681, 0.5
        %v2938 = vadd.f32 %v2682, 0.5
        %v2939 = vadd.f32 %v2683, 0.5
        %v2940 = vadd.f32 %v2684, 0.5
        %v2941 = vadd.f32 %v2685, 0.5
        %v2942 = vadd.f32 %v2686, 0.5
        %v2943 = vadd.f32 %v2687, 0.5
        %v2944 = vadd.f32 %v2688, 0.5
        %v2945 = vadd.f32 %v2689, 0.5
        %v2946 = vadd.f32 %v2690, 0.5
        %v2947 = vadd.f32 %v2691, 0.5
        %v2948 = vadd.f32 %v2692, 0.5
        %v2949 = vadd.f32 %v2693, 0.5
        %v2950 = vadd.f32 %v2694, 0.5
        %v2951 = vadd.f32 %v2695, 0.5
        %v2952 = vadd.f32 %v2696, 0.5
        %v2953 = vadd.f32 %v2697, 0.5
        %v2954 = vadd.f32 %v2698, 0.5
        %v2955 = vadd.f32 %v2699, 0.5
        %v2956 = vadd.f32 %v2700, 0.5
        %v2957 = vadd.f32 %v2701, 0.5
        %v2958 = vadd.f32 %v2702, 0.5
        %v2959 = vadd.f32 %v2703, 0.5
        %v2960 = vadd.f32 %v2704, 0.5
        %v2961 = vadd.f32 %v2705, 0.5
        %v2962 = vadd.f32 %v2706, 0.5
        %v2963 = vadd.f32 %v2707, 0.5
        %v2964 = vadd.f32 %v2708, 0.5
        %v2965 = vadd.f32 %v2709, 0.5
        %v2966 = vadd.f32 %v2710, 0.5
        %v2967 = vadd.f32 %v2711, 0.5
        %v2968 = vadd.f32 %v2712, 0.5
        %v2969 = vadd.f32 %v2713, 0.5
        %v2970 = vadd.f32 %v2714, 0.5
        %v2971 = vadd.f32 %v2715, 0.5
        %v2972 = vadd.f32 %v2716, 0.5
        %v2973 = vadd.f32 %v2717, 0.5
        %v2974 = vadd.f32 %v2718, 0.5
        %v2975 = vadd.f32 %v2719, 0.5
        %v2976 = vadd.f32 %v2720, 0.5
        %v2977 = vadd.f32 %v2721, 0.5
        %v2978 = vadd.f32 %v2722, 0.5
        %v2979 = vadd.f32 %v2723, 0.5
        %v2980 = vadd.f32 %v2724, 0.5
        %v2981 = vadd.f32 %v2725, 0.5
        %v2982 = vadd.f32 %v2726, 0.5
        %v2983 = vadd.f32 %v2727, 0.5
        %v2984 = vadd.f32 %v2728, 0.5
        %v2985 = vadd.f32 %v2729, 0.5
        %v2986 = vadd.f32 %v2730, 0.5
        %v2987 = vadd.f32 %v2731, 0.5
        %v2988 = vadd.f32 %v2732, 0.5
        %v2989 = vadd.f32 %v2733, 0.5
        %v2990 = vadd.f32 %v2734, 0.5
        %v2991 = vadd.f32 %v2735, 0.5
        %v2992 = vadd.f32 %v2736, 0.5
        %v2993 = vadd.f32 %v2737, 0.5
        %v2994 = vadd.f32 %v2738, 0.5
        %v2995 = vadd.f32 %v2739, 0.5
        %v2996 = vadd.f32 %v2740, 0.5
        %v2997 = vadd.f32 %v2741, 0.5
        %v2998 = vadd.f32 %v2742, 0.5
        %v2999 = vadd.f32 %v2743, 0.5
        %v3000 = vadd.f32 %v2744, 0.5
        %v3001 = vadd.f32 %v2745, 0.5
        %v3002 = vadd.f32 %v2746, 0.5
        %v3003 = vadd.f32 %v2747, 0.5
        %v3004 = vadd.f32 %v2748, 0.5
        %v3005 = vadd.f32 %v2749, 0.5
        %v3006 = vadd.f32 %v2750, 0.5
        %v3007 = vadd.f32 %v2751, 0.5
        %v3008 = vadd.f32 %v2752, 0.5
        %v3009 = vadd.f32 %v2753, 0.5
        %v3010 = vadd.f32 %v2754, 0.5
        %v3011 = vadd.f32 %v2755, 0.5
        %v3012 = vadd.f32 %v2756, 0.5
        %v3013 = vadd.f32 %v2757, 0.5
        %v3014 = vadd.f32 %v2758, 0.5
        %v3015 = vadd.f32 %v2759, 0.5
        %v3016 = vadd.f32 %v2760, 0.5
        %v3017 = vadd.f32 %v2761, 0.5
        %v3018 = vadd.f32 %v2762, 0.5
        %v3019 = vadd.f32 %v2763, 0.5
        %v3020 = vadd.f32 %v2764, 0.5
        %v3021 = vadd.f32 %v2765, 0.5
        %v3022 = vadd.f32 %v2766, 0.5
        %v3023 = vadd.f32 %v2767, 0.5
        %v3024 = vadd.f32 %v2768, 0.5
        %v3025 = vadd.f32 %v2769, 0.5
        %v3026 = vadd.f32 %v2770, 0.5
        %v3027 = vadd.f32 %v2771, 0.5
        %v3028 = vadd.f32 %v2772, 0.5
        %v3029 = vadd.f32 %v2773, 0.5
        %v3030 = vadd.f32 %v2774, 0.5
        %v3031 = vadd.f32 %v2775, 0.5
        %v3032 = vadd.f32 %v2776, 0.5
        %v3033 = vadd.f32 %v2777, 0.5
        %v3034 = vadd.f32 %v2778, 0.5
        %v3035 = vadd.f32 %v2779, 0.5
        %v3036 = vadd.f32 %v2780, 0.5
        %v3037 = vadd.f32 %v2781, 0.5
        %v3038 = vadd.f32 %v2782, 0.5
        %v3039 = vadd.f32 %v2783, 0.5
        %v3040 = vadd.f32 %v2784, 0.5
        %v3041 = vadd.f32 %v2785, 0.5
        %v3042 = vadd.f32 %v2786, 0.5
        %v3043 = vadd.f32 %v2787, 0.5
        %v3044 = vadd.f32 %v2788, 0.5
        %v3045 = vadd.f32 %v2789, 0.5
        %v3046 = vadd.f32 %v2790, 0.5
        %v3047 = vadd.f32 %v2791, 0.5
        %v3048 = vadd.f32 %v2792, 0.5
        %v3049 = vadd.f32 %v2793, 0.5
        %v3050 = vadd.f32 %v2794, 0.5
        %v3051 = vadd.f32 %v2795, 0.5
        %v3052 = vadd.f32 %v2796, 0.5
        %v3053 = vadd.f32 %v2797, 0.5
        %v3054 = vadd.f32 %v2798, 0.5
        %v3055 = vadd.f32 %v2799, 0.5
        %v3056 = vadd.f32 %v2800, 0.5
        %v3057 = vadd.f32 %v2801, 0.5
        %v3058 = vadd.f32 %v2802, 0.5
        %v3059 = vadd.f32 %v2803, 0.5
        %v3060 = vadd.f32 %v2804, 0.5
        %v3061 = vadd.f32 %v2805, 0.5
        %v3062 = vadd.f32 %v2806, 0.5
        %v3063 = vadd.f32 %v2807, 0.5
        %v3064 = vadd.f32 %v2808, 0.5
        %v3065 = vadd.f32 %v2809, 0.5
        %v3066 = vadd.f32 %v2810, 0.5
        %v3067 = vadd.f32 %v2811, 0.5
        %v3068 = vadd.f32 %v2812, 0.5
        %v3069 = vadd.f32 %v2813, 0.5
        %v3070 = vadd.f32 %v2814, 0.5
        %v3071 = vadd.f32 %v2815, 0.5
        %v3072 = vadd.f32 %v2816, 0.5
        %v3073 = vadd.f32 %v2817, 0.5
        %v3074 = vadd.f32 %v2818, 0.5
        %v3075 = vadd.f32 %v2819, 0.5
        %v3076 = vadd.f32 %v2820, 0.5
        %v3077 = vadd.f32 %v2821, 0.5
        %v3078 = vadd.f32 %v2822, 0.5
        %v3079 = vadd.f32 %v2823, 0.5
        %v3080 = vadd.f32 %v2824, 0.5
        %v3081 = vadd.f32 %v2825, 0.5
        %v3082 = vadd.f32 %v2826, 0.5
        %v3083 = vadd.f32 %v2827, 0.5
        %v3084 = vadd.f32 %v2828, 0.5
        %v3085 = vadd.f32 %v2829, 0.5
        %v3086 = vadd.f32 %v2830, 0.5
        %v3087 = vadd.f32 %v2831, 0.5
        %v3088 = vadd.f32 %v2832, 0.5
        %v3089 = vadd.f32 %v2833, 0.5
        %v3090 = vadd.f32 %v2834, 0.5
        %v3091 = vadd.f32 %v2835, 0.5
        %v3092 = vadd.f32 %v2836, 0.5
        %v3093 = vadd.f32 %v2837, 0.5
        %v3094 = vadd.f32 %v2838, 0.5
        %v3095 = vadd.f32 %v2839, 0.5
        %v3096 = vadd.f32 %v2840, 0.5
        %v3097 = vadd.f32 %v2841, 0.5
        %v3098 = vadd.f32 %v2842, 0.5
        %v3099 = vadd.f32 %v2843, 0.5
        %v3100 = vadd.f32 %v2844, 0.5
        %v3101 = vadd.f32 %v2845, 0.5
        %v3102 = vadd.f32 %v2846, 0.5
        %v3103 = vadd.f32 %v2847, 0.5
        %v3104 = vadd.f32 %v2848, 0.5
        %v3105 = vadd.f32 %v2849, 0.5
        %v3106 = vadd.f32 %v2850, 0.5
        %v3107 = vadd.f32 %v2851, 0.5
        %v3108 = vadd.f32 %v2852, 0.5
        %v3109 = vadd.f32 %v2853, 0.5
        %v3110 = vadd.f32 %v2854, 0.5
        %v3111 = vadd.f32 %v2855, 0.5
        %v3112 = vadd.f32 %v2856, 0.5
        %v3113 = vadd.f32 %v2857, 0.5
        %v3114 = vadd.f32 %v2858, 0.5
        %v3115 = vadd.f32 %v2859, 0.5
        %v3116 = vadd.f32 %v2860, 0.5
        %v3117 = vadd.f32 %v2861, 0.5
        %v3118 = vadd.f32 %v2862, 0.5
        %v3119 = vadd.f32 %v2863, 0.5
        %v3120 = vadd.f32 %v2864, 0.5
        %v3121 = vadd.f32 %v2865, 0.5
        %v3122 = vadd.f32 %v2866, 0.5
        %v3123 = vadd.f32 %v2867, 0.5
        %v3124 = vadd.f32 %v2868, 0.5
        %v3125 = vadd.f32 %v2869, 0.5
        %v3126 = vadd.f32 %v2870, 0.5
        %v3127 = vmul.f32 %v504, %v2871
        %v3128 = vmul.f32 %v506, %v2872
        %v3129 = vmul.f32 %v953, %v2873
        %v3130 = vmul.f32 %v955, %v2874
        %v3131 = vmul.f32 %v510, %v2875
        %v3132 = vmul.f32 %v512, %v2876
        %v3133 = vmul.f32 %v959, %v2877
        %v3134 = vmul.f32 %v961, %v2878
        %v3135 = vmul.f32 %v516, %v2879
        %v3136 = vmul.f32 %v518, %v2880
        %v3137 = vmul.f32 %v965, %v2881
        %v3138 = vmul.f32 %v967, %v2882
        %v3139 = vmul.f32 %v522, %v2883
        %v3140 = vmul.f32 %v524, %v2884
        %v3141 = vmul.f32 %v971, %v2885
        %v3142 = vmul.f32 %v973, %v2886
        %v3143 = vmul.f32 %v528, %v2887
        %v3144 = vmul.f32 %v530, %v2888
        %v3145 = vmul.f32 %v977, %v2889
        %v3146 = vmul.f32 %v979, %v2890
        %v3147 = vmul.f32 %v534, %v2891
        %v3148 = vmul.f32 %v536, %v2892
        %v3149 = vmul.f32 %v983, %v2893
        %v3150 = vmul.f32 %v985, %v2894
        %v3151 = vmul.f32 %v540, %v2895
        %v3152 = vmul.f32 %v542, %v2896
        %v3153 = vmul.f32 %v989, %v2897
        %v3154 = vmul.f32 %v991, %v2898
        %v3155 = vmul.f32 %v546, %v2899
        %v3156 = vmul.f32 %v548, %v2900
        %v3157 = vmul.f32 %v995, %v2901
        %v3158 = vmul.f32 %v997, %v2902
        %v3159 = vmul.f32 %v552, %v2903
        %v3160 = vmul.f32 %v554, %v2904
        %v3161 = vmul.f32 %v1001, %v2905
        %v3162 = vmul.f32 %v1003, %v2906
        %v3163 = vmul.f32 %v558, %v2907
        %v3164 = vmul.f32 %v560, %v2908
        %v3165 = vmul.f32 %v1007, %v2909
        %v3166 = vmul.f32 %v1009, %v2910
        %v3167 = vmul.f32 %v564, %v2911
        %v3168 = vmul.f32 %v566, %v2912
        %v3169 = vmul.f32 %v1013, %v2913
        %v3170 = vmul.f32 %v1015, %v2914
        %v3171 = vmul.f32 %v570, %v2915
        %v3172 = vmul.f32 %v572, %v2916
        %v3173 = vmul.f32 %v1019, %v2917
        %v3174 = vmul.f32 %v1021, %v2918
        %v3175 = vmul.f32 %v576, %v2919
        %v3176 = vmul.f32 %v578, %v2920
        %v3177 = vmul.f32 %v1025, %v2921
        %v3178 = vmul.f32 %v1027, %v2922
        %v3179 = vmul.f32 %v582, %v2923
        %v3180 = vmul.f32 %v584, %v2924
        %v3181 = vmul.f32 %v1031, %v2925
        %v3182 = vmul.f32 %v1033, %v2926
        %v3183 = vmul.f32 %v588, %v2927
        %v3184 = vmul.f32 %v590, %v2928
        %v3185 = vmul.f32 %v1037, %v2929
        %v3186 = vmul.f32 %v1039, %v2930
        %v3187 = vmul.f32 %v594, %v2931
        %v3188 = vmul.f32 %v596, %v2932
        %v3189 = vmul.f32 %v1043, %v2933
        %v3190 = vmul.f32 %v1045, %v2934
        %v3191 = vmul.f32 %v600, %v2935
        %v3192 = vmul.f32 %v602, %v2936
        %v3193 = vmul.f32 %v1049, %v2937
        %v3194 = vmul.f32 %v1051, %v2938
        %v3195 = vmul.f32 %v606, %v2939
        %v3196 = vmul.f32 %v608, %v2940
        %v3197 = vmul.f32 %v1055, %v2941
        %v3198 = vmul.f32 %v1057, %v2942
        %v3199 = vmul.f32 %v612, %v2943
        %v3200 = vmul.f32 %v614, %v2944
        %v3201 = vmul.f32 %v1061, %v2945
        %v3202 = vmul.f32 %v1063, %v2946
        %v3203 = vmul.f32 %v618, %v2947
        %v3204 = vmul.f32 %v620, %v2948
        %v3205 = vmul.f32 %v1067, %v2949
        %v3206 = vmul.f32 %v1069, %v2950
        %v3207 = vmul.f32 %v624, %v2951
        %v3208 = vmul.f32 %v626, %v2952
        %v3209 = vmul.f32 %v1073, %v2953
        %v3210 = vmul.f32 %v1075, %v2954
        %v3211 = vmul.f32 %v630, %v2955
        %v3212 = vmul.f32 %v632, %v2956
        %v3213 = vmul.f32 %v1079, %v2957
        %v3214 = vmul.f32 %v1081, %v2958
        %v3215 = vmul.f32 %v636, %v2959
        %v3216 = vmul.f32 %v638, %v2960
        %v3217 = vmul.f32 %v1085, %v2961
        %v3218 = vmul.f32 %v1087, %v2962
        %v3219 = vmul.f32 %v642, %v2963
        %v3220 = vmul.f32 %v644, %v2964
        %v3221 = vmul.f32 %v1091, %v2965
        %v3222 = vmul.f32 %v1093, %v2966
        %v3223 = vmul.f32 %v648, %v2967
        %v3224 = vmul.f32 %v650, %v2968
        %v3225 = vmul.f32 %v1097, %v2969
        %v3226 = vmul.f32 %v1099, %v2970
        %v3227 = vmul.f32 %v654, %v2971
        %v3228 = vmul.f32 %v656, %v2972
        %v3229 = vmul.f32 %v1103, %v2973
        %v3230 = vmul.f32 %v1105, %v2974
        %v3231 = vmul.f32 %v660, %v2975
        %v3232 = vmul.f32 %v662, %v2976
        %v3233 = vmul.f32 %v1109, %v2977
        %v3234 = vmul.f32 %v1111, %v2978
        %v3235 = vmul.f32 %v666, %v2979
        %v3236 = vmul.f32 %v668, %v2980
        %v3237 = vmul.f32 %v1115, %v2981
        %v3238 = vmul.f32 %v1117, %v2982
        %v3239 = vmul.f32 %v672, %v2983
        %v3240 = vmul.f32 %v674, %v2984
        %v3241 = vmul.f32 %v1121, %v2985
        %v3242 = vmul.f32 %v1123, %v2986
        %v3243 = vmul.f32 %v678, %v2987
        %v3244 = vmul.f32 %v680, %v2988
        %v3245 = vmul.f32 %v1127, %v2989
        %v3246 = vmul.f32 %v1129, %v2990
        %v3247 = vmul.f32 %v684, %v2991
        %v3248 = vmul.f32 %v686, %v2992
        %v3249 = vmul.f32 %v1133, %v2993
        %v3250 = vmul.f32 %v1135, %v2994
        %v3251 = vmul.f32 %v690, %v2995
        %v3252 = vmul.f32 %v692, %v2996
        %v3253 = vmul.f32 %v1139, %v2997
        %v3254 = vmul.f32 %v1141, %v2998
        %v3255 = vmul.f32 %v696, %v2999
        %v3256 = vmul.f32 %v698, %v3000
        %v3257 = vmul.f32 %v1145, %v3001
        %v3258 = vmul.f32 %v1147, %v3002
        %v3259 = vmul.f32 %v702, %v3003
        %v3260 = vmul.f32 %v704, %v3004
        %v3261 = vmul.f32 %v1151, %v3005
        %v3262 = vmul.f32 %v1153, %v3006
        %v3263 = vmul.f32 %v708, %v3007
        %v3264 = vmul.f32 %v710, %v3008
        %v3265 = vmul.f32 %v1157, %v3009
        %v3266 = vmul.f32 %v1159, %v3010
        %v3267 = vmul.f32 %v714, %v3011
        %v3268 = vmul.f32 %v716, %v3012
        %v3269 = vmul.f32 %v1163, %v3013
        %v3270 = vmul.f32 %v1165, %v3014
        %v3271 = vmul.f32 %v720, %v3015
        %v3272 = vmul.f32 %v722, %v3016
        %v3273 = vmul.f32 %v1169, %v3017
        %v3274 = vmul.f32 %v1171, %v3018
        %v3275 = vmul.f32 %v726, %v3019
        %v3276 = vmul.f32 %v728, %v3020
        %v3277 = vmul.f32 %v1175, %v3021
        %v3278 = vmul.f32 %v1177, %v3022
        %v3279 = vmul.f32 %v732, %v3023
        %v3280 = vmul.f32 %v734, %v3024
        %v3281 = vmul.f32 %v1181, %v3025
        %v3282 = vmul.f32 %v1183, %v3026
        %v3283 = vmul.f32 %v738, %v3027
        %v3284 = vmul.f32 %v740, %v3028
        %v3285 = vmul.f32 %v1187, %v3029
        %v3286 = vmul.f32 %v1189, %v3030
        %v3287 = vmul.f32 %v744, %v3031
        %v3288 = vmul.f32 %v746, %v3032
        %v3289 = vmul.f32 %v1193, %v3033
        %v3290 = vmul.f32 %v1195, %v3034
        %v3291 = vmul.f32 %v750, %v3035
        %v3292 = vmul.f32 %v752, %v3036
        %v3293 = vmul.f32 %v1199, %v3037
        %v3294 = vmul.f32 %v1201, %v3038
        %v3295 = vmul.f32 %v756, %v3039
        %v3296 = vmul.f32 %v758, %v3040
        %v3297 = vmul.f32 %v1205, %v3041
        %v3298 = vmul.f32 %v1207, %v3042
        %v3299 = vmul.f32 %v762, %v3043
        %v3300 = vmul.f32 %v764, %v3044
        %v3301 = vmul.f32 %v1211, %v3045
        %v3302 = vmul.f32 %v1213, %v3046
        %v3303 = vmul.f32 %v768, %v3047
        %v3304 = vmul.f32 %v770, %v3048
        %v3305 = vmul.f32 %v1217, %v3049
        %v3306 = vmul.f32 %v1219, %v3050
        %v3307 = vmul.f32 %v774, %v3051
        %v3308 = vmul.f32 %v776, %v3052
        %v3309 = vmul.f32 %v1223, %v3053
        %v3310 = vmul.f32 %v1225, %v3054
        %v3311 = vmul.f32 %v780, %v3055
        %v3312 = vmul.f32 %v782, %v3056
        %v3313 = vmul.f32 %v1229, %v3057
        %v3314 = vmul.f32 %v1231, %v3058
        %v3315 = vmul.f32 %v786, %v3059
        %v3316 = vmul.f32 %v788, %v3060
        %v3317 = vmul.f32 %v1235, %v3061
        %v3318 = vmul.f32 %v1237, %v3062
        %v3319 = vmul.f32 %v792, %v3063
        %v3320 = vmul.f32 %v794, %v3064
        %v3321 = vmul.f32 %v1241, %v3065
        %v3322 = vmul.f32 %v1243, %v3066
        %v3323 = vmul.f32 %v798, %v3067
        %v3324 = vmul.f32 %v800, %v3068
        %v3325 = vmul.f32 %v1247, %v3069
        %v3326 = vmul.f32 %v1249, %v3070
        %v3327 = vmul.f32 %v804, %v3071
        %v3328 = vmul.f32 %v806, %v3072
        %v3329 = vmul.f32 %v1253, %v3073
        %v3330 = vmul.f32 %v1255, %v3074
        %v3331 = vmul.f32 %v810, %v3075
        %v3332 = vmul.f32 %v812, %v3076
        %v3333 = vmul.f32 %v1259, %v3077
        %v3334 = vmul.f32 %v1261, %v3078
        %v3335 = vmul.f32 %v816, %v3079
        %v3336 = vmul.f32 %v818, %v3080
        %v3337 = vmul.f32 %v1265, %v3081
        %v3338 = vmul.f32 %v1267, %v3082
        %v3339 = vmul.f32 %v822, %v3083
        %v3340 = vmul.f32 %v824, %v3084
        %v3341 = vmul.f32 %v1271, %v3085
        %v3342 = vmul.f32 %v1273, %v3086
        %v3343 = vmul.f32 %v828, %v3087
        %v3344 = vmul.f32 %v830, %v3088
        %v3345 = vmul.f32 %v1277, %v3089
        %v3346 = vmul.f32 %v1279, %v3090
        %v3347 = vmul.f32 %v834, %v3091
        %v3348 = vmul.f32 %v836, %v3092
        %v3349 = vmul.f32 %v1283, %v3093
        %v3350 = vmul.f32 %v1285, %v3094
        %v3351 = vmul.f32 %v840, %v3095
        %v3352 = vmul.f32 %v842, %v3096
        %v3353 = vmul.f32 %v1289, %v3097
        %v3354 = vmul.f32 %v1291, %v3098
        %v3355 = vmul.f32 %v846, %v3099
        %v3356 = vmul.f32 %v848, %v3100
        %v3357 = vmul.f32 %v1295, %v3101
        %v3358 = vmul.f32 %v1297, %v3102
        %v3359 = vmul.f32 %v852, %v3103
        %v3360 = vmul.f32 %v854, %v3104
        %v3361 = vmul.f32 %v1301, %v3105
        %v3362 = vmul.f32 %v1303, %v3106
        %v3363 = vmul.f32 %v858, %v3107
        %v3364 = vmul.f32 %v860, %v3108
        %v3365 = vmul.f32 %v1307, %v3109
        %v3366 = vmul.f32 %v1309, %v3110
        %v3367 = vmul.f32 %v864, %v3111
        %v3368 = vmul.f32 %v866, %v3112
        %v3369 = vmul.f32 %v1313, %v3113
        %v3370 = vmul.f32 %v1315, %v3114
        %v3371 = vmul.f32 %v870, %v3115
        %v3372 = vmul.f32 %v872, %v3116
        %v3373 = vmul.f32 %v1319, %v3117
        %v3374 = vmul.f32 %v1321, %v3118
        %v3375 = vmul.f32 %v876, %v3119
        %v3376 = vmul.f32 %v878, %v3120
        %v3377 = vmul.f32 %v1325, %v3121
        %v3378 = vmul.f32 %v1327, %v3122
        %v3379 = vmul.f32 %v882, %v3123
        %v3380 = vmul.f32 %v884, %v3124
        %v3381 = vmul.f32 %v1331, %v3125
        %v3382 = vmul.f32 %v1333, %v3126
        %v3383 = vld [vmem:[#allocation8] sm:$0xff]
        %v3384 = vld [vmem:[#allocation8 + $0x8] sm:$0xff]
        %v3385 = vld [vmem:[#allocation8 + $0x10] sm:$0xff]
        %v3386 = vld [vmem:[#allocation8 + $0x18] sm:$0xff]
        %v3387 = vld [vmem:[#allocation8 + $0x20] sm:$0xff]
        %v3388 = vld [vmem:[#allocation8 + $0x28] sm:$0xff]
        %v3389 = vld [vmem:[#allocation8 + $0x30] sm:$0xff]
        %v3390 = vld [vmem:[#allocation8 + $0x38] sm:$0xff]
        %v3391 = vld [vmem:[#allocation8 + $0x40] sm:$0xff]
        %v3392 = vld [vmem:[#allocation8 + $0x48] sm:$0xff]
        %v3393 = vld [vmem:[#allocation8 + $0x50] sm:$0xff]
        %v3394 = vld [vmem:[#allocation8 + $0x58] sm:$0xff]
        %v3395 = vld [vmem:[#allocation8 + $0x60] sm:$0xff]
        %v3396 = vld [vmem:[#allocation8 + $0x68] sm:$0xff]
        %v3397 = vld [vmem:[#allocation8 + $0x70] sm:$0xff]
        %v3398 = vld [vmem:[#allocation8 + $0x78] sm:$0xff]
        %v3399 = vld [vmem:[#allocation8 + $0x80] sm:$0xff]
        %v3400 = vld [vmem:[#allocation8 + $0x88] sm:$0xff]
        %v3401 = vld [vmem:[#allocation8 + $0x90] sm:$0xff]
        %v3402 = vld [vmem:[#allocation8 + $0x98] sm:$0xff]
        %v3403 = vld [vmem:[#allocation8 + $0xa0] sm:$0xff]
        %v3404 = vld [vmem:[#allocation8 + $0xa8] sm:$0xff]
        %v3405 = vld [vmem:[#allocation8 + $0xb0] sm:$0xff]
        %v3406 = vld [vmem:[#allocation8 + $0xb8] sm:$0xff]
        %v3407 = vld [vmem:[#allocation8 + $0xc0] sm:$0xff]
        %v3408 = vld [vmem:[#allocation8 + $0xc8] sm:$0xff]
        %v3409 = vld [vmem:[#allocation8 + $0xd0] sm:$0xff]
        %v3410 = vld [vmem:[#allocation8 + $0xd8] sm:$0xff]
        %v3411 = vld [vmem:[#allocation8 + $0xe0] sm:$0xff]
        %v3412 = vld [vmem:[#allocation8 + $0xe8] sm:$0xff]
        %v3413 = vld [vmem:[#allocation8 + $0xf0] sm:$0xff]
        %v3414 = vld [vmem:[#allocation8 + $0xf8] sm:$0xff]
        %v3415 = vld [vmem:[#allocation8 + $0x100] sm:$0xff]
        %v3416 = vld [vmem:[#allocation8 + $0x108] sm:$0xff]
        %v3417 = vld [vmem:[#allocation8 + $0x110] sm:$0xff]
        %v3418 = vld [vmem:[#allocation8 + $0x118] sm:$0xff]
        %v3419 = vld [vmem:[#allocation8 + $0x120] sm:$0xff]
        %v3420 = vld [vmem:[#allocation8 + $0x128] sm:$0xff]
        %v3421 = vld [vmem:[#allocation8 + $0x130] sm:$0xff]
        %v3422 = vld [vmem:[#allocation8 + $0x138] sm:$0xff]
        %v3423 = vld [vmem:[#allocation8 + $0x140] sm:$0xff]
        %v3424 = vld [vmem:[#allocation8 + $0x148] sm:$0xff]
        %v3425 = vld [vmem:[#allocation8 + $0x150] sm:$0xff]
        %v3426 = vld [vmem:[#allocation8 + $0x158] sm:$0xff]
        %v3427 = vld [vmem:[#allocation8 + $0x160] sm:$0xff]
        %v3428 = vld [vmem:[#allocation8 + $0x168] sm:$0xff]
        %v3429 = vld [vmem:[#allocation8 + $0x170] sm:$0xff]
        %v3430 = vld [vmem:[#allocation8 + $0x178] sm:$0xff]
        %v3431 = vld [vmem:[#allocation8 + $0x180] sm:$0xff]
        %v3432 = vld [vmem:[#allocation8 + $0x188] sm:$0xff]
        %v3433 = vld [vmem:[#allocation8 + $0x190] sm:$0xff]
        %v3434 = vld [vmem:[#allocation8 + $0x198] sm:$0xff]
        %v3435 = vld [vmem:[#allocation8 + $0x1a0] sm:$0xff]
        %v3436 = vld [vmem:[#allocation8 + $0x1a8] sm:$0xff]
        %v3437 = vld [vmem:[#allocation8 + $0x1b0] sm:$0xff]
        %v3438 = vld [vmem:[#allocation8 + $0x1b8] sm:$0xff]
        %v3439 = vld [vmem:[#allocation8 + $0x1c0] sm:$0xff]
        %v3440 = vld [vmem:[#allocation8 + $0x1c8] sm:$0xff]
        %v3441 = vld [vmem:[#allocation8 + $0x1d0] sm:$0xff]
        %v3442 = vld [vmem:[#allocation8 + $0x1d8] sm:$0xff]
        %v3443 = vld [vmem:[#allocation8 + $0x1e0] sm:$0xff]
        %v3444 = vld [vmem:[#allocation8 + $0x1e8] sm:$0xff]
        %v3445 = vld [vmem:[#allocation8 + $0x1f0] sm:$0xff]
        %v3446 = vld [vmem:[#allocation8 + $0x1f8] sm:$0xff]
        %v3447 = vld [vmem:[%s4] sm:$0x1]
        %v3449 = vlaneseq
        %v3450 = vshrl.u32 %v3449, 7
        %v3451 = vsub.s32 0, %v3450
        %v3452 = vrot.slane %v3447, %v3451
        %3454 = vmatprep.subr.mxu0 0.0
        %3455 = vmatpush1.msra.mxu0 %v3398
        %3456 = vmatprep.subr.mxu0 0.0
        %3457 = vmatpush1.msra.mxu0 %v3397
        %3458 = vmatprep.subr.mxu0 0.0
        %3459 = vmatpush1.msra.mxu0 %v3396
        %3460 = vmatprep.subr.mxu0 0.0
        %3461 = vmatpush1.msra.mxu0 %v3395
        %3462 = vmatprep.subr.mxu0 0.0
        %3463 = vmatpush1.msra.mxu0 %v3394
        %3464 = vmatprep.subr.mxu0 0.0
        %3465 = vmatpush1.msra.mxu0 %v3393
        %3466 = vmatprep.subr.mxu0 0.0
        %3467 = vmatpush1.msra.mxu0 %v3392
        %3468 = vmatprep.subr.mxu0 0.0
        %3469 = vmatpush1.msra.mxu0 %v3391
        %3470 = vmatprep.subr.mxu0 0.0
        %3471 = vmatpush1.msra.mxu0 %v3390
        %3472 = vmatprep.subr.mxu0 0.0
        %3473 = vmatpush1.msra.mxu0 %v3389
        %3474 = vmatprep.subr.mxu0 0.0
        %3475 = vmatpush1.msra.mxu0 %v3388
        %3476 = vmatprep.subr.mxu0 0.0
        %3477 = vmatpush1.msra.mxu0 %v3387
        %3478 = vmatprep.subr.mxu0 0.0
        %3479 = vmatpush1.msra.mxu0 %v3386
        %3480 = vmatprep.subr.mxu0 0.0
        %3481 = vmatpush1.msra.mxu0 %v3385
        %3482 = vmatprep.subr.mxu0 0.0
        %3483 = vmatpush1.msra.mxu0 %v3384
        %3484 = vmatprep.subr.mxu0 0.0
        %3485 = vmatpush1.msra.mxu0 %v3383
        %3486 = vmatprep.subr.mxu0 0.0
        %3487 = vmatpush2.msra.mxu0 %v3414
        %3488 = vmatprep.subr.mxu0 0.0
        %3489 = vmatpush2.msra.mxu0 %v3413
        %3490 = vmatprep.subr.mxu0 0.0
        %3491 = vmatpush2.msra.mxu0 %v3412
        %3492 = vmatprep.subr.mxu0 0.0
        %3493 = vmatpush2.msra.mxu0 %v3411
        %3494 = vmatprep.subr.mxu0 0.0
        %3495 = vmatpush2.msra.mxu0 %v3410
        %3496 = vmatprep.subr.mxu0 0.0
        %3497 = vmatpush2.msra.mxu0 %v3409
        %3498 = vmatprep.subr.mxu0 0.0
        %3499 = vmatpush2.msra.mxu0 %v3408
        %3500 = vmatprep.subr.mxu0 0.0
        %3501 = vmatpush2.msra.mxu0 %v3407
        %3502 = vmatprep.subr.mxu0 0.0
        %3503 = vmatpush2.msra.mxu0 %v3406
        %3504 = vmatprep.subr.mxu0 0.0
        %3505 = vmatpush2.msra.mxu0 %v3405
        %3506 = vmatprep.subr.mxu0 0.0
        %3507 = vmatpush2.msra.mxu0 %v3404
        %3508 = vmatprep.subr.mxu0 0.0
        %3509 = vmatpush2.msra.mxu0 %v3403
        %3510 = vmatprep.subr.mxu0 0.0
        %3511 = vmatpush2.msra.mxu0 %v3402
        %3512 = vmatprep.subr.mxu0 0.0
        %3513 = vmatpush2.msra.mxu0 %v3401
        %3514 = vmatprep.subr.mxu0 0.0
        %3515 = vmatpush2.msra.mxu0 %v3400
        %3516 = vmatprep.subr.mxu0 0.0
        %3517 = vmatpush2.msra.mxu0 %v3399
        %3518 = vmatprep.mubr.f32.mxu0 %v3128
        %3519 = vmatmul.mubr.f32.gmra.mxu0 %v3127
        %v3520 = vpop.f32.mrf.mxu0
        %v3521 = vadd.f32 %v3452, %v3520
        %v3522 = vpop.f32.mrf.mxu0
        %3523 = vmatprep.mubr.f32.mxu0 %v3132
        %3524 = vmatmul.mubr.f32.gmra.mxu0 %v3131
        %v3525 = vpop.f32.mrf.mxu0
        %v3526 = vadd.f32 %v3452, %v3525
        %v3527 = vpop.f32.mrf.mxu0
        %3528 = vmatprep.mubr.f32.mxu0 %v3136
        %3529 = vmatmul.mubr.f32.gmra.mxu0 %v3135
        %v3530 = vpop.f32.mrf.mxu0
        %v3531 = vadd.f32 %v3452, %v3530
        %v3532 = vpop.f32.mrf.mxu0
        %3533 = vmatprep.mubr.f32.mxu0 %v3140
        %3534 = vmatmul.mubr.f32.gmra.mxu0 %v3139
        %v3535 = vpop.f32.mrf.mxu0
        %v3536 = vadd.f32 %v3452, %v3535
        %v3537 = vpop.f32.mrf.mxu0
        %3538 = vmatprep.mubr.f32.mxu0 %v3144
        %3539 = vmatmul.mubr.f32.gmra.mxu0 %v3143
        %v3540 = vpop.f32.mrf.mxu0
        %v3541 = vadd.f32 %v3452, %v3540
        %v3542 = vpop.f32.mrf.mxu0
        %3543 = vmatprep.mubr.f32.mxu0 %v3148
        %3544 = vmatmul.mubr.f32.gmra.mxu0 %v3147
        %v3545 = vpop.f32.mrf.mxu0
        %v3546 = vadd.f32 %v3452, %v3545
        %v3547 = vpop.f32.mrf.mxu0
        %3548 = vmatprep.mubr.f32.mxu0 %v3152
        %3549 = vmatmul.mubr.f32.gmra.mxu0 %v3151
        %v3550 = vpop.f32.mrf.mxu0
        %v3551 = vadd.f32 %v3452, %v3550
        %v3552 = vpop.f32.mrf.mxu0
        %3553 = vmatprep.mubr.f32.mxu0 %v3156
        %3554 = vmatmul.mubr.f32.gmra.mxu0 %v3155
        %v3555 = vpop.f32.mrf.mxu0
        %v3556 = vadd.f32 %v3452, %v3555
        %v3557 = vpop.f32.mrf.mxu0
        %3558 = vmatprep.mubr.f32.mxu0 %v3160
        %3559 = vmatmul.mubr.f32.gmra.mxu0 %v3159
        %v3560 = vpop.f32.mrf.mxu0
        %v3561 = vadd.f32 %v3452, %v3560
        %v3562 = vpop.f32.mrf.mxu0
        %3563 = vmatprep.mubr.f32.mxu0 %v3164
        %3564 = vmatmul.mubr.f32.gmra.mxu0 %v3163
        %v3565 = vpop.f32.mrf.mxu0
        %v3566 = vadd.f32 %v3452, %v3565
        %v3567 = vpop.f32.mrf.mxu0
        %3568 = vmatprep.mubr.f32.mxu0 %v3168
        %3569 = vmatmul.mubr.f32.gmra.mxu0 %v3167
        %v3570 = vpop.f32.mrf.mxu0
        %v3571 = vadd.f32 %v3452, %v3570
        %v3572 = vpop.f32.mrf.mxu0
        %3573 = vmatprep.mubr.f32.mxu0 %v3172
        %3574 = vmatmul.mubr.f32.gmra.mxu0 %v3171
        %v3575 = vpop.f32.mrf.mxu0
        %v3576 = vadd.f32 %v3452, %v3575
        %v3577 = vpop.f32.mrf.mxu0
        %3578 = vmatprep.mubr.f32.mxu0 %v3176
        %3579 = vmatmul.mubr.f32.gmra.mxu0 %v3175
        %v3580 = vpop.f32.mrf.mxu0
        %v3581 = vadd.f32 %v3452, %v3580
        %v3582 = vpop.f32.mrf.mxu0
        %3583 = vmatprep.mubr.f32.mxu0 %v3180
        %3584 = vmatmul.mubr.f32.gmra.mxu0 %v3179
        %v3585 = vpop.f32.mrf.mxu0
        %v3586 = vadd.f32 %v3452, %v3585
        %v3587 = vpop.f32.mrf.mxu0
        %3588 = vmatprep.mubr.f32.mxu0 %v3184
        %3589 = vmatmul.mubr.f32.gmra.mxu0 %v3183
        %v3590 = vpop.f32.mrf.mxu0
        %v3591 = vadd.f32 %v3452, %v3590
        %v3592 = vpop.f32.mrf.mxu0
        %3593 = vmatprep.mubr.f32.mxu0 %v3188
        %3594 = vmatmul.mubr.f32.gmra.mxu0 %v3187
        %v3595 = vpop.f32.mrf.mxu0
        %v3596 = vadd.f32 %v3452, %v3595
        %v3597 = vpop.f32.mrf.mxu0
        %3598 = vmatprep.mubr.f32.mxu0 %v3192
        %3599 = vmatmul.mubr.f32.gmra.mxu0 %v3191
        %v3600 = vpop.f32.mrf.mxu0
        %v3601 = vadd.f32 %v3452, %v3600
        %v3602 = vpop.f32.mrf.mxu0
        %3603 = vmatprep.mubr.f32.mxu0 %v3196
        %3604 = vmatmul.mubr.f32.gmra.mxu0 %v3195
        %v3605 = vpop.f32.mrf.mxu0
        %v3606 = vadd.f32 %v3452, %v3605
        %v3607 = vpop.f32.mrf.mxu0
        %3608 = vmatprep.mubr.f32.mxu0 %v3200
        %3609 = vmatmul.mubr.f32.gmra.mxu0 %v3199
        %v3610 = vpop.f32.mrf.mxu0
        %v3611 = vadd.f32 %v3452, %v3610
        %v3612 = vpop.f32.mrf.mxu0
        %3613 = vmatprep.mubr.f32.mxu0 %v3204
        %3614 = vmatmul.mubr.f32.gmra.mxu0 %v3203
        %v3615 = vpop.f32.mrf.mxu0
        %v3616 = vadd.f32 %v3452, %v3615
        %v3617 = vpop.f32.mrf.mxu0
        %3618 = vmatprep.mubr.f32.mxu0 %v3208
        %3619 = vmatmul.mubr.f32.gmra.mxu0 %v3207
        %v3620 = vpop.f32.mrf.mxu0
        %v3621 = vadd.f32 %v3452, %v3620
        %v3622 = vpop.f32.mrf.mxu0
        %3623 = vmatprep.mubr.f32.mxu0 %v3212
        %3624 = vmatmul.mubr.f32.gmra.mxu0 %v3211
        %v3625 = vpop.f32.mrf.mxu0
        %v3626 = vadd.f32 %v3452, %v3625
        %v3627 = vpop.f32.mrf.mxu0
        %3628 = vmatprep.mubr.f32.mxu0 %v3216
        %3629 = vmatmul.mubr.f32.gmra.mxu0 %v3215
        %v3630 = vpop.f32.mrf.mxu0
        %v3631 = vadd.f32 %v3452, %v3630
        %v3632 = vpop.f32.mrf.mxu0
        %3633 = vmatprep.mubr.f32.mxu0 %v3220
        %3634 = vmatmul.mubr.f32.gmra.mxu0 %v3219
        %v3635 = vpop.f32.mrf.mxu0
        %v3636 = vadd.f32 %v3452, %v3635
        %v3637 = vpop.f32.mrf.mxu0
        %3638 = vmatprep.mubr.f32.mxu0 %v3224
        %3639 = vmatmul.mubr.f32.gmra.mxu0 %v3223
        %v3640 = vpop.f32.mrf.mxu0
        %v3641 = vadd.f32 %v3452, %v3640
        %v3642 = vpop.f32.mrf.mxu0
        %3643 = vmatprep.mubr.f32.mxu0 %v3228
        %3644 = vmatmul.mubr.f32.gmra.mxu0 %v3227
        %v3645 = vpop.f32.mrf.mxu0
        %v3646 = vadd.f32 %v3452, %v3645
        %v3647 = vpop.f32.mrf.mxu0
        %3648 = vmatprep.mubr.f32.mxu0 %v3232
        %3649 = vmatmul.mubr.f32.gmra.mxu0 %v3231
        %v3650 = vpop.f32.mrf.mxu0
        %v3651 = vadd.f32 %v3452, %v3650
        %v3652 = vpop.f32.mrf.mxu0
        %3653 = vmatprep.mubr.f32.mxu0 %v3236
        %3654 = vmatmul.mubr.f32.gmra.mxu0 %v3235
        %v3655 = vpop.f32.mrf.mxu0
        %v3656 = vadd.f32 %v3452, %v3655
        %v3657 = vpop.f32.mrf.mxu0
        %3658 = vmatprep.mubr.f32.mxu0 %v3240
        %3659 = vmatmul.mubr.f32.gmra.mxu0 %v3239
        %v3660 = vpop.f32.mrf.mxu0
        %v3661 = vadd.f32 %v3452, %v3660
        %v3662 = vpop.f32.mrf.mxu0
        %3663 = vmatprep.mubr.f32.mxu0 %v3244
        %3664 = vmatmul.mubr.f32.gmra.mxu0 %v3243
        %v3665 = vpop.f32.mrf.mxu0
        %v3666 = vadd.f32 %v3452, %v3665
        %v3667 = vpop.f32.mrf.mxu0
        %3668 = vmatprep.mubr.f32.mxu0 %v3248
        %3669 = vmatmul.mubr.f32.gmra.mxu0 %v3247
        %v3670 = vpop.f32.mrf.mxu0
        %v3671 = vadd.f32 %v3452, %v3670
        %v3672 = vpop.f32.mrf.mxu0
        %3673 = vmatprep.mubr.f32.mxu0 %v3252
        %3674 = vmatmul.mubr.f32.gmra.mxu0 %v3251
        %v3675 = vpop.f32.mrf.mxu0
        %v3676 = vadd.f32 %v3452, %v3675
        %v3677 = vpop.f32.mrf.mxu0
        %3678 = vmatprep.mubr.f32.mxu0 %v3256
        %3679 = vmatmul.mubr.f32.gmra.mxu0 %v3255
        %v3680 = vpop.f32.mrf.mxu0
        %v3681 = vadd.f32 %v3452, %v3680
        %v3682 = vpop.f32.mrf.mxu0
        %3683 = vmatprep.mubr.f32.mxu0 %v3260
        %3684 = vmatmul.mubr.f32.gmra.mxu0 %v3259
        %v3685 = vpop.f32.mrf.mxu0
        %v3686 = vadd.f32 %v3452, %v3685
        %v3687 = vpop.f32.mrf.mxu0
        %3688 = vmatprep.mubr.f32.mxu0 %v3264
        %3689 = vmatmul.mubr.f32.gmra.mxu0 %v3263
        %v3690 = vpop.f32.mrf.mxu0
        %v3691 = vadd.f32 %v3452, %v3690
        %v3692 = vpop.f32.mrf.mxu0
        %3693 = vmatprep.mubr.f32.mxu0 %v3268
        %3694 = vmatmul.mubr.f32.gmra.mxu0 %v3267
        %v3695 = vpop.f32.mrf.mxu0
        %v3696 = vadd.f32 %v3452, %v3695
        %v3697 = vpop.f32.mrf.mxu0
        %3698 = vmatprep.mubr.f32.mxu0 %v3272
        %3699 = vmatmul.mubr.f32.gmra.mxu0 %v3271
        %v3700 = vpop.f32.mrf.mxu0
        %v3701 = vadd.f32 %v3452, %v3700
        %v3702 = vpop.f32.mrf.mxu0
        %3703 = vmatprep.mubr.f32.mxu0 %v3276
        %3704 = vmatmul.mubr.f32.gmra.mxu0 %v3275
        %v3705 = vpop.f32.mrf.mxu0
        %v3706 = vadd.f32 %v3452, %v3705
        %v3707 = vpop.f32.mrf.mxu0
        %3708 = vmatprep.mubr.f32.mxu0 %v3280
        %3709 = vmatmul.mubr.f32.gmra.mxu0 %v3279
        %v3710 = vpop.f32.mrf.mxu0
        %v3711 = vadd.f32 %v3452, %v3710
        %v3712 = vpop.f32.mrf.mxu0
        %3713 = vmatprep.mubr.f32.mxu0 %v3284
        %3714 = vmatmul.mubr.f32.gmra.mxu0 %v3283
        %v3715 = vpop.f32.mrf.mxu0
        %v3716 = vadd.f32 %v3452, %v3715
        %v3717 = vpop.f32.mrf.mxu0
        %3718 = vmatprep.mubr.f32.mxu0 %v3288
        %3719 = vmatmul.mubr.f32.gmra.mxu0 %v3287
        %v3720 = vpop.f32.mrf.mxu0
        %v3721 = vadd.f32 %v3452, %v3720
        %v3722 = vpop.f32.mrf.mxu0
        %3723 = vmatprep.mubr.f32.mxu0 %v3292
        %3724 = vmatmul.mubr.f32.gmra.mxu0 %v3291
        %v3725 = vpop.f32.mrf.mxu0
        %v3726 = vadd.f32 %v3452, %v3725
        %v3727 = vpop.f32.mrf.mxu0
        %3728 = vmatprep.mubr.f32.mxu0 %v3296
        %3729 = vmatmul.mubr.f32.gmra.mxu0 %v3295
        %v3730 = vpop.f32.mrf.mxu0
        %v3731 = vadd.f32 %v3452, %v3730
        %v3732 = vpop.f32.mrf.mxu0
        %3733 = vmatprep.mubr.f32.mxu0 %v3300
        %3734 = vmatmul.mubr.f32.gmra.mxu0 %v3299
        %v3735 = vpop.f32.mrf.mxu0
        %v3736 = vadd.f32 %v3452, %v3735
        %v3737 = vpop.f32.mrf.mxu0
        %3738 = vmatprep.mubr.f32.mxu0 %v3304
        %3739 = vmatmul.mubr.f32.gmra.mxu0 %v3303
        %v3740 = vpop.f32.mrf.mxu0
        %v3741 = vadd.f32 %v3452, %v3740
        %v3742 = vpop.f32.mrf.mxu0
        %3743 = vmatprep.mubr.f32.mxu0 %v3308
        %3744 = vmatmul.mubr.f32.gmra.mxu0 %v3307
        %v3745 = vpop.f32.mrf.mxu0
        %v3746 = vadd.f32 %v3452, %v3745
        %v3747 = vpop.f32.mrf.mxu0
        %3748 = vmatprep.mubr.f32.mxu0 %v3312
        %3749 = vmatmul.mubr.f32.gmra.mxu0 %v3311
        %v3750 = vpop.f32.mrf.mxu0
        %v3751 = vadd.f32 %v3452, %v3750
        %v3752 = vpop.f32.mrf.mxu0
        %3753 = vmatprep.mubr.f32.mxu0 %v3316
        %3754 = vmatmul.mubr.f32.gmra.mxu0 %v3315
        %v3755 = vpop.f32.mrf.mxu0
        %v3756 = vadd.f32 %v3452, %v3755
        %v3757 = vpop.f32.mrf.mxu0
        %3758 = vmatprep.mubr.f32.mxu0 %v3320
        %3759 = vmatmul.mubr.f32.gmra.mxu0 %v3319
        %v3760 = vpop.f32.mrf.mxu0
        %v3761 = vadd.f32 %v3452, %v3760
        %v3762 = vpop.f32.mrf.mxu0
        %3763 = vmatprep.mubr.f32.mxu0 %v3324
        %3764 = vmatmul.mubr.f32.gmra.mxu0 %v3323
        %v3765 = vpop.f32.mrf.mxu0
        %v3766 = vadd.f32 %v3452, %v3765
        %v3767 = vpop.f32.mrf.mxu0
        %3768 = vmatprep.mubr.f32.mxu0 %v3328
        %3769 = vmatmul.mubr.f32.gmra.mxu0 %v3327
        %v3770 = vpop.f32.mrf.mxu0
        %v3771 = vadd.f32 %v3452, %v3770
        %v3772 = vpop.f32.mrf.mxu0
        %3773 = vmatprep.mubr.f32.mxu0 %v3332
        %3774 = vmatmul.mubr.f32.gmra.mxu0 %v3331
        %v3775 = vpop.f32.mrf.mxu0
        %v3776 = vadd.f32 %v3452, %v3775
        %v3777 = vpop.f32.mrf.mxu0
        %3778 = vmatprep.mubr.f32.mxu0 %v3336
        %3779 = vmatmul.mubr.f32.gmra.mxu0 %v3335
        %v3780 = vpop.f32.mrf.mxu0
        %v3781 = vadd.f32 %v3452, %v3780
        %v3782 = vpop.f32.mrf.mxu0
        %3783 = vmatprep.mubr.f32.mxu0 %v3340
        %3784 = vmatmul.mubr.f32.gmra.mxu0 %v3339
        %v3785 = vpop.f32.mrf.mxu0
        %v3786 = vadd.f32 %v3452, %v3785
        %v3787 = vpop.f32.mrf.mxu0
        %3788 = vmatprep.mubr.f32.mxu0 %v3344
        %3789 = vmatmul.mubr.f32.gmra.mxu0 %v3343
        %v3790 = vpop.f32.mrf.mxu0
        %v3791 = vadd.f32 %v3452, %v3790
        %v3792 = vpop.f32.mrf.mxu0
        %3793 = vmatprep.mubr.f32.mxu0 %v3348
        %3794 = vmatmul.mubr.f32.gmra.mxu0 %v3347
        %v3795 = vpop.f32.mrf.mxu0
        %v3796 = vadd.f32 %v3452, %v3795
        %v3797 = vpop.f32.mrf.mxu0
        %3798 = vmatprep.mubr.f32.mxu0 %v3352
        %3799 = vmatmul.mubr.f32.gmra.mxu0 %v3351
        %v3800 = vpop.f32.mrf.mxu0
        %v3801 = vadd.f32 %v3452, %v3800
        %v3802 = vpop.f32.mrf.mxu0
        %3803 = vmatprep.mubr.f32.mxu0 %v3356
        %3804 = vmatmul.mubr.f32.gmra.mxu0 %v3355
        %v3805 = vpop.f32.mrf.mxu0
        %v3806 = vadd.f32 %v3452, %v3805
        %v3807 = vpop.f32.mrf.mxu0
        %3808 = vmatprep.mubr.f32.mxu0 %v3360
        %3809 = vmatmul.mubr.f32.gmra.mxu0 %v3359
        %v3810 = vpop.f32.mrf.mxu0
        %v3811 = vadd.f32 %v3452, %v3810
        %v3812 = vpop.f32.mrf.mxu0
        %3813 = vmatprep.mubr.f32.mxu0 %v3364
        %3814 = vmatmul.mubr.f32.gmra.mxu0 %v3363
        %v3815 = vpop.f32.mrf.mxu0
        %v3816 = vadd.f32 %v3452, %v3815
        %v3817 = vpop.f32.mrf.mxu0
        %3818 = vmatprep.mubr.f32.mxu0 %v3368
        %3819 = vmatmul.mubr.f32.gmra.mxu0 %v3367
        %v3820 = vpop.f32.mrf.mxu0
        %v3821 = vadd.f32 %v3452, %v3820
        %v3822 = vpop.f32.mrf.mxu0
        %3823 = vmatprep.mubr.f32.mxu0 %v3372
        %3824 = vmatmul.mubr.f32.gmra.mxu0 %v3371
        %v3825 = vpop.f32.mrf.mxu0
        %v3826 = vadd.f32 %v3452, %v3825
        %v3827 = vpop.f32.mrf.mxu0
        %3828 = vmatprep.mubr.f32.mxu0 %v3376
        %3829 = vmatmul.mubr.f32.gmra.mxu0 %v3375
        %v3830 = vpop.f32.mrf.mxu0
        %v3831 = vadd.f32 %v3452, %v3830
        %v3832 = vpop.f32.mrf.mxu0
        %3833 = vmatprep.mubr.f32.mxu0 %v3380
        %3834 = vmatmul.mubr.f32.gmra.mxu0 %v3379
        %v3835 = vpop.f32.mrf.mxu0
        %v3836 = vadd.f32 %v3452, %v3835
        %v3837 = vpop.f32.mrf.mxu0
        %3838 = vdwg.mxu0
        %3839 = vmatprep.subr.mxu0 0.0
        %3840 = vmatpush1.msra.mxu0 %v3430
        %3841 = vmatprep.subr.mxu0 0.0
        %3842 = vmatpush1.msra.mxu0 %v3429
        %3843 = vmatprep.subr.mxu0 0.0
        %3844 = vmatpush1.msra.mxu0 %v3428
        %3845 = vmatprep.subr.mxu0 0.0
        %3846 = vmatpush1.msra.mxu0 %v3427
        %3847 = vmatprep.subr.mxu0 0.0
        %3848 = vmatpush1.msra.mxu0 %v3426
        %3849 = vmatprep.subr.mxu0 0.0
        %3850 = vmatpush1.msra.mxu0 %v3425
        %3851 = vmatprep.subr.mxu0 0.0
        %3852 = vmatpush1.msra.mxu0 %v3424
        %3853 = vmatprep.subr.mxu0 0.0
        %3854 = vmatpush1.msra.mxu0 %v3423
        %3855 = vmatprep.subr.mxu0 0.0
        %3856 = vmatpush1.msra.mxu0 %v3422
        %3857 = vmatprep.subr.mxu0 0.0
        %3858 = vmatpush1.msra.mxu0 %v3421
        %3859 = vmatprep.subr.mxu0 0.0
        %3860 = vmatpush1.msra.mxu0 %v3420
        %3861 = vmatprep.subr.mxu0 0.0
        %3862 = vmatpush1.msra.mxu0 %v3419
        %3863 = vmatprep.subr.mxu0 0.0
        %3864 = vmatpush1.msra.mxu0 %v3418
        %3865 = vmatprep.subr.mxu0 0.0
        %3866 = vmatpush1.msra.mxu0 %v3417
        %3867 = vmatprep.subr.mxu0 0.0
        %3868 = vmatpush1.msra.mxu0 %v3416
        %3869 = vmatprep.subr.mxu0 0.0
        %3870 = vmatpush1.msra.mxu0 %v3415
        %3871 = vmatprep.subr.mxu0 0.0
        %3872 = vmatpush2.msra.mxu0 %v3446
        %3873 = vmatprep.subr.mxu0 0.0
        %3874 = vmatpush2.msra.mxu0 %v3445
        %3875 = vmatprep.subr.mxu0 0.0
        %3876 = vmatpush2.msra.mxu0 %v3444
        %3877 = vmatprep.subr.mxu0 0.0
        %3878 = vmatpush2.msra.mxu0 %v3443
        %3879 = vmatprep.subr.mxu0 0.0
        %3880 = vmatpush2.msra.mxu0 %v3442
        %3881 = vmatprep.subr.mxu0 0.0
        %3882 = vmatpush2.msra.mxu0 %v3441
        %3883 = vmatprep.subr.mxu0 0.0
        %3884 = vmatpush2.msra.mxu0 %v3440
        %3885 = vmatprep.subr.mxu0 0.0
        %3886 = vmatpush2.msra.mxu0 %v3439
        %3887 = vmatprep.subr.mxu0 0.0
        %3888 = vmatpush2.msra.mxu0 %v3438
        %3889 = vmatprep.subr.mxu0 0.0
        %3890 = vmatpush2.msra.mxu0 %v3437
        %3891 = vmatprep.subr.mxu0 0.0
        %3892 = vmatpush2.msra.mxu0 %v3436
        %3893 = vmatprep.subr.mxu0 0.0
        %3894 = vmatpush2.msra.mxu0 %v3435
        %3895 = vmatprep.subr.mxu0 0.0
        %3896 = vmatpush2.msra.mxu0 %v3434
        %3897 = vmatprep.subr.mxu0 0.0
        %3898 = vmatpush2.msra.mxu0 %v3433
        %3899 = vmatprep.subr.mxu0 0.0
        %3900 = vmatpush2.msra.mxu0 %v3432
        %3901 = vmatprep.subr.mxu0 0.0
        %3902 = vmatpush2.msra.mxu0 %v3431
        %3903 = vmatprep.mubr.f32.mxu0 %v3130
        %3904 = vmatmul.mubr.f32.gmra.mxu0 %v3129
        %v3905 = vpop.f32.mrf.mxu0
        %v3906 = vadd.f32 %v3521, %v3905
        %v3907 = vpop.f32.mrf.mxu0
        %3908 = vmatprep.mubr.f32.mxu0 %v3134
        %3909 = vmatmul.mubr.f32.gmra.mxu0 %v3133
        %v3910 = vpop.f32.mrf.mxu0
        %v3911 = vadd.f32 %v3526, %v3910
        %v3912 = vpop.f32.mrf.mxu0
        %3913 = vmatprep.mubr.f32.mxu0 %v3138
        %3914 = vmatmul.mubr.f32.gmra.mxu0 %v3137
        %v3915 = vpop.f32.mrf.mxu0
        %v3916 = vadd.f32 %v3531, %v3915
        %v3917 = vpop.f32.mrf.mxu0
        %3918 = vmatprep.mubr.f32.mxu0 %v3142
        %3919 = vmatmul.mubr.f32.gmra.mxu0 %v3141
        %v3920 = vpop.f32.mrf.mxu0
        %v3921 = vadd.f32 %v3536, %v3920
        %v3922 = vpop.f32.mrf.mxu0
        %3923 = vmatprep.mubr.f32.mxu0 %v3146
        %3924 = vmatmul.mubr.f32.gmra.mxu0 %v3145
        %v3925 = vpop.f32.mrf.mxu0
        %v3926 = vadd.f32 %v3541, %v3925
        %v3927 = vpop.f32.mrf.mxu0
        %3928 = vmatprep.mubr.f32.mxu0 %v3150
        %3929 = vmatmul.mubr.f32.gmra.mxu0 %v3149
        %v3930 = vpop.f32.mrf.mxu0
        %v3931 = vadd.f32 %v3546, %v3930
        %v3932 = vpop.f32.mrf.mxu0
        %3933 = vmatprep.mubr.f32.mxu0 %v3154
        %3934 = vmatmul.mubr.f32.gmra.mxu0 %v3153
        %v3935 = vpop.f32.mrf.mxu0
        %v3936 = vadd.f32 %v3551, %v3935
        %v3937 = vpop.f32.mrf.mxu0
        %3938 = vmatprep.mubr.f32.mxu0 %v3158
        %3939 = vmatmul.mubr.f32.gmra.mxu0 %v3157
        %v3940 = vpop.f32.mrf.mxu0
        %v3941 = vadd.f32 %v3556, %v3940
        %v3942 = vpop.f32.mrf.mxu0
        %3943 = vmatprep.mubr.f32.mxu0 %v3162
        %3944 = vmatmul.mubr.f32.gmra.mxu0 %v3161
        %v3945 = vpop.f32.mrf.mxu0
        %v3946 = vadd.f32 %v3561, %v3945
        %v3947 = vpop.f32.mrf.mxu0
        %3948 = vmatprep.mubr.f32.mxu0 %v3166
        %3949 = vmatmul.mubr.f32.gmra.mxu0 %v3165
        %v3950 = vpop.f32.mrf.mxu0
        %v3951 = vadd.f32 %v3566, %v3950
        %v3952 = vpop.f32.mrf.mxu0
        %3953 = vmatprep.mubr.f32.mxu0 %v3170
        %3954 = vmatmul.mubr.f32.gmra.mxu0 %v3169
        %v3955 = vpop.f32.mrf.mxu0
        %v3956 = vadd.f32 %v3571, %v3955
        %v3957 = vpop.f32.mrf.mxu0
        %3958 = vmatprep.mubr.f32.mxu0 %v3174
        %3959 = vmatmul.mubr.f32.gmra.mxu0 %v3173
        %v3960 = vpop.f32.mrf.mxu0
        %v3961 = vadd.f32 %v3576, %v3960
        %v3962 = vpop.f32.mrf.mxu0
        %3963 = vmatprep.mubr.f32.mxu0 %v3178
        %3964 = vmatmul.mubr.f32.gmra.mxu0 %v3177
        %v3965 = vpop.f32.mrf.mxu0
        %v3966 = vadd.f32 %v3581, %v3965
        %v3967 = vpop.f32.mrf.mxu0
        %3968 = vmatprep.mubr.f32.mxu0 %v3182
        %3969 = vmatmul.mubr.f32.gmra.mxu0 %v3181
        %v3970 = vpop.f32.mrf.mxu0
        %v3971 = vadd.f32 %v3586, %v3970
        %v3972 = vpop.f32.mrf.mxu0
        %3973 = vmatprep.mubr.f32.mxu0 %v3186
        %3974 = vmatmul.mubr.f32.gmra.mxu0 %v3185
        %v3975 = vpop.f32.mrf.mxu0
        %v3976 = vadd.f32 %v3591, %v3975
        %v3977 = vpop.f32.mrf.mxu0
        %3978 = vmatprep.mubr.f32.mxu0 %v3190
        %3979 = vmatmul.mubr.f32.gmra.mxu0 %v3189
        %v3980 = vpop.f32.mrf.mxu0
        %v3981 = vadd.f32 %v3596, %v3980
        %v3982 = vpop.f32.mrf.mxu0
        %3983 = vmatprep.mubr.f32.mxu0 %v3194
        %3984 = vmatmul.mubr.f32.gmra.mxu0 %v3193
        %v3985 = vpop.f32.mrf.mxu0
        %v3986 = vadd.f32 %v3601, %v3985
        %v3987 = vpop.f32.mrf.mxu0
        %3988 = vmatprep.mubr.f32.mxu0 %v3198
        %3989 = vmatmul.mubr.f32.gmra.mxu0 %v3197
        %v3990 = vpop.f32.mrf.mxu0
        %v3991 = vadd.f32 %v3606, %v3990
        %v3992 = vpop.f32.mrf.mxu0
        %3993 = vmatprep.mubr.f32.mxu0 %v3202
        %3994 = vmatmul.mubr.f32.gmra.mxu0 %v3201
        %v3995 = vpop.f32.mrf.mxu0
        %v3996 = vadd.f32 %v3611, %v3995
        %v3997 = vpop.f32.mrf.mxu0
        %3998 = vmatprep.mubr.f32.mxu0 %v3206
        %3999 = vmatmul.mubr.f32.gmra.mxu0 %v3205
        %v4000 = vpop.f32.mrf.mxu0
        %v4001 = vadd.f32 %v3616, %v4000
        %v4002 = vpop.f32.mrf.mxu0
        %4003 = vmatprep.mubr.f32.mxu0 %v3210
        %4004 = vmatmul.mubr.f32.gmra.mxu0 %v3209
        %v4005 = vpop.f32.mrf.mxu0
        %v4006 = vadd.f32 %v3621, %v4005
        %v4007 = vpop.f32.mrf.mxu0
        %4008 = vmatprep.mubr.f32.mxu0 %v3214
        %4009 = vmatmul.mubr.f32.gmra.mxu0 %v3213
        %v4010 = vpop.f32.mrf.mxu0
        %v4011 = vadd.f32 %v3626, %v4010
        %v4012 = vpop.f32.mrf.mxu0
        %4013 = vmatprep.mubr.f32.mxu0 %v3218
        %4014 = vmatmul.mubr.f32.gmra.mxu0 %v3217
        %v4015 = vpop.f32.mrf.mxu0
        %v4016 = vadd.f32 %v3631, %v4015
        %v4017 = vpop.f32.mrf.mxu0
        %4018 = vmatprep.mubr.f32.mxu0 %v3222
        %4019 = vmatmul.mubr.f32.gmra.mxu0 %v3221
        %v4020 = vpop.f32.mrf.mxu0
        %v4021 = vadd.f32 %v3636, %v4020
        %v4022 = vpop.f32.mrf.mxu0
        %4023 = vmatprep.mubr.f32.mxu0 %v3226
        %4024 = vmatmul.mubr.f32.gmra.mxu0 %v3225
        %v4025 = vpop.f32.mrf.mxu0
        %v4026 = vadd.f32 %v3641, %v4025
        %v4027 = vpop.f32.mrf.mxu0
        %4028 = vmatprep.mubr.f32.mxu0 %v3230
        %4029 = vmatmul.mubr.f32.gmra.mxu0 %v3229
        %v4030 = vpop.f32.mrf.mxu0
        %v4031 = vadd.f32 %v3646, %v4030
        %v4032 = vpop.f32.mrf.mxu0
        %4033 = vmatprep.mubr.f32.mxu0 %v3234
        %4034 = vmatmul.mubr.f32.gmra.mxu0 %v3233
        %v4035 = vpop.f32.mrf.mxu0
        %v4036 = vadd.f32 %v3651, %v4035
        %v4037 = vpop.f32.mrf.mxu0
        %4038 = vmatprep.mubr.f32.mxu0 %v3238
        %4039 = vmatmul.mubr.f32.gmra.mxu0 %v3237
        %v4040 = vpop.f32.mrf.mxu0
        %v4041 = vadd.f32 %v3656, %v4040
        %v4042 = vpop.f32.mrf.mxu0
        %4043 = vmatprep.mubr.f32.mxu0 %v3242
        %4044 = vmatmul.mubr.f32.gmra.mxu0 %v3241
        %v4045 = vpop.f32.mrf.mxu0
        %v4046 = vadd.f32 %v3661, %v4045
        %v4047 = vpop.f32.mrf.mxu0
        %4048 = vmatprep.mubr.f32.mxu0 %v3246
        %4049 = vmatmul.mubr.f32.gmra.mxu0 %v3245
        %v4050 = vpop.f32.mrf.mxu0
        %v4051 = vadd.f32 %v3666, %v4050
        %v4052 = vpop.f32.mrf.mxu0
        %4053 = vmatprep.mubr.f32.mxu0 %v3250
        %4054 = vmatmul.mubr.f32.gmra.mxu0 %v3249
        %v4055 = vpop.f32.mrf.mxu0
        %v4056 = vadd.f32 %v3671, %v4055
        %v4057 = vpop.f32.mrf.mxu0
        %4058 = vmatprep.mubr.f32.mxu0 %v3254
        %4059 = vmatmul.mubr.f32.gmra.mxu0 %v3253
        %v4060 = vpop.f32.mrf.mxu0
        %v4061 = vadd.f32 %v3676, %v4060
        %v4062 = vpop.f32.mrf.mxu0
        %4063 = vmatprep.mubr.f32.mxu0 %v3258
        %4064 = vmatmul.mubr.f32.gmra.mxu0 %v3257
        %v4065 = vpop.f32.mrf.mxu0
        %v4066 = vadd.f32 %v3681, %v4065
        %v4067 = vpop.f32.mrf.mxu0
        %4068 = vmatprep.mubr.f32.mxu0 %v3262
        %4069 = vmatmul.mubr.f32.gmra.mxu0 %v3261
        %v4070 = vpop.f32.mrf.mxu0
        %v4071 = vadd.f32 %v3686, %v4070
        %v4072 = vpop.f32.mrf.mxu0
        %4073 = vmatprep.mubr.f32.mxu0 %v3266
        %4074 = vmatmul.mubr.f32.gmra.mxu0 %v3265
        %v4075 = vpop.f32.mrf.mxu0
        %v4076 = vadd.f32 %v3691, %v4075
        %v4077 = vpop.f32.mrf.mxu0
        %4078 = vmatprep.mubr.f32.mxu0 %v3270
        %4079 = vmatmul.mubr.f32.gmra.mxu0 %v3269
        %v4080 = vpop.f32.mrf.mxu0
        %v4081 = vadd.f32 %v3696, %v4080
        %v4082 = vpop.f32.mrf.mxu0
        %4083 = vmatprep.mubr.f32.mxu0 %v3274
        %4084 = vmatmul.mubr.f32.gmra.mxu0 %v3273
        %v4085 = vpop.f32.mrf.mxu0
        %v4086 = vadd.f32 %v3701, %v4085
        %v4087 = vpop.f32.mrf.mxu0
        %4088 = vmatprep.mubr.f32.mxu0 %v3278
        %4089 = vmatmul.mubr.f32.gmra.mxu0 %v3277
        %v4090 = vpop.f32.mrf.mxu0
        %v4091 = vadd.f32 %v3706, %v4090
        %v4092 = vpop.f32.mrf.mxu0
        %4093 = vmatprep.mubr.f32.mxu0 %v3282
        %4094 = vmatmul.mubr.f32.gmra.mxu0 %v3281
        %v4095 = vpop.f32.mrf.mxu0
        %v4096 = vadd.f32 %v3711, %v4095
        %v4097 = vpop.f32.mrf.mxu0
        %4098 = vmatprep.mubr.f32.mxu0 %v3286
        %4099 = vmatmul.mubr.f32.gmra.mxu0 %v3285
        %v4100 = vpop.f32.mrf.mxu0
        %v4101 = vadd.f32 %v3716, %v4100
        %v4102 = vpop.f32.mrf.mxu0
        %4103 = vmatprep.mubr.f32.mxu0 %v3290
        %4104 = vmatmul.mubr.f32.gmra.mxu0 %v3289
        %v4105 = vpop.f32.mrf.mxu0
        %v4106 = vadd.f32 %v3721, %v4105
        %v4107 = vpop.f32.mrf.mxu0
        %4108 = vmatprep.mubr.f32.mxu0 %v3294
        %4109 = vmatmul.mubr.f32.gmra.mxu0 %v3293
        %v4110 = vpop.f32.mrf.mxu0
        %v4111 = vadd.f32 %v3726, %v4110
        %v4112 = vpop.f32.mrf.mxu0
        %4113 = vmatprep.mubr.f32.mxu0 %v3298
        %4114 = vmatmul.mubr.f32.gmra.mxu0 %v3297
        %v4115 = vpop.f32.mrf.mxu0
        %v4116 = vadd.f32 %v3731, %v4115
        %v4117 = vpop.f32.mrf.mxu0
        %4118 = vmatprep.mubr.f32.mxu0 %v3302
        %4119 = vmatmul.mubr.f32.gmra.mxu0 %v3301
        %v4120 = vpop.f32.mrf.mxu0
        %v4121 = vadd.f32 %v3736, %v4120
        %v4122 = vpop.f32.mrf.mxu0
        %4123 = vmatprep.mubr.f32.mxu0 %v3306
        %4124 = vmatmul.mubr.f32.gmra.mxu0 %v3305
        %v4125 = vpop.f32.mrf.mxu0
        %v4126 = vadd.f32 %v3741, %v4125
        %v4127 = vpop.f32.mrf.mxu0
        %4128 = vmatprep.mubr.f32.mxu0 %v3310
        %4129 = vmatmul.mubr.f32.gmra.mxu0 %v3309
        %v4130 = vpop.f32.mrf.mxu0
        %v4131 = vadd.f32 %v3746, %v4130
        %v4132 = vpop.f32.mrf.mxu0
        %4133 = vmatprep.mubr.f32.mxu0 %v3314
        %4134 = vmatmul.mubr.f32.gmra.mxu0 %v3313
        %v4135 = vpop.f32.mrf.mxu0
        %v4136 = vadd.f32 %v3751, %v4135
        %v4137 = vpop.f32.mrf.mxu0
        %4138 = vmatprep.mubr.f32.mxu0 %v3318
        %4139 = vmatmul.mubr.f32.gmra.mxu0 %v3317
        %v4140 = vpop.f32.mrf.mxu0
        %v4141 = vadd.f32 %v3756, %v4140
        %v4142 = vpop.f32.mrf.mxu0
        %4143 = vmatprep.mubr.f32.mxu0 %v3322
        %4144 = vmatmul.mubr.f32.gmra.mxu0 %v3321
        %v4145 = vpop.f32.mrf.mxu0
        %v4146 = vadd.f32 %v3761, %v4145
        %v4147 = vpop.f32.mrf.mxu0
        %4148 = vmatprep.mubr.f32.mxu0 %v3326
        %4149 = vmatmul.mubr.f32.gmra.mxu0 %v3325
        %v4150 = vpop.f32.mrf.mxu0
        %v4151 = vadd.f32 %v3766, %v4150
        %v4152 = vpop.f32.mrf.mxu0
        %4153 = vmatprep.mubr.f32.mxu0 %v3330
        %4154 = vmatmul.mubr.f32.gmra.mxu0 %v3329
        %v4155 = vpop.f32.mrf.mxu0
        %v4156 = vadd.f32 %v3771, %v4155
        %v4157 = vpop.f32.mrf.mxu0
        %4158 = vmatprep.mubr.f32.mxu0 %v3334
        %4159 = vmatmul.mubr.f32.gmra.mxu0 %v3333
        %v4160 = vpop.f32.mrf.mxu0
        %v4161 = vadd.f32 %v3776, %v4160
        %v4162 = vpop.f32.mrf.mxu0
        %4163 = vmatprep.mubr.f32.mxu0 %v3338
        %4164 = vmatmul.mubr.f32.gmra.mxu0 %v3337
        %v4165 = vpop.f32.mrf.mxu0
        %v4166 = vadd.f32 %v3781, %v4165
        %v4167 = vpop.f32.mrf.mxu0
        %4168 = vmatprep.mubr.f32.mxu0 %v3342
        %4169 = vmatmul.mubr.f32.gmra.mxu0 %v3341
        %v4170 = vpop.f32.mrf.mxu0
        %v4171 = vadd.f32 %v3786, %v4170
        %v4172 = vpop.f32.mrf.mxu0
        %4173 = vmatprep.mubr.f32.mxu0 %v3346
        %4174 = vmatmul.mubr.f32.gmra.mxu0 %v3345
        %v4175 = vpop.f32.mrf.mxu0
        %v4176 = vadd.f32 %v3791, %v4175
        %v4177 = vpop.f32.mrf.mxu0
        %4178 = vmatprep.mubr.f32.mxu0 %v3350
        %4179 = vmatmul.mubr.f32.gmra.mxu0 %v3349
        %v4180 = vpop.f32.mrf.mxu0
        %v4181 = vadd.f32 %v3796, %v4180
        %v4182 = vpop.f32.mrf.mxu0
        %4183 = vmatprep.mubr.f32.mxu0 %v3354
        %4184 = vmatmul.mubr.f32.gmra.mxu0 %v3353
        %v4185 = vpop.f32.mrf.mxu0
        %v4186 = vadd.f32 %v3801, %v4185
        %v4187 = vpop.f32.mrf.mxu0
        %4188 = vmatprep.mubr.f32.mxu0 %v3358
        %4189 = vmatmul.mubr.f32.gmra.mxu0 %v3357
        %v4190 = vpop.f32.mrf.mxu0
        %v4191 = vadd.f32 %v3806, %v4190
        %v4192 = vpop.f32.mrf.mxu0
        %4193 = vmatprep.mubr.f32.mxu0 %v3362
        %4194 = vmatmul.mubr.f32.gmra.mxu0 %v3361
        %v4195 = vpop.f32.mrf.mxu0
        %v4196 = vadd.f32 %v3811, %v4195
        %v4197 = vpop.f32.mrf.mxu0
        %4198 = vmatprep.mubr.f32.mxu0 %v3366
        %4199 = vmatmul.mubr.f32.gmra.mxu0 %v3365
        %v4200 = vpop.f32.mrf.mxu0
        %v4201 = vadd.f32 %v3816, %v4200
        %v4202 = vpop.f32.mrf.mxu0
        %4203 = vmatprep.mubr.f32.mxu0 %v3370
        %4204 = vmatmul.mubr.f32.gmra.mxu0 %v3369
        %v4205 = vpop.f32.mrf.mxu0
        %v4206 = vadd.f32 %v3821, %v4205
        %v4207 = vpop.f32.mrf.mxu0
        %4208 = vmatprep.mubr.f32.mxu0 %v3374
        %4209 = vmatmul.mubr.f32.gmra.mxu0 %v3373
        %v4210 = vpop.f32.mrf.mxu0
        %v4211 = vadd.f32 %v3826, %v4210
        %v4212 = vpop.f32.mrf.mxu0
        %4213 = vmatprep.mubr.f32.mxu0 %v3378
        %4214 = vmatmul.mubr.f32.gmra.mxu0 %v3377
        %v4215 = vpop.f32.mrf.mxu0
        %v4216 = vadd.f32 %v3831, %v4215
        %v4217 = vpop.f32.mrf.mxu0
        %4218 = vmatprep.mubr.f32.mxu0 %v3382
        %4219 = vmatmul.mubr.f32.gmra.mxu0 %v3381
        %v4220 = vpop.f32.mrf.mxu0
        %v4221 = vadd.f32 %v3836, %v4220
        %v4222 = vpop.f32.mrf.mxu0
        %4223 = vdwg.mxu0
        %4224 = vst [vmem:[%s284] sm:$0xff] %v3906
        %4225 = vst [vmem:[%s284 + $0x8] sm:$0xff] %v3911
        %4226 = vst [vmem:[%s284 + $0x10] sm:$0xff] %v3916
        %4227 = vst [vmem:[%s284 + $0x18] sm:$0xff] %v3921
        %4228 = vst [vmem:[%s284 + $0x20] sm:$0xff] %v3926
        %4229 = vst [vmem:[%s284 + $0x28] sm:$0xff] %v3931
        %4230 = vst [vmem:[%s284 + $0x30] sm:$0xff] %v3936
        %4231 = vst [vmem:[%s284 + $0x38] sm:$0xff] %v3941
        %4232 = vst [vmem:[%s284 + $0x40] sm:$0xff] %v3946
        %4233 = vst [vmem:[%s284 + $0x48] sm:$0xff] %v3951
        %4234 = vst [vmem:[%s284 + $0x50] sm:$0xff] %v3956
        %4235 = vst [vmem:[%s284 + $0x58] sm:$0xff] %v3961
        %4236 = vst [vmem:[%s284 + $0x60] sm:$0xff] %v3966
        %4237 = vst [vmem:[%s284 + $0x68] sm:$0xff] %v3971
        %4238 = vst [vmem:[%s284 + $0x70] sm:$0xff] %v3976
        %4239 = vst [vmem:[%s284 + $0x78] sm:$0xff] %v3981
        %4240 = vst [vmem:[%s284 + $0x80] sm:$0xff] %v3986
        %4241 = vst [vmem:[%s284 + $0x88] sm:$0xff] %v3991
        %4242 = vst [vmem:[%s284 + $0x90] sm:$0xff] %v3996
        %4243 = vst [vmem:[%s284 + $0x98] sm:$0xff] %v4001
        %4244 = vst [vmem:[%s284 + $0xa0] sm:$0xff] %v4006
        %4245 = vst [vmem:[%s284 + $0xa8] sm:$0xff] %v4011
        %4246 = vst [vmem:[%s284 + $0xb0] sm:$0xff] %v4016
        %4247 = vst [vmem:[%s284 + $0xb8] sm:$0xff] %v4021
        %4248 = vst [vmem:[%s284 + $0xc0] sm:$0xff] %v4026
        %4249 = vst [vmem:[%s284 + $0xc8] sm:$0xff] %v4031
        %4250 = vst [vmem:[%s284 + $0xd0] sm:$0xff] %v4036
        %4251 = vst [vmem:[%s284 + $0xd8] sm:$0xff] %v4041
        %4252 = vst [vmem:[%s284 + $0xe0] sm:$0xff] %v4046
        %4253 = vst [vmem:[%s284 + $0xe8] sm:$0xff] %v4051
        %4254 = vst [vmem:[%s284 + $0xf0] sm:$0xff] %v4056
        %4255 = vst [vmem:[%s284 + $0xf8] sm:$0xff] %v4061
        %4256 = vst [vmem:[%s284 + $0x100] sm:$0xff] %v4066
        %4257 = vst [vmem:[%s284 + $0x108] sm:$0xff] %v4071
        %4258 = vst [vmem:[%s284 + $0x110] sm:$0xff] %v4076
        %4259 = vst [vmem:[%s284 + $0x118] sm:$0xff] %v4081
        %4260 = vst [vmem:[%s284 + $0x120] sm:$0xff] %v4086
        %4261 = vst [vmem:[%s284 + $0x128] sm:$0xff] %v4091
        %4262 = vst [vmem:[%s284 + $0x130] sm:$0xff] %v4096
        %4263 = vst [vmem:[%s284 + $0x138] sm:$0xff] %v4101
        %4264 = vst [vmem:[%s284 + $0x140] sm:$0xff] %v4106
        %4265 = vst [vmem:[%s284 + $0x148] sm:$0xff] %v4111
        %4266 = vst [vmem:[%s284 + $0x150] sm:$0xff] %v4116
        %4267 = vst [vmem:[%s284 + $0x158] sm:$0xff] %v4121
        %4268 = vst [vmem:[%s284 + $0x160] sm:$0xff] %v4126
        %4269 = vst [vmem:[%s284 + $0x168] sm:$0xff] %v4131
        %4270 = vst [vmem:[%s284 + $0x170] sm:$0xff] %v4136
        %4271 = vst [vmem:[%s284 + $0x178] sm:$0xff] %v4141
        %4272 = vst [vmem:[%s284 + $0x180] sm:$0xff] %v4146
        %4273 = vst [vmem:[%s284 + $0x188] sm:$0xff] %v4151
        %4274 = vst [vmem:[%s284 + $0x190] sm:$0xff] %v4156
        %4275 = vst [vmem:[%s284 + $0x198] sm:$0xff] %v4161
        %4276 = vst [vmem:[%s284 + $0x1a0] sm:$0xff] %v4166
        %4277 = vst [vmem:[%s284 + $0x1a8] sm:$0xff] %v4171
        %4278 = vst [vmem:[%s284 + $0x1b0] sm:$0xff] %v4176
        %4279 = vst [vmem:[%s284 + $0x1b8] sm:$0xff] %v4181
        %4280 = vst [vmem:[%s284 + $0x1c0] sm:$0xff] %v4186
        %4281 = vst [vmem:[%s284 + $0x1c8] sm:$0xff] %v4191
        %4282 = vst [vmem:[%s284 + $0x1d0] sm:$0xff] %v4196
        %4283 = vst [vmem:[%s284 + $0x1d8] sm:$0xff] %v4201
        %4284 = vst [vmem:[%s284 + $0x1e0] sm:$0xff] %v4206
        %4285 = vst [vmem:[%s284 + $0x1e8] sm:$0xff] %v4211
        %4286 = vst [vmem:[%s284 + $0x1f0] sm:$0xff] %v4216
        %4287 = vst [vmem:[%s284 + $0x1f8] sm:$0xff] %v4221
        %s4288 = sand.u32 %s142, 1
        %s4289 = scalar_lea.sflag [#allocation4], %s4288
        %s4290 = sand.u32 %s142, 1
        %s4291 = smul.addr %s4290, 512
        %s4292 = scalar_lea.vmem [#allocation10], %s4291
        // Predicated region
        $region57: #{tpu_custom_call.1} parent=39 // pred_check
          %p4293 = pneg %p152
        $region58: #{tpu_custom_call.1} parent=39 // pred_check_branch
          %4295 = sbr.rel (%p4293) target = $region60
        $region59: #{tpu_custom_call.1} parent=39 // pred_region
          %s4296 = smul.u32 64, %s24
          %s4298 = ssub.s32 8192, 8192
          %4299 = vsyncadd %s4289, %s4298
          %s4300 = smul.addr %s4296, 128
          %s4301 = scalar_lea.hbm %s5, %s4300
          %s4302 = sshll.u32 %s4292, 4
          %s4303 = int_to_ptr.vmem [resolvable:$true] %s4302
          %4308 = dma.vmem_to_hbm [thread:$0]  %s4303, 8192, %s4301, %s4289, 128, 128, 8
        $region60: #{tpu_custom_call.1} parent=39 // pred_fallthru
          _
      $region40: #{tpu_custom_call.1} parent=5 // pred_fallthru
        _
      %p4309 = scmp.le.s32.totalorder 2, %s19
      // Predicated region
      $region61: #{tpu_custom_call.1} parent=5 // pred_check
        %p4310 = pneg %p4309
      $region62: #{tpu_custom_call.1} parent=5 // pred_check_branch
        %4312 = sbr.rel (%p4310) target = $region64
      $region63: #{tpu_custom_call.1} parent=5 // pred_region
        %s4313 = ssub.s32 %s19, 2
        // Predicated region
        $region65: #{tpu_custom_call.1} parent=63 // pred_check
          %p4314 = pneg %p158
        $region66: #{tpu_custom_call.1} parent=63 // pred_check_branch
          %4316 = sbr.rel (%p4314) target = $region68
        $region67: #{tpu_custom_call.1} parent=63 // pred_region
          %s4317 = sand.u32 %s143, 1
          %s4318 = scalar_lea.sflag [#allocation4], %s4317
          %s4319 = sand.u32 %s143, 1
          %s4320 = smul.addr %s4319, 512
          %s4321 = scalar_lea.vmem [#allocation10], %s4320
          %4322 = dma.done %s4318, 8192
        $region68: #{tpu_custom_call.1} parent=63 // pred_fallthru
          _
      $region64: #{tpu_custom_call.1} parent=5 // pred_fallthru
        _
    $region6: #{tpu_custom_call.1} parent=1 // loop_footer
      %s23 = sadd.s32 1, %s19
    $region7: #{tpu_custom_call.1} parent=1 // loop_footer_branch
      %18 = sbr.rel target = $region3
    $region8: #{tpu_custom_call.1} parent=1 // loop_exit
      _
    %4323 = vsyncpa [#allocation3], 1
    %s4324 = scalar_lea.sflag [#allocation3], 1
    %4325 = vsyncpa %s4324, 1
    %4326 = vsyncpa [#allocation6], 1
    %4327 = vsyncpa [#allocation9], 1
    %4328 = vsyncpa [#allocation4], 1
    %s4329 = scalar_lea.sflag [#allocation4], 1
    %4330 = vsyncpa %s4329, 1

</llo_original>
